<compile_context>
chip_gen: v5e
topology: v5e:2x2
jax: 0.10.0
libtpu: 0.0.40
codegen_flags: <defaults>
</compile_context>

<pallas_src>
import math

import jax
import jax.numpy as jnp
from jax.experimental import pallas as pl
from jax.experimental.pallas import tpu as pltpu

EPS = 1e-5

# (in_channels, out_channels, has_residual_conv) for layer1 / layer2 / layer3
_BLOCK_CFGS = ((64, 64, False), (64, 128, True), (128, 256, True))


# --------------------------------------------------------------------------
# Fully fused forward kernel
# --------------------------------------------------------------------------
def _build_resnet_kernel(B, L, block_cfgs):
    BL = B * L

    def kernel(*refs):
        x_ref, sprev_ref, snext_ref, pool_ref, expand_ref = refs[:5]
        o_ref = refs[-1]
        it = iter(refs[5:-1])
        nxt = lambda: next(it)

        # Constant matrices (built once in the wrapper, resident in VMEM).
        s_prev = sprev_ref[...]      # (BL, BL): row i <- row i-1 within its batch, else 0
        s_next = snext_ref[...]      # (BL, BL): row i <- row i+1 within its batch, else 0
        p_pool = pool_ref[...]       # (B, BL):  per-batch mean over L
        e_rows = expand_ref[...]     # (BL, B):  broadcast a per-batch vector back to rows
        ones_row = jnp.ones((1, BL), jnp.float32)
        inv_n = jnp.float32(1.0 / BL)

        def conv3(x2, w_ref, b_ref):
            """Conv1d(kernel=3, padding=1) as three shifted in-VMEM matmuls."""
            x_prev = jnp.dot(s_prev, x2, preferred_element_type=jnp.float32)
            x_next = jnp.dot(s_next, x2, preferred_element_type=jnp.float32)
            y = jnp.dot(x_prev, w_ref[0], preferred_element_type=jnp.float32)
            y = y + jnp.dot(x2, w_ref[1], preferred_element_type=jnp.float32)
            y = y + jnp.dot(x_next, w_ref[2], preferred_element_type=jnp.float32)
            return y + b_ref[...]

        def bn_relu(x2, g_ref, b_ref):
            """BatchNorm1d (training-mode batch stats, biased var) + ReLU."""
            s = jnp.dot(ones_row, x2, preferred_element_type=jnp.float32)        # (1, C)
            ss = jnp.dot(ones_row, x2 * x2, preferred_element_type=jnp.float32)  # (1, C)
            mean = s * inv_n
            var = jnp.maximum(ss * inv_n - mean * mean, 0.0)
            y = (x2 - mean) * jax.lax.rsqrt(var + EPS)
            return jnp.maximum(y * g_ref[...] + b_ref[...], 0.0)

        def dual_se_residual(x2, res2, w1s, w2s, w1d, w2d, w3d):
            """DualSEBlock(x) fused with the BasicBlock residual add."""
            y = jnp.dot(p_pool, x2, preferred_element_type=jnp.float32)          # (B, C)
            y_se = jnp.maximum(jnp.dot(y, w1s[...], preferred_element_type=jnp.float32), 0.0)
            y_se = jax.nn.sigmoid(jnp.dot(y_se, w2s[...], preferred_element_type=jnp.float32))
            y_d = jnp.maximum(jnp.dot(y, w1d[...], preferred_element_type=jnp.float32), 0.0)
            y_d = jnp.maximum(jnp.dot(y_d, w2d[...], preferred_element_type=jnp.float32), 0.0)
            y_d = jax.nn.sigmoid(jnp.dot(y_d, w3d[...], preferred_element_type=jnp.float32))
            scale = jnp.dot(e_rows, y_se + y_d, preferred_element_type=jnp.float32)  # (BL, C)
            return x2 * scale + res2

        # ---- stem: conv1 -> bn1 -> relu ----
        x = x_ref[...]                                    # (BL, C_in)
        w, b = nxt(), nxt()
        x = conv3(x, w, b)
        g, be = nxt(), nxt()
        x = bn_relu(x, g, be)

        # ---- residual blocks ----
        for _cin, _cout, has_res in block_cfgs:
            g1, b1, w1, wb1 = nxt(), nxt(), nxt(), nxt()
            g2, b2, w2, wb2 = nxt(), nxt(), nxt(), nxt()
            w1s, w2s, w1d, w2d, w3d = nxt(), nxt(), nxt(), nxt(), nxt()
            if has_res:
                rw, rb = nxt(), nxt()
                res = jnp.dot(x, rw[...], preferred_element_type=jnp.float32) + rb[...]
            else:
                res = x
            out = bn_relu(x, g1, b1)
            out = conv3(out, w1, wb1)
            out = bn_relu(out, g2, b2)
            out = conv3(out, w2, wb2)
            x = dual_se_residual(out, res, w1s, w2s, w1d, w2d, w3d)

        # ---- head: global mean over L, then fc_resnet ----
        fc_w, fc_b = nxt(), nxt()
        pooled = jnp.dot(p_pool, x, preferred_element_type=jnp.float32)          # (B, 256)
        o_ref[...] = jnp.dot(pooled, fc_w[...],
                             preferred_element_type=jnp.float32) + fc_b[...]

    return kernel


# --------------------------------------------------------------------------
# Glue: constant matrices, parameter flattening, pallas_call wrapper
# --------------------------------------------------------------------------
def _shift_and_pool_mats(B, L):
    """Constant (traced-as-constants) matrices for shift / pooling / broadcast."""
    BL = B * L
    idx = jnp.arange(BL, dtype=jnp.int32)
    pos = idx % L                          # position within batch
    bid = idx // L                         # batch id of each row
    diff = idx[:, None] - idx[None, :]     # i - j
    s_prev = ((diff == 1) & (pos[:, None] != 0)).astype(jnp.float32)       # (BL, BL)
    s_next = ((diff == -1) & (pos[:, None] != L - 1)).astype(jnp.float32)  # (BL, BL)
    b_idx = jnp.arange(B, dtype=jnp.int32)
    p_pool = (bid[None, :] == b_idx[:, None]).astype(jnp.float32) / float(L)  # (B, BL)
    e_rows = (bid[:, None] == b_idx[None, :]).astype(jnp.float32)             # (BL, B)
    return s_prev, s_next, p_pool, e_rows


def _flatten_params(params):
    flat = [params["conv1_w"], params["conv1_b"], params["bn1_g"], params["bn1_b"]]
    for name in ("layer1", "layer2", "layer3"):
        p = params[name]
        flat += [p["bn1_g"], p["bn1_b"], p["conv1_w"], p["conv1_b"],
                 p["bn2_g"], p["bn2_b"], p["conv2_w"], p["conv2_b"]]
        flat += list(p["se"])
        if "res_w" in p:
            flat += [p["res_w"], p["res_b"]]
    flat += [params["fc_w"], params["fc_b"]]
    return flat


def _cost_estimate(B, L, operands):
    BL = B * L
    flops = 0
    bytes_accessed = 0
    for a in operands:
        bytes_accessed += int(a.size) * a.dtype.itemsize
        if a.ndim == 3:                                # (3, Cin, Cout) conv weights
            flops += 2 * BL * a.shape[0] * a.shape[1] * a.shape[2]
        elif a.ndim == 2 and a.shape[0] > 1:           # matmul weights / const mats
            flops += 2 * BL * a.shape[0] * a.shape[1]
    bytes_accessed += B * 256 * 4                      # output
    return pl.CostEstimate(flops=int(flops),
                           transcendentals=int(12 * BL * 256),
                           bytes_accessed=int(bytes_accessed))


def resnet_forward(x_ncl, params):
    """Forward pass; x_ncl: (B, C_in, L), matching the PyTorch module's NCL input."""
    B, c_in, L = x_ncl.shape
    x2 = jnp.transpose(x_ncl, (0, 2, 1)).reshape(B * L, c_in)    # channels-last rows
    consts = _shift_and_pool_mats(B, L)
    flat = _flatten_params(params)
    operands = (x2, *consts, *flat)
    kernel = _build_resnet_kernel(B, L, _BLOCK_CFGS)
    vmem = pl.BlockSpec(memory_space=pltpu.MemorySpace.VMEM)
    return pl.pallas_call(
        kernel,
        out_shape=jax.ShapeDtypeStruct((B, 256), jnp.float32),
        in_specs=[vmem] * len(operands),
        out_specs=vmem,
        cost_estimate=_cost_estimate(B, L, operands),
    )(*operands)


# --------------------------------------------------------------------------
# Deterministic parameter construction (PyTorch-default-style uniform init),
# stored directly in matmul-friendly layouts (no per-forward transposes).
# --------------------------------------------------------------------------
def _uniform(key, shape, bound):
    return jax.random.uniform(key, shape, jnp.float32, -bound, bound)


def _init_conv3(key, cin, cout):
    """Conv1d(k=3) weights pre-transposed to matmul layout (tap, Cin, Cout)."""
    kw, kb = jax.random.split(key)
    bound = 1.0 / math.sqrt(cin * 3)
    return _uniform(kw, (3, cin, cout), bound), _uniform(kb, (1, cout), bound)


def _init_conv1(key, cin, cout):
    kw, kb = jax.random.split(key)
    bound = 1.0 / math.sqrt(cin)
    return _uniform(kw, (cin, cout), bound), _uniform(kb, (1, cout), bound)


def _init_linear_t(key, cin, cout):
    """Bias-free nn.Linear weight stored transposed as (in, out)."""
    return _uniform(key, (cin, cout), 1.0 / math.sqrt(cin))


def _init_se(key, c, reduction=16):
    ks = jax.random.split(key, 5)
    r, h = c // reduction, c // 2
    return (_init_linear_t(ks[0], c, r),   # fc1_se
            _init_linear_t(ks[1], r, c),   # fc2_se
            _init_linear_t(ks[2], c, r),   # fc1_dual
            _init_linear_t(ks[3], r, h),   # fc2_dual
            _init_linear_t(ks[4], h, c))   # fc3_dual


def _init_basic_block(key, cin, cout, reduction=16):
    ks = jax.random.split(key, 4)
    p = {
        "bn1_g": jnp.ones((1, cin), jnp.float32), "bn1_b": jnp.zeros((1, cin), jnp.float32),
        "bn2_g": jnp.ones((1, cout), jnp.float32), "bn2_b": jnp.zeros((1, cout), jnp.float32),
        "se": _init_se(ks[2], cout, reduction),
    }
    p["conv1_w"], p["conv1_b"] = _init_conv3(ks[0], cin, cout)
    p["conv2_w"], p["conv2_b"] = _init_conv3(ks[1], cout, cout)
    if cin != cout:
        p["res_w"], p["res_b"] = _init_conv1(ks[3], cin, cout)
    return p


def init_resnet_params(key, input_channels, reduction=16):
    ks = jax.random.split(key, 6)
    params = {
        "bn1_g": jnp.ones((1, 64), jnp.float32), "bn1_b": jnp.zeros((1, 64), jnp.float32),
        "layer1": _init_basic_block(ks[1], 64, 64, reduction),
        "layer2": _init_basic_block(ks[2], 64, 128, reduction),
        "layer3": _init_basic_block(ks[3], 128, 256, reduction),
    }
    params["conv1_w"], params["conv1_b"] = _init_conv3(ks[0], input_channels, 64)
    kw, kb = jax.random.split(ks[4])
    bound = 1.0 / math.sqrt(256)
    params["fc_w"] = _uniform(kw, (256, 256), bound)   # fc_resnet weight, (in, out)
    params["fc_b"] = _uniform(kb, (1, 256), bound)
    return params


if __name__ == "__main__":
    key = jax.random.PRNGKey(0)
    k_params, k_x = jax.random.split(key)

    B, C_IN, L = 2, 4, 16                              # NCL input, like the PyTorch module
    params = init_resnet_params(k_params, C_IN)
    x = jax.random.normal(k_x, (B, C_IN, L), jnp.float32)

    fwd = jax.jit(resnet_forward)
    out = fwd(x, params)
    jax.block_until_ready(out)
    assert out.shape == (B, 256) and out.dtype == jnp.float32
    print("KERNEL_OK")
</pallas_src>

<mosaic_0001>
module attributes {stable_mosaic.version = 11 : i64} {
  func.func @kernel(%arg0: memref<32x4xf32, #tpu.memory_space<vmem>>, %arg1: memref<32x32xf32, #tpu.memory_space<vmem>>, %arg2: memref<32x32xf32, #tpu.memory_space<vmem>>, %arg3: memref<2x32xf32, #tpu.memory_space<vmem>>, %arg4: memref<32x2xf32, #tpu.memory_space<vmem>>, %arg5: memref<3x4x64xf32, #tpu.memory_space<vmem>>, %arg6: memref<1x64xf32, #tpu.memory_space<vmem>>, %arg7: memref<1x64xf32, #tpu.memory_space<vmem>>, %arg8: memref<1x64xf32, #tpu.memory_space<vmem>>, %arg9: memref<1x64xf32, #tpu.memory_space<vmem>>, %arg10: memref<1x64xf32, #tpu.memory_space<vmem>>, %arg11: memref<3x64x64xf32, #tpu.memory_space<vmem>>, %arg12: memref<1x64xf32, #tpu.memory_space<vmem>>, %arg13: memref<1x64xf32, #tpu.memory_space<vmem>>, %arg14: memref<1x64xf32, #tpu.memory_space<vmem>>, %arg15: memref<3x64x64xf32, #tpu.memory_space<vmem>>, %arg16: memref<1x64xf32, #tpu.memory_space<vmem>>, %arg17: memref<64x4xf32, #tpu.memory_space<vmem>>, %arg18: memref<4x64xf32, #tpu.memory_space<vmem>>, %arg19: memref<64x4xf32, #tpu.memory_space<vmem>>, %arg20: memref<4x32xf32, #tpu.memory_space<vmem>>, %arg21: memref<32x64xf32, #tpu.memory_space<vmem>>, %arg22: memref<1x64xf32, #tpu.memory_space<vmem>>, %arg23: memref<1x64xf32, #tpu.memory_space<vmem>>, %arg24: memref<3x64x128xf32, #tpu.memory_space<vmem>>, %arg25: memref<1x128xf32, #tpu.memory_space<vmem>>, %arg26: memref<1x128xf32, #tpu.memory_space<vmem>>, %arg27: memref<1x128xf32, #tpu.memory_space<vmem>>, %arg28: memref<3x128x128xf32, #tpu.memory_space<vmem>>, %arg29: memref<1x128xf32, #tpu.memory_space<vmem>>, %arg30: memref<128x8xf32, #tpu.memory_space<vmem>>, %arg31: memref<8x128xf32, #tpu.memory_space<vmem>>, %arg32: memref<128x8xf32, #tpu.memory_space<vmem>>, %arg33: memref<8x64xf32, #tpu.memory_space<vmem>>, %arg34: memref<64x128xf32, #tpu.memory_space<vmem>>, %arg35: memref<64x128xf32, #tpu.memory_space<vmem>>, %arg36: memref<1x128xf32, #tpu.memory_space<vmem>>, %arg37: memref<1x128xf32, #tpu.memory_space<vmem>>, %arg38: memref<1x128xf32, #tpu.memory_space<vmem>>, %arg39: memref<3x128x256xf32, #tpu.memory_space<vmem>>, %arg40: memref<1x256xf32, #tpu.memory_space<vmem>>, %arg41: memref<1x256xf32, #tpu.memory_space<vmem>>, %arg42: memref<1x256xf32, #tpu.memory_space<vmem>>, %arg43: memref<3x256x256xf32, #tpu.memory_space<vmem>>, %arg44: memref<1x256xf32, #tpu.memory_space<vmem>>, %arg45: memref<256x16xf32, #tpu.memory_space<vmem>>, %arg46: memref<16x256xf32, #tpu.memory_space<vmem>>, %arg47: memref<256x16xf32, #tpu.memory_space<vmem>>, %arg48: memref<16x128xf32, #tpu.memory_space<vmem>>, %arg49: memref<128x256xf32, #tpu.memory_space<vmem>>, %arg50: memref<128x256xf32, #tpu.memory_space<vmem>>, %arg51: memref<1x256xf32, #tpu.memory_space<vmem>>, %arg52: memref<256x256xf32, #tpu.memory_space<vmem>>, %arg53: memref<1x256xf32, #tpu.memory_space<vmem>>, %arg54: memref<2x256xf32, #tpu.memory_space<vmem>>) attributes {dimension_semantics = [], scalar_prefetch = 0 : i64, scratch_operands = 0 : i64, tpu.core_type = #tpu.core_type<tc>} {
    %c0 = arith.constant 0 : index
    %c0_0 = arith.constant 0 : index
    %0 = vector.load %arg1[%c0, %c0_0] : memref<32x32xf32, #tpu.memory_space<vmem>>, vector<32x32xf32>
    %c0_1 = arith.constant 0 : index
    %c0_2 = arith.constant 0 : index
    %1 = vector.load %arg2[%c0_1, %c0_2] : memref<32x32xf32, #tpu.memory_space<vmem>>, vector<32x32xf32>
    %c0_3 = arith.constant 0 : index
    %c0_4 = arith.constant 0 : index
    %2 = vector.load %arg3[%c0_3, %c0_4] : memref<2x32xf32, #tpu.memory_space<vmem>>, vector<2x32xf32>
    %c0_5 = arith.constant 0 : index
    %c0_6 = arith.constant 0 : index
    %3 = vector.load %arg4[%c0_5, %c0_6] : memref<32x2xf32, #tpu.memory_space<vmem>>, vector<32x2xf32>
    %cst = arith.constant 1.000000e+00 : f32
    %4 = vector.broadcast %cst : f32 to vector<1x32xf32>
    %c0_7 = arith.constant 0 : index
    %c0_8 = arith.constant 0 : index
    %5 = vector.load %arg0[%c0_7, %c0_8] : memref<32x4xf32, #tpu.memory_space<vmem>>, vector<32x4xf32>
    %cst_9 = arith.constant dense<0.000000e+00> : vector<32x4xf32>
    %6 = tpu.matmul %0, %5, %cst_9 {dimension_numbers = #tpu.dot_dimension_numbers<[1], [0], [0], [1], [0, 0, 1, 1], [], []>} : vector<32x32xf32>, vector<32x4xf32>, vector<32x4xf32> -> vector<32x4xf32>
    %cst_10 = arith.constant dense<0.000000e+00> : vector<32x4xf32>
    %7 = tpu.matmul %1, %5, %cst_10 {dimension_numbers = #tpu.dot_dimension_numbers<[1], [0], [0], [1], [0, 0, 1, 1], [], []>} : vector<32x32xf32>, vector<32x4xf32>, vector<32x4xf32> -> vector<32x4xf32>
    %c0_11 = arith.constant 0 : index
    %c0_12 = arith.constant 0 : index
    %c0_13 = arith.constant 0 : index
    %8 = vector.load %arg5[%c0_11, %c0_12, %c0_13] : memref<3x4x64xf32, #tpu.memory_space<vmem>>, vector<1x4x64xf32>
    %9 = vector.shape_cast %8 : vector<1x4x64xf32> to vector<4x64xf32>
    %cst_14 = arith.constant dense<0.000000e+00> : vector<32x64xf32>
    %10 = tpu.matmul %6, %9, %cst_14 {dimension_numbers = #tpu.dot_dimension_numbers<[1], [0], [0], [1], [0, 0, 1, 1], [], []>} : vector<32x4xf32>, vector<4x64xf32>, vector<32x64xf32> -> vector<32x64xf32>
    %c1 = arith.constant 1 : index
    %c0_15 = arith.constant 0 : index
    %c0_16 = arith.constant 0 : index
    %11 = vector.load %arg5[%c1, %c0_15, %c0_16] : memref<3x4x64xf32, #tpu.memory_space<vmem>>, vector<1x4x64xf32>
    %12 = vector.shape_cast %11 : vector<1x4x64xf32> to vector<4x64xf32>
    %cst_17 = arith.constant dense<0.000000e+00> : vector<32x64xf32>
    %13 = tpu.matmul %5, %12, %cst_17 {dimension_numbers = #tpu.dot_dimension_numbers<[1], [0], [0], [1], [0, 0, 1, 1], [], []>} : vector<32x4xf32>, vector<4x64xf32>, vector<32x64xf32> -> vector<32x64xf32>
    %14 = arith.addf %10, %13 : vector<32x64xf32>
    %c2 = arith.constant 2 : index
    %c0_18 = arith.constant 0 : index
    %c0_19 = arith.constant 0 : index
    %15 = vector.load %arg5[%c2, %c0_18, %c0_19] : memref<3x4x64xf32, #tpu.memory_space<vmem>>, vector<1x4x64xf32>
    %16 = vector.shape_cast %15 : vector<1x4x64xf32> to vector<4x64xf32>
    %cst_20 = arith.constant dense<0.000000e+00> : vector<32x64xf32>
    %17 = tpu.matmul %7, %16, %cst_20 {dimension_numbers = #tpu.dot_dimension_numbers<[1], [0], [0], [1], [0, 0, 1, 1], [], []>} : vector<32x4xf32>, vector<4x64xf32>, vector<32x64xf32> -> vector<32x64xf32>
    %18 = arith.addf %14, %17 : vector<32x64xf32>
    %c0_21 = arith.constant 0 : index
    %c0_22 = arith.constant 0 : index
    %19 = vector.load %arg6[%c0_21, %c0_22] : memref<1x64xf32, #tpu.memory_space<vmem>>, vector<1x64xf32>
    %20 = vector.broadcast %19 : vector<1x64xf32> to vector<32x64xf32>
    %21 = arith.addf %18, %20 : vector<32x64xf32>
    %cst_23 = arith.constant dense<0.000000e+00> : vector<1x64xf32>
    %22 = tpu.matmul %4, %21, %cst_23 {dimension_numbers = #tpu.dot_dimension_numbers<[1], [0], [0], [1], [0, 0, 1, 1], [], []>} : vector<1x32xf32>, vector<32x64xf32>, vector<1x64xf32> -> vector<1x64xf32>
    %23 = arith.mulf %21, %21 : vector<32x64xf32>
    %cst_24 = arith.constant dense<0.000000e+00> : vector<1x64xf32>
    %24 = tpu.matmul %4, %23, %cst_24 {dimension_numbers = #tpu.dot_dimension_numbers<[1], [0], [0], [1], [0, 0, 1, 1], [], []>} : vector<1x32xf32>, vector<32x64xf32>, vector<1x64xf32> -> vector<1x64xf32>
    %cst_25 = arith.constant 3.125000e-02 : f32
    %25 = vector.broadcast %cst_25 : f32 to vector<1x64xf32>
    %26 = arith.mulf %22, %25 : vector<1x64xf32>
    %cst_26 = arith.constant 3.125000e-02 : f32
    %27 = vector.broadcast %cst_26 : f32 to vector<1x64xf32>
    %28 = arith.mulf %24, %27 : vector<1x64xf32>
    %29 = arith.mulf %26, %26 : vector<1x64xf32>
    %30 = arith.subf %28, %29 : vector<1x64xf32>
    %cst_27 = arith.constant 0.000000e+00 : f32
    %31 = vector.broadcast %cst_27 : f32 to vector<1x64xf32>
    %32 = arith.maximumf %30, %31 : vector<1x64xf32>
    %33 = vector.broadcast %26 : vector<1x64xf32> to vector<32x64xf32>
    %34 = arith.subf %21, %33 : vector<32x64xf32>
    %cst_28 = arith.constant 9.99999974E-6 : f32
    %35 = vector.broadcast %cst_28 : f32 to vector<1x64xf32>
    %36 = arith.addf %32, %35 : vector<1x64xf32>
    %37 = math.rsqrt %36 : vector<1x64xf32>
    %38 = vector.broadcast %37 : vector<1x64xf32> to vector<32x64xf32>
    %39 = arith.mulf %34, %38 : vector<32x64xf32>
    %c0_29 = arith.constant 0 : index
    %c0_30 = arith.constant 0 : index
    %40 = vector.load %arg7[%c0_29, %c0_30] : memref<1x64xf32, #tpu.memory_space<vmem>>, vector<1x64xf32>
    %41 = vector.broadcast %40 : vector<1x64xf32> to vector<32x64xf32>
    %42 = arith.mulf %39, %41 : vector<32x64xf32>
    %c0_31 = arith.constant 0 : index
    %c0_32 = arith.constant 0 : index
    %43 = vector.load %arg8[%c0_31, %c0_32] : memref<1x64xf32, #tpu.memory_space<vmem>>, vector<1x64xf32>
    %44 = vector.broadcast %43 : vector<1x64xf32> to vector<32x64xf32>
    %45 = arith.addf %42, %44 : vector<32x64xf32>
    %cst_33 = arith.constant 0.000000e+00 : f32
    %46 = vector.broadcast %cst_33 : f32 to vector<32x64xf32>
    %47 = arith.maximumf %45, %46 : vector<32x64xf32>
    %cst_34 = arith.constant dense<0.000000e+00> : vector<1x64xf32>
    %48 = tpu.matmul %4, %47, %cst_34 {dimension_numbers = #tpu.dot_dimension_numbers<[1], [0], [0], [1], [0, 0, 1, 1], [], []>} : vector<1x32xf32>, vector<32x64xf32>, vector<1x64xf32> -> vector<1x64xf32>
    %49 = arith.mulf %47, %47 : vector<32x64xf32>
    %cst_35 = arith.constant dense<0.000000e+00> : vector<1x64xf32>
    %50 = tpu.matmul %4, %49, %cst_35 {dimension_numbers = #tpu.dot_dimension_numbers<[1], [0], [0], [1], [0, 0, 1, 1], [], []>} : vector<1x32xf32>, vector<32x64xf32>, vector<1x64xf32> -> vector<1x64xf32>
    %cst_36 = arith.constant 3.125000e-02 : f32
    %51 = vector.broadcast %cst_36 : f32 to vector<1x64xf32>
    %52 = arith.mulf %48, %51 : vector<1x64xf32>
    %cst_37 = arith.constant 3.125000e-02 : f32
    %53 = vector.broadcast %cst_37 : f32 to vector<1x64xf32>
    %54 = arith.mulf %50, %53 : vector<1x64xf32>
    %55 = arith.mulf %52, %52 : vector<1x64xf32>
    %56 = arith.subf %54, %55 : vector<1x64xf32>
    %cst_38 = arith.constant 0.000000e+00 : f32
    %57 = vector.broadcast %cst_38 : f32 to vector<1x64xf32>
    %58 = arith.maximumf %56, %57 : vector<1x64xf32>
    %59 = vector.broadcast %52 : vector<1x64xf32> to vector<32x64xf32>
    %60 = arith.subf %47, %59 : vector<32x64xf32>
    %cst_39 = arith.constant 9.99999974E-6 : f32
    %61 = vector.broadcast %cst_39 : f32 to vector<1x64xf32>
    %62 = arith.addf %58, %61 : vector<1x64xf32>
    %63 = math.rsqrt %62 : vector<1x64xf32>
    %64 = vector.broadcast %63 : vector<1x64xf32> to vector<32x64xf32>
    %65 = arith.mulf %60, %64 : vector<32x64xf32>
    %c0_40 = arith.constant 0 : index
    %c0_41 = arith.constant 0 : index
    %66 = vector.load %arg9[%c0_40, %c0_41] : memref<1x64xf32, #tpu.memory_space<vmem>>, vector<1x64xf32>
    %67 = vector.broadcast %66 : vector<1x64xf32> to vector<32x64xf32>
    %68 = arith.mulf %65, %67 : vector<32x64xf32>
    %c0_42 = arith.constant 0 : index
    %c0_43 = arith.constant 0 : index
    %69 = vector.load %arg10[%c0_42, %c0_43] : memref<1x64xf32, #tpu.memory_space<vmem>>, vector<1x64xf32>
    %70 = vector.broadcast %69 : vector<1x64xf32> to vector<32x64xf32>
    %71 = arith.addf %68, %70 : vector<32x64xf32>
    %cst_44 = arith.constant 0.000000e+00 : f32
    %72 = vector.broadcast %cst_44 : f32 to vector<32x64xf32>
    %73 = arith.maximumf %71, %72 : vector<32x64xf32>
    %cst_45 = arith.constant dense<0.000000e+00> : vector<32x64xf32>
    %74 = tpu.matmul %0, %73, %cst_45 {dimension_numbers = #tpu.dot_dimension_numbers<[1], [0], [0], [1], [0, 0, 1, 1], [], []>} : vector<32x32xf32>, vector<32x64xf32>, vector<32x64xf32> -> vector<32x64xf32>
    %cst_46 = arith.constant dense<0.000000e+00> : vector<32x64xf32>
    %75 = tpu.matmul %1, %73, %cst_46 {dimension_numbers = #tpu.dot_dimension_numbers<[1], [0], [0], [1], [0, 0, 1, 1], [], []>} : vector<32x32xf32>, vector<32x64xf32>, vector<32x64xf32> -> vector<32x64xf32>
    %c0_47 = arith.constant 0 : index
    %c0_48 = arith.constant 0 : index
    %c0_49 = arith.constant 0 : index
    %76 = vector.load %arg11[%c0_47, %c0_48, %c0_49] : memref<3x64x64xf32, #tpu.memory_space<vmem>>, vector<1x64x64xf32>
    %77 = vector.shape_cast %76 : vector<1x64x64xf32> to vector<64x64xf32>
    %cst_50 = arith.constant dense<0.000000e+00> : vector<32x64xf32>
    %78 = tpu.matmul %74, %77, %cst_50 {dimension_numbers = #tpu.dot_dimension_numbers<[1], [0], [0], [1], [0, 0, 1, 1], [], []>} : vector<32x64xf32>, vector<64x64xf32>, vector<32x64xf32> -> vector<32x64xf32>
    %c1_51 = arith.constant 1 : index
    %c0_52 = arith.constant 0 : index
    %c0_53 = arith.constant 0 : index
    %79 = vector.load %arg11[%c1_51, %c0_52, %c0_53] : memref<3x64x64xf32, #tpu.memory_space<vmem>>, vector<1x64x64xf32>
    %80 = vector.shape_cast %79 : vector<1x64x64xf32> to vector<64x64xf32>
    %cst_54 = arith.constant dense<0.000000e+00> : vector<32x64xf32>
    %81 = tpu.matmul %73, %80, %cst_54 {dimension_numbers = #tpu.dot_dimension_numbers<[1], [0], [0], [1], [0, 0, 1, 1], [], []>} : vector<32x64xf32>, vector<64x64xf32>, vector<32x64xf32> -> vector<32x64xf32>
    %82 = arith.addf %78, %81 : vector<32x64xf32>
    %c2_55 = arith.constant 2 : index
    %c0_56 = arith.constant 0 : index
    %c0_57 = arith.constant 0 : index
    %83 = vector.load %arg11[%c2_55, %c0_56, %c0_57] : memref<3x64x64xf32, #tpu.memory_space<vmem>>, vector<1x64x64xf32>
    %84 = vector.shape_cast %83 : vector<1x64x64xf32> to vector<64x64xf32>
    %cst_58 = arith.constant dense<0.000000e+00> : vector<32x64xf32>
    %85 = tpu.matmul %75, %84, %cst_58 {dimension_numbers = #tpu.dot_dimension_numbers<[1], [0], [0], [1], [0, 0, 1, 1], [], []>} : vector<32x64xf32>, vector<64x64xf32>, vector<32x64xf32> -> vector<32x64xf32>
    %86 = arith.addf %82, %85 : vector<32x64xf32>
    %c0_59 = arith.constant 0 : index
    %c0_60 = arith.constant 0 : index
    %87 = vector.load %arg12[%c0_59, %c0_60] : memref<1x64xf32, #tpu.memory_space<vmem>>, vector<1x64xf32>
    %88 = vector.broadcast %87 : vector<1x64xf32> to vector<32x64xf32>
    %89 = arith.addf %86, %88 : vector<32x64xf32>
    %cst_61 = arith.constant dense<0.000000e+00> : vector<1x64xf32>
    %90 = tpu.matmul %4, %89, %cst_61 {dimension_numbers = #tpu.dot_dimension_numbers<[1], [0], [0], [1], [0, 0, 1, 1], [], []>} : vector<1x32xf32>, vector<32x64xf32>, vector<1x64xf32> -> vector<1x64xf32>
    %91 = arith.mulf %89, %89 : vector<32x64xf32>
    %cst_62 = arith.constant dense<0.000000e+00> : vector<1x64xf32>
    %92 = tpu.matmul %4, %91, %cst_62 {dimension_numbers = #tpu.dot_dimension_numbers<[1], [0], [0], [1], [0, 0, 1, 1], [], []>} : vector<1x32xf32>, vector<32x64xf32>, vector<1x64xf32> -> vector<1x64xf32>
    %cst_63 = arith.constant 3.125000e-02 : f32
    %93 = vector.broadcast %cst_63 : f32 to vector<1x64xf32>
    %94 = arith.mulf %90, %93 : vector<1x64xf32>
    %cst_64 = arith.constant 3.125000e-02 : f32
    %95 = vector.broadcast %cst_64 : f32 to vector<1x64xf32>
    %96 = arith.mulf %92, %95 : vector<1x64xf32>
    %97 = arith.mulf %94, %94 : vector<1x64xf32>
    %98 = arith.subf %96, %97 : vector<1x64xf32>
    %cst_65 = arith.constant 0.000000e+00 : f32
    %99 = vector.broadcast %cst_65 : f32 to vector<1x64xf32>
    %100 = arith.maximumf %98, %99 : vector<1x64xf32>
    %101 = vector.broadcast %94 : vector<1x64xf32> to vector<32x64xf32>
    %102 = arith.subf %89, %101 : vector<32x64xf32>
    %cst_66 = arith.constant 9.99999974E-6 : f32
    %103 = vector.broadcast %cst_66 : f32 to vector<1x64xf32>
    %104 = arith.addf %100, %103 : vector<1x64xf32>
    %105 = math.rsqrt %104 : vector<1x64xf32>
    %106 = vector.broadcast %105 : vector<1x64xf32> to vector<32x64xf32>
    %107 = arith.mulf %102, %106 : vector<32x64xf32>
    %c0_67 = arith.constant 0 : index
    %c0_68 = arith.constant 0 : index
    %108 = vector.load %arg13[%c0_67, %c0_68] : memref<1x64xf32, #tpu.memory_space<vmem>>, vector<1x64xf32>
    %109 = vector.broadcast %108 : vector<1x64xf32> to vector<32x64xf32>
    %110 = arith.mulf %107, %109 : vector<32x64xf32>
    %c0_69 = arith.constant 0 : index
    %c0_70 = arith.constant 0 : index
    %111 = vector.load %arg14[%c0_69, %c0_70] : memref<1x64xf32, #tpu.memory_space<vmem>>, vector<1x64xf32>
    %112 = vector.broadcast %111 : vector<1x64xf32> to vector<32x64xf32>
    %113 = arith.addf %110, %112 : vector<32x64xf32>
    %cst_71 = arith.constant 0.000000e+00 : f32
    %114 = vector.broadcast %cst_71 : f32 to vector<32x64xf32>
    %115 = arith.maximumf %113, %114 : vector<32x64xf32>
    %cst_72 = arith.constant dense<0.000000e+00> : vector<32x64xf32>
    %116 = tpu.matmul %0, %115, %cst_72 {dimension_numbers = #tpu.dot_dimension_numbers<[1], [0], [0], [1], [0, 0, 1, 1], [], []>} : vector<32x32xf32>, vector<32x64xf32>, vector<32x64xf32> -> vector<32x64xf32>
    %cst_73 = arith.constant dense<0.000000e+00> : vector<32x64xf32>
    %117 = tpu.matmul %1, %115, %cst_73 {dimension_numbers = #tpu.dot_dimension_numbers<[1], [0], [0], [1], [0, 0, 1, 1], [], []>} : vector<32x32xf32>, vector<32x64xf32>, vector<32x64xf32> -> vector<32x64xf32>
    %c0_74 = arith.constant 0 : index
    %c0_75 = arith.constant 0 : index
    %c0_76 = arith.constant 0 : index
    %118 = vector.load %arg15[%c0_74, %c0_75, %c0_76] : memref<3x64x64xf32, #tpu.memory_space<vmem>>, vector<1x64x64xf32>
    %119 = vector.shape_cast %118 : vector<1x64x64xf32> to vector<64x64xf32>
    %cst_77 = arith.constant dense<0.000000e+00> : vector<32x64xf32>
    %120 = tpu.matmul %116, %119, %cst_77 {dimension_numbers = #tpu.dot_dimension_numbers<[1], [0], [0], [1], [0, 0, 1, 1], [], []>} : vector<32x64xf32>, vector<64x64xf32>, vector<32x64xf32> -> vector<32x64xf32>
    %c1_78 = arith.constant 1 : index
    %c0_79 = arith.constant 0 : index
    %c0_80 = arith.constant 0 : index
    %121 = vector.load %arg15[%c1_78, %c0_79, %c0_80] : memref<3x64x64xf32, #tpu.memory_space<vmem>>, vector<1x64x64xf32>
    %122 = vector.shape_cast %121 : vector<1x64x64xf32> to vector<64x64xf32>
    %cst_81 = arith.constant dense<0.000000e+00> : vector<32x64xf32>
    %123 = tpu.matmul %115, %122, %cst_81 {dimension_numbers = #tpu.dot_dimension_numbers<[1], [0], [0], [1], [0, 0, 1, 1], [], []>} : vector<32x64xf32>, vector<64x64xf32>, vector<32x64xf32> -> vector<32x64xf32>
    %124 = arith.addf %120, %123 : vector<32x64xf32>
    %c2_82 = arith.constant 2 : index
    %c0_83 = arith.constant 0 : index
    %c0_84 = arith.constant 0 : index
    %125 = vector.load %arg15[%c2_82, %c0_83, %c0_84] : memref<3x64x64xf32, #tpu.memory_space<vmem>>, vector<1x64x64xf32>
    %126 = vector.shape_cast %125 : vector<1x64x64xf32> to vector<64x64xf32>
    %cst_85 = arith.constant dense<0.000000e+00> : vector<32x64xf32>
    %127 = tpu.matmul %117, %126, %cst_85 {dimension_numbers = #tpu.dot_dimension_numbers<[1], [0], [0], [1], [0, 0, 1, 1], [], []>} : vector<32x64xf32>, vector<64x64xf32>, vector<32x64xf32> -> vector<32x64xf32>
    %128 = arith.addf %124, %127 : vector<32x64xf32>
    %c0_86 = arith.constant 0 : index
    %c0_87 = arith.constant 0 : index
    %129 = vector.load %arg16[%c0_86, %c0_87] : memref<1x64xf32, #tpu.memory_space<vmem>>, vector<1x64xf32>
    %130 = vector.broadcast %129 : vector<1x64xf32> to vector<32x64xf32>
    %131 = arith.addf %128, %130 : vector<32x64xf32>
    %cst_88 = arith.constant dense<0.000000e+00> : vector<2x64xf32>
    %132 = tpu.matmul %2, %131, %cst_88 {dimension_numbers = #tpu.dot_dimension_numbers<[1], [0], [0], [1], [0, 0, 1, 1], [], []>} : vector<2x32xf32>, vector<32x64xf32>, vector<2x64xf32> -> vector<2x64xf32>
    %c0_89 = arith.constant 0 : index
    %c0_90 = arith.constant 0 : index
    %133 = vector.load %arg17[%c0_89, %c0_90] : memref<64x4xf32, #tpu.memory_space<vmem>>, vector<64x4xf32>
    %cst_91 = arith.constant dense<0.000000e+00> : vector<2x4xf32>
    %134 = tpu.matmul %132, %133, %cst_91 {dimension_numbers = #tpu.dot_dimension_numbers<[1], [0], [0], [1], [0, 0, 1, 1], [], []>} : vector<2x64xf32>, vector<64x4xf32>, vector<2x4xf32> -> vector<2x4xf32>
    %cst_92 = arith.constant 0.000000e+00 : f32
    %135 = vector.broadcast %cst_92 : f32 to vector<2x4xf32>
    %136 = arith.maximumf %134, %135 : vector<2x4xf32>
    %c0_93 = arith.constant 0 : index
    %c0_94 = arith.constant 0 : index
    %137 = vector.load %arg18[%c0_93, %c0_94] : memref<4x64xf32, #tpu.memory_space<vmem>>, vector<4x64xf32>
    %cst_95 = arith.constant dense<0.000000e+00> : vector<2x64xf32>
    %138 = tpu.matmul %136, %137, %cst_95 {dimension_numbers = #tpu.dot_dimension_numbers<[1], [0], [0], [1], [0, 0, 1, 1], [], []>} : vector<2x4xf32>, vector<4x64xf32>, vector<2x64xf32> -> vector<2x64xf32>
    %139 = arith.negf %138 : vector<2x64xf32>
    %140 = math.exp %139 : vector<2x64xf32>
    %cst_96 = arith.constant 1.000000e+00 : f32
    %141 = vector.broadcast %cst_96 : f32 to vector<2x64xf32>
    %142 = arith.addf %141, %140 : vector<2x64xf32>
    %143 = arith.divf %141, %142 : vector<2x64xf32>
    %c0_97 = arith.constant 0 : index
    %c0_98 = arith.constant 0 : index
    %144 = vector.load %arg19[%c0_97, %c0_98] : memref<64x4xf32, #tpu.memory_space<vmem>>, vector<64x4xf32>
    %cst_99 = arith.constant dense<0.000000e+00> : vector<2x4xf32>
    %145 = tpu.matmul %132, %144, %cst_99 {dimension_numbers = #tpu.dot_dimension_numbers<[1], [0], [0], [1], [0, 0, 1, 1], [], []>} : vector<2x64xf32>, vector<64x4xf32>, vector<2x4xf32> -> vector<2x4xf32>
    %cst_100 = arith.constant 0.000000e+00 : f32
    %146 = vector.broadcast %cst_100 : f32 to vector<2x4xf32>
    %147 = arith.maximumf %145, %146 : vector<2x4xf32>
    %c0_101 = arith.constant 0 : index
    %c0_102 = arith.constant 0 : index
    %148 = vector.load %arg20[%c0_101, %c0_102] : memref<4x32xf32, #tpu.memory_space<vmem>>, vector<4x32xf32>
    %cst_103 = arith.constant dense<0.000000e+00> : vector<2x32xf32>
    %149 = tpu.matmul %147, %148, %cst_103 {dimension_numbers = #tpu.dot_dimension_numbers<[1], [0], [0], [1], [0, 0, 1, 1], [], []>} : vector<2x4xf32>, vector<4x32xf32>, vector<2x32xf32> -> vector<2x32xf32>
    %cst_104 = arith.constant 0.000000e+00 : f32
    %150 = vector.broadcast %cst_104 : f32 to vector<2x32xf32>
    %151 = arith.maximumf %149, %150 : vector<2x32xf32>
    %c0_105 = arith.constant 0 : index
    %c0_106 = arith.constant 0 : index
    %152 = vector.load %arg21[%c0_105, %c0_106] : memref<32x64xf32, #tpu.memory_space<vmem>>, vector<32x64xf32>
    %cst_107 = arith.constant dense<0.000000e+00> : vector<2x64xf32>
    %153 = tpu.matmul %151, %152, %cst_107 {dimension_numbers = #tpu.dot_dimension_numbers<[1], [0], [0], [1], [0, 0, 1, 1], [], []>} : vector<2x32xf32>, vector<32x64xf32>, vector<2x64xf32> -> vector<2x64xf32>
    %154 = arith.negf %153 : vector<2x64xf32>
    %155 = math.exp %154 : vector<2x64xf32>
    %cst_108 = arith.constant 1.000000e+00 : f32
    %156 = vector.broadcast %cst_108 : f32 to vector<2x64xf32>
    %157 = arith.addf %156, %155 : vector<2x64xf32>
    %158 = arith.divf %156, %157 : vector<2x64xf32>
    %159 = arith.addf %143, %158 : vector<2x64xf32>
    %cst_109 = arith.constant dense<0.000000e+00> : vector<32x64xf32>
    %160 = tpu.matmul %3, %159, %cst_109 {dimension_numbers = #tpu.dot_dimension_numbers<[1], [0], [0], [1], [0, 0, 1, 1], [], []>} : vector<32x2xf32>, vector<2x64xf32>, vector<32x64xf32> -> vector<32x64xf32>
    %161 = arith.mulf %131, %160 : vector<32x64xf32>
    %162 = arith.addf %161, %47 : vector<32x64xf32>
    %c0_110 = arith.constant 0 : index
    %c0_111 = arith.constant 0 : index
    %163 = vector.load %arg35[%c0_110, %c0_111] : memref<64x128xf32, #tpu.memory_space<vmem>>, vector<64x128xf32>
    %cst_112 = arith.constant dense<0.000000e+00> : vector<32x128xf32>
    %164 = tpu.matmul %162, %163, %cst_112 {dimension_numbers = #tpu.dot_dimension_numbers<[1], [0], [0], [1], [0, 0, 1, 1], [], []>} : vector<32x64xf32>, vector<64x128xf32>, vector<32x128xf32> -> vector<32x128xf32>
    %c0_113 = arith.constant 0 : index
    %c0_114 = arith.constant 0 : index
    %165 = vector.load %arg36[%c0_113, %c0_114] : memref<1x128xf32, #tpu.memory_space<vmem>>, vector<1x128xf32>
    %166 = vector.broadcast %165 : vector<1x128xf32> to vector<32x128xf32>
    %167 = arith.addf %164, %166 : vector<32x128xf32>
    %cst_115 = arith.constant dense<0.000000e+00> : vector<1x64xf32>
    %168 = tpu.matmul %4, %162, %cst_115 {dimension_numbers = #tpu.dot_dimension_numbers<[1], [0], [0], [1], [0, 0, 1, 1], [], []>} : vector<1x32xf32>, vector<32x64xf32>, vector<1x64xf32> -> vector<1x64xf32>
    %169 = arith.mulf %162, %162 : vector<32x64xf32>
    %cst_116 = arith.constant dense<0.000000e+00> : vector<1x64xf32>
    %170 = tpu.matmul %4, %169, %cst_116 {dimension_numbers = #tpu.dot_dimension_numbers<[1], [0], [0], [1], [0, 0, 1, 1], [], []>} : vector<1x32xf32>, vector<32x64xf32>, vector<1x64xf32> -> vector<1x64xf32>
    %cst_117 = arith.constant 3.125000e-02 : f32
    %171 = vector.broadcast %cst_117 : f32 to vector<1x64xf32>
    %172 = arith.mulf %168, %171 : vector<1x64xf32>
    %cst_118 = arith.constant 3.125000e-02 : f32
    %173 = vector.broadcast %cst_118 : f32 to vector<1x64xf32>
    %174 = arith.mulf %170, %173 : vector<1x64xf32>
    %175 = arith.mulf %172, %172 : vector<1x64xf32>
    %176 = arith.subf %174, %175 : vector<1x64xf32>
    %cst_119 = arith.constant 0.000000e+00 : f32
    %177 = vector.broadcast %cst_119 : f32 to vector<1x64xf32>
    %178 = arith.maximumf %176, %177 : vector<1x64xf32>
    %179 = vector.broadcast %172 : vector<1x64xf32> to vector<32x64xf32>
    %180 = arith.subf %162, %179 : vector<32x64xf32>
    %cst_120 = arith.constant 9.99999974E-6 : f32
    %181 = vector.broadcast %cst_120 : f32 to vector<1x64xf32>
    %182 = arith.addf %178, %181 : vector<1x64xf32>
    %183 = math.rsqrt %182 : vector<1x64xf32>
    %184 = vector.broadcast %183 : vector<1x64xf32> to vector<32x64xf32>
    %185 = arith.mulf %180, %184 : vector<32x64xf32>
    %c0_121 = arith.constant 0 : index
    %c0_122 = arith.constant 0 : index
    %186 = vector.load %arg22[%c0_121, %c0_122] : memref<1x64xf32, #tpu.memory_space<vmem>>, vector<1x64xf32>
    %187 = vector.broadcast %186 : vector<1x64xf32> to vector<32x64xf32>
    %188 = arith.mulf %185, %187 : vector<32x64xf32>
    %c0_123 = arith.constant 0 : index
    %c0_124 = arith.constant 0 : index
    %189 = vector.load %arg23[%c0_123, %c0_124] : memref<1x64xf32, #tpu.memory_space<vmem>>, vector<1x64xf32>
    %190 = vector.broadcast %189 : vector<1x64xf32> to vector<32x64xf32>
    %191 = arith.addf %188, %190 : vector<32x64xf32>
    %cst_125 = arith.constant 0.000000e+00 : f32
    %192 = vector.broadcast %cst_125 : f32 to vector<32x64xf32>
    %193 = arith.maximumf %191, %192 : vector<32x64xf32>
    %cst_126 = arith.constant dense<0.000000e+00> : vector<32x64xf32>
    %194 = tpu.matmul %0, %193, %cst_126 {dimension_numbers = #tpu.dot_dimension_numbers<[1], [0], [0], [1], [0, 0, 1, 1], [], []>} : vector<32x32xf32>, vector<32x64xf32>, vector<32x64xf32> -> vector<32x64xf32>
    %cst_127 = arith.constant dense<0.000000e+00> : vector<32x64xf32>
    %195 = tpu.matmul %1, %193, %cst_127 {dimension_numbers = #tpu.dot_dimension_numbers<[1], [0], [0], [1], [0, 0, 1, 1], [], []>} : vector<32x32xf32>, vector<32x64xf32>, vector<32x64xf32> -> vector<32x64xf32>
    %c0_128 = arith.constant 0 : index
    %c0_129 = arith.constant 0 : index
    %c0_130 = arith.constant 0 : index
    %196 = vector.load %arg24[%c0_128, %c0_129, %c0_130] : memref<3x64x128xf32, #tpu.memory_space<vmem>>, vector<1x64x128xf32>
    %197 = vector.shape_cast %196 : vector<1x64x128xf32> to vector<64x128xf32>
    %cst_131 = arith.constant dense<0.000000e+00> : vector<32x128xf32>
    %198 = tpu.matmul %194, %197, %cst_131 {dimension_numbers = #tpu.dot_dimension_numbers<[1], [0], [0], [1], [0, 0, 1, 1], [], []>} : vector<32x64xf32>, vector<64x128xf32>, vector<32x128xf32> -> vector<32x128xf32>
    %c1_132 = arith.constant 1 : index
    %c0_133 = arith.constant 0 : index
    %c0_134 = arith.constant 0 : index
    %199 = vector.load %arg24[%c1_132, %c0_133, %c0_134] : memref<3x64x128xf32, #tpu.memory_space<vmem>>, vector<1x64x128xf32>
    %200 = vector.shape_cast %199 : vector<1x64x128xf32> to vector<64x128xf32>
    %cst_135 = arith.constant dense<0.000000e+00> : vector<32x128xf32>
    %201 = tpu.matmul %193, %200, %cst_135 {dimension_numbers = #tpu.dot_dimension_numbers<[1], [0], [0], [1], [0, 0, 1, 1], [], []>} : vector<32x64xf32>, vector<64x128xf32>, vector<32x128xf32> -> vector<32x128xf32>
    %202 = arith.addf %198, %201 : vector<32x128xf32>
    %c2_136 = arith.constant 2 : index
    %c0_137 = arith.constant 0 : index
    %c0_138 = arith.constant 0 : index
    %203 = vector.load %arg24[%c2_136, %c0_137, %c0_138] : memref<3x64x128xf32, #tpu.memory_space<vmem>>, vector<1x64x128xf32>
    %204 = vector.shape_cast %203 : vector<1x64x128xf32> to vector<64x128xf32>
    %cst_139 = arith.constant dense<0.000000e+00> : vector<32x128xf32>
    %205 = tpu.matmul %195, %204, %cst_139 {dimension_numbers = #tpu.dot_dimension_numbers<[1], [0], [0], [1], [0, 0, 1, 1], [], []>} : vector<32x64xf32>, vector<64x128xf32>, vector<32x128xf32> -> vector<32x128xf32>
    %206 = arith.addf %202, %205 : vector<32x128xf32>
    %c0_140 = arith.constant 0 : index
    %c0_141 = arith.constant 0 : index
    %207 = vector.load %arg25[%c0_140, %c0_141] : memref<1x128xf32, #tpu.memory_space<vmem>>, vector<1x128xf32>
    %208 = vector.broadcast %207 : vector<1x128xf32> to vector<32x128xf32>
    %209 = arith.addf %206, %208 : vector<32x128xf32>
    %cst_142 = arith.constant dense<0.000000e+00> : vector<1x128xf32>
    %210 = tpu.matmul %4, %209, %cst_142 {dimension_numbers = #tpu.dot_dimension_numbers<[1], [0], [0], [1], [0, 0, 1, 1], [], []>} : vector<1x32xf32>, vector<32x128xf32>, vector<1x128xf32> -> vector<1x128xf32>
    %211 = arith.mulf %209, %209 : vector<32x128xf32>
    %cst_143 = arith.constant dense<0.000000e+00> : vector<1x128xf32>
    %212 = tpu.matmul %4, %211, %cst_143 {dimension_numbers = #tpu.dot_dimension_numbers<[1], [0], [0], [1], [0, 0, 1, 1], [], []>} : vector<1x32xf32>, vector<32x128xf32>, vector<1x128xf32> -> vector<1x128xf32>
    %cst_144 = arith.constant 3.125000e-02 : f32
    %213 = vector.broadcast %cst_144 : f32 to vector<1x128xf32>
    %214 = arith.mulf %210, %213 : vector<1x128xf32>
    %cst_145 = arith.constant 3.125000e-02 : f32
    %215 = vector.broadcast %cst_145 : f32 to vector<1x128xf32>
    %216 = arith.mulf %212, %215 : vector<1x128xf32>
    %217 = arith.mulf %214, %214 : vector<1x128xf32>
    %218 = arith.subf %216, %217 : vector<1x128xf32>
    %cst_146 = arith.constant 0.000000e+00 : f32
    %219 = vector.broadcast %cst_146 : f32 to vector<1x128xf32>
    %220 = arith.maximumf %218, %219 : vector<1x128xf32>
    %221 = vector.broadcast %214 : vector<1x128xf32> to vector<32x128xf32>
    %222 = arith.subf %209, %221 : vector<32x128xf32>
    %cst_147 = arith.constant 9.99999974E-6 : f32
    %223 = vector.broadcast %cst_147 : f32 to vector<1x128xf32>
    %224 = arith.addf %220, %223 : vector<1x128xf32>
    %225 = math.rsqrt %224 : vector<1x128xf32>
    %226 = vector.broadcast %225 : vector<1x128xf32> to vector<32x128xf32>
    %227 = arith.mulf %222, %226 : vector<32x128xf32>
    %c0_148 = arith.constant 0 : index
    %c0_149 = arith.constant 0 : index
    %228 = vector.load %arg26[%c0_148, %c0_149] : memref<1x128xf32, #tpu.memory_space<vmem>>, vector<1x128xf32>
    %229 = vector.broadcast %228 : vector<1x128xf32> to vector<32x128xf32>
    %230 = arith.mulf %227, %229 : vector<32x128xf32>
    %c0_150 = arith.constant 0 : index
    %c0_151 = arith.constant 0 : index
    %231 = vector.load %arg27[%c0_150, %c0_151] : memref<1x128xf32, #tpu.memory_space<vmem>>, vector<1x128xf32>
    %232 = vector.broadcast %231 : vector<1x128xf32> to vector<32x128xf32>
    %233 = arith.addf %230, %232 : vector<32x128xf32>
    %cst_152 = arith.constant 0.000000e+00 : f32
    %234 = vector.broadcast %cst_152 : f32 to vector<32x128xf32>
    %235 = arith.maximumf %233, %234 : vector<32x128xf32>
    %cst_153 = arith.constant dense<0.000000e+00> : vector<32x128xf32>
    %236 = tpu.matmul %0, %235, %cst_153 {dimension_numbers = #tpu.dot_dimension_numbers<[1], [0], [0], [1], [0, 0, 1, 1], [], []>} : vector<32x32xf32>, vector<32x128xf32>, vector<32x128xf32> -> vector<32x128xf32>
    %cst_154 = arith.constant dense<0.000000e+00> : vector<32x128xf32>
    %237 = tpu.matmul %1, %235, %cst_154 {dimension_numbers = #tpu.dot_dimension_numbers<[1], [0], [0], [1], [0, 0, 1, 1], [], []>} : vector<32x32xf32>, vector<32x128xf32>, vector<32x128xf32> -> vector<32x128xf32>
    %c0_155 = arith.constant 0 : index
    %c0_156 = arith.constant 0 : index
    %c0_157 = arith.constant 0 : index
    %238 = vector.load %arg28[%c0_155, %c0_156, %c0_157] : memref<3x128x128xf32, #tpu.memory_space<vmem>>, vector<1x128x128xf32>
    %239 = vector.shape_cast %238 : vector<1x128x128xf32> to vector<128x128xf32>
    %cst_158 = arith.constant dense<0.000000e+00> : vector<32x128xf32>
    %240 = tpu.matmul %236, %239, %cst_158 {dimension_numbers = #tpu.dot_dimension_numbers<[1], [0], [0], [1], [0, 0, 1, 1], [], []>} : vector<32x128xf32>, vector<128x128xf32>, vector<32x128xf32> -> vector<32x128xf32>
    %c1_159 = arith.constant 1 : index
    %c0_160 = arith.constant 0 : index
    %c0_161 = arith.constant 0 : index
    %241 = vector.load %arg28[%c1_159, %c0_160, %c0_161] : memref<3x128x128xf32, #tpu.memory_space<vmem>>, vector<1x128x128xf32>
    %242 = vector.shape_cast %241 : vector<1x128x128xf32> to vector<128x128xf32>
    %cst_162 = arith.constant dense<0.000000e+00> : vector<32x128xf32>
    %243 = tpu.matmul %235, %242, %cst_162 {dimension_numbers = #tpu.dot_dimension_numbers<[1], [0], [0], [1], [0, 0, 1, 1], [], []>} : vector<32x128xf32>, vector<128x128xf32>, vector<32x128xf32> -> vector<32x128xf32>
    %244 = arith.addf %240, %243 : vector<32x128xf32>
    %c2_163 = arith.constant 2 : index
    %c0_164 = arith.constant 0 : index
    %c0_165 = arith.constant 0 : index
    %245 = vector.load %arg28[%c2_163, %c0_164, %c0_165] : memref<3x128x128xf32, #tpu.memory_space<vmem>>, vector<1x128x128xf32>
    %246 = vector.shape_cast %245 : vector<1x128x128xf32> to vector<128x128xf32>
    %cst_166 = arith.constant dense<0.000000e+00> : vector<32x128xf32>
    %247 = tpu.matmul %237, %246, %cst_166 {dimension_numbers = #tpu.dot_dimension_numbers<[1], [0], [0], [1], [0, 0, 1, 1], [], []>} : vector<32x128xf32>, vector<128x128xf32>, vector<32x128xf32> -> vector<32x128xf32>
    %248 = arith.addf %244, %247 : vector<32x128xf32>
    %c0_167 = arith.constant 0 : index
    %c0_168 = arith.constant 0 : index
    %249 = vector.load %arg29[%c0_167, %c0_168] : memref<1x128xf32, #tpu.memory_space<vmem>>, vector<1x128xf32>
    %250 = vector.broadcast %249 : vector<1x128xf32> to vector<32x128xf32>
    %251 = arith.addf %248, %250 : vector<32x128xf32>
    %cst_169 = arith.constant dense<0.000000e+00> : vector<2x128xf32>
    %252 = tpu.matmul %2, %251, %cst_169 {dimension_numbers = #tpu.dot_dimension_numbers<[1], [0], [0], [1], [0, 0, 1, 1], [], []>} : vector<2x32xf32>, vector<32x128xf32>, vector<2x128xf32> -> vector<2x128xf32>
    %c0_170 = arith.constant 0 : index
    %c0_171 = arith.constant 0 : index
    %253 = vector.load %arg30[%c0_170, %c0_171] : memref<128x8xf32, #tpu.memory_space<vmem>>, vector<128x8xf32>
    %cst_172 = arith.constant dense<0.000000e+00> : vector<2x8xf32>
    %254 = tpu.matmul %252, %253, %cst_172 {dimension_numbers = #tpu.dot_dimension_numbers<[1], [0], [0], [1], [0, 0, 1, 1], [], []>} : vector<2x128xf32>, vector<128x8xf32>, vector<2x8xf32> -> vector<2x8xf32>
    %cst_173 = arith.constant 0.000000e+00 : f32
    %255 = vector.broadcast %cst_173 : f32 to vector<2x8xf32>
    %256 = arith.maximumf %254, %255 : vector<2x8xf32>
    %c0_174 = arith.constant 0 : index
    %c0_175 = arith.constant 0 : index
    %257 = vector.load %arg31[%c0_174, %c0_175] : memref<8x128xf32, #tpu.memory_space<vmem>>, vector<8x128xf32>
    %cst_176 = arith.constant dense<0.000000e+00> : vector<2x128xf32>
    %258 = tpu.matmul %256, %257, %cst_176 {dimension_numbers = #tpu.dot_dimension_numbers<[1], [0], [0], [1], [0, 0, 1, 1], [], []>} : vector<2x8xf32>, vector<8x128xf32>, vector<2x128xf32> -> vector<2x128xf32>
    %259 = arith.negf %258 : vector<2x128xf32>
    %260 = math.exp %259 : vector<2x128xf32>
    %cst_177 = arith.constant 1.000000e+00 : f32
    %261 = vector.broadcast %cst_177 : f32 to vector<2x128xf32>
    %262 = arith.addf %261, %260 : vector<2x128xf32>
    %263 = arith.divf %261, %262 : vector<2x128xf32>
    %c0_178 = arith.constant 0 : index
    %c0_179 = arith.constant 0 : index
    %264 = vector.load %arg32[%c0_178, %c0_179] : memref<128x8xf32, #tpu.memory_space<vmem>>, vector<128x8xf32>
    %cst_180 = arith.constant dense<0.000000e+00> : vector<2x8xf32>
    %265 = tpu.matmul %252, %264, %cst_180 {dimension_numbers = #tpu.dot_dimension_numbers<[1], [0], [0], [1], [0, 0, 1, 1], [], []>} : vector<2x128xf32>, vector<128x8xf32>, vector<2x8xf32> -> vector<2x8xf32>
    %cst_181 = arith.constant 0.000000e+00 : f32
    %266 = vector.broadcast %cst_181 : f32 to vector<2x8xf32>
    %267 = arith.maximumf %265, %266 : vector<2x8xf32>
    %c0_182 = arith.constant 0 : index
    %c0_183 = arith.constant 0 : index
    %268 = vector.load %arg33[%c0_182, %c0_183] : memref<8x64xf32, #tpu.memory_space<vmem>>, vector<8x64xf32>
    %cst_184 = arith.constant dense<0.000000e+00> : vector<2x64xf32>
    %269 = tpu.matmul %267, %268, %cst_184 {dimension_numbers = #tpu.dot_dimension_numbers<[1], [0], [0], [1], [0, 0, 1, 1], [], []>} : vector<2x8xf32>, vector<8x64xf32>, vector<2x64xf32> -> vector<2x64xf32>
    %cst_185 = arith.constant 0.000000e+00 : f32
    %270 = vector.broadcast %cst_185 : f32 to vector<2x64xf32>
    %271 = arith.maximumf %269, %270 : vector<2x64xf32>
    %c0_186 = arith.constant 0 : index
    %c0_187 = arith.constant 0 : index
    %272 = vector.load %arg34[%c0_186, %c0_187] : memref<64x128xf32, #tpu.memory_space<vmem>>, vector<64x128xf32>
    %cst_188 = arith.constant dense<0.000000e+00> : vector<2x128xf32>
    %273 = tpu.matmul %271, %272, %cst_188 {dimension_numbers = #tpu.dot_dimension_numbers<[1], [0], [0], [1], [0, 0, 1, 1], [], []>} : vector<2x64xf32>, vector<64x128xf32>, vector<2x128xf32> -> vector<2x128xf32>
    %274 = arith.negf %273 : vector<2x128xf32>
    %275 = math.exp %274 : vector<2x128xf32>
    %cst_189 = arith.constant 1.000000e+00 : f32
    %276 = vector.broadcast %cst_189 : f32 to vector<2x128xf32>
    %277 = arith.addf %276, %275 : vector<2x128xf32>
    %278 = arith.divf %276, %277 : vector<2x128xf32>
    %279 = arith.addf %263, %278 : vector<2x128xf32>
    %cst_190 = arith.constant dense<0.000000e+00> : vector<32x128xf32>
    %280 = tpu.matmul %3, %279, %cst_190 {dimension_numbers = #tpu.dot_dimension_numbers<[1], [0], [0], [1], [0, 0, 1, 1], [], []>} : vector<32x2xf32>, vector<2x128xf32>, vector<32x128xf32> -> vector<32x128xf32>
    %281 = arith.mulf %251, %280 : vector<32x128xf32>
    %282 = arith.addf %281, %167 : vector<32x128xf32>
    %c0_191 = arith.constant 0 : index
    %c0_192 = arith.constant 0 : index
    %283 = vector.load %arg50[%c0_191, %c0_192] : memref<128x256xf32, #tpu.memory_space<vmem>>, vector<128x256xf32>
    %cst_193 = arith.constant dense<0.000000e+00> : vector<32x256xf32>
    %284 = tpu.matmul %282, %283, %cst_193 {dimension_numbers = #tpu.dot_dimension_numbers<[1], [0], [0], [1], [0, 0, 1, 1], [], []>} : vector<32x128xf32>, vector<128x256xf32>, vector<32x256xf32> -> vector<32x256xf32>
    %c0_194 = arith.constant 0 : index
    %c0_195 = arith.constant 0 : index
    %285 = vector.load %arg51[%c0_194, %c0_195] : memref<1x256xf32, #tpu.memory_space<vmem>>, vector<1x256xf32>
    %286 = vector.broadcast %285 : vector<1x256xf32> to vector<32x256xf32>
    %287 = arith.addf %284, %286 : vector<32x256xf32>
    %cst_196 = arith.constant dense<0.000000e+00> : vector<1x128xf32>
    %288 = tpu.matmul %4, %282, %cst_196 {dimension_numbers = #tpu.dot_dimension_numbers<[1], [0], [0], [1], [0, 0, 1, 1], [], []>} : vector<1x32xf32>, vector<32x128xf32>, vector<1x128xf32> -> vector<1x128xf32>
    %289 = arith.mulf %282, %282 : vector<32x128xf32>
    %cst_197 = arith.constant dense<0.000000e+00> : vector<1x128xf32>
    %290 = tpu.matmul %4, %289, %cst_197 {dimension_numbers = #tpu.dot_dimension_numbers<[1], [0], [0], [1], [0, 0, 1, 1], [], []>} : vector<1x32xf32>, vector<32x128xf32>, vector<1x128xf32> -> vector<1x128xf32>
    %cst_198 = arith.constant 3.125000e-02 : f32
    %291 = vector.broadcast %cst_198 : f32 to vector<1x128xf32>
    %292 = arith.mulf %288, %291 : vector<1x128xf32>
    %cst_199 = arith.constant 3.125000e-02 : f32
    %293 = vector.broadcast %cst_199 : f32 to vector<1x128xf32>
    %294 = arith.mulf %290, %293 : vector<1x128xf32>
    %295 = arith.mulf %292, %292 : vector<1x128xf32>
    %296 = arith.subf %294, %295 : vector<1x128xf32>
    %cst_200 = arith.constant 0.000000e+00 : f32
    %297 = vector.broadcast %cst_200 : f32 to vector<1x128xf32>
    %298 = arith.maximumf %296, %297 : vector<1x128xf32>
    %299 = vector.broadcast %292 : vector<1x128xf32> to vector<32x128xf32>
    %300 = arith.subf %282, %299 : vector<32x128xf32>
    %cst_201 = arith.constant 9.99999974E-6 : f32
    %301 = vector.broadcast %cst_201 : f32 to vector<1x128xf32>
    %302 = arith.addf %298, %301 : vector<1x128xf32>
    %303 = math.rsqrt %302 : vector<1x128xf32>
    %304 = vector.broadcast %303 : vector<1x128xf32> to vector<32x128xf32>
    %305 = arith.mulf %300, %304 : vector<32x128xf32>
    %c0_202 = arith.constant 0 : index
    %c0_203 = arith.constant 0 : index
    %306 = vector.load %arg37[%c0_202, %c0_203] : memref<1x128xf32, #tpu.memory_space<vmem>>, vector<1x128xf32>
    %307 = vector.broadcast %306 : vector<1x128xf32> to vector<32x128xf32>
    %308 = arith.mulf %305, %307 : vector<32x128xf32>
    %c0_204 = arith.constant 0 : index
    %c0_205 = arith.constant 0 : index
    %309 = vector.load %arg38[%c0_204, %c0_205] : memref<1x128xf32, #tpu.memory_space<vmem>>, vector<1x128xf32>
    %310 = vector.broadcast %309 : vector<1x128xf32> to vector<32x128xf32>
    %311 = arith.addf %308, %310 : vector<32x128xf32>
    %cst_206 = arith.constant 0.000000e+00 : f32
    %312 = vector.broadcast %cst_206 : f32 to vector<32x128xf32>
    %313 = arith.maximumf %311, %312 : vector<32x128xf32>
    %cst_207 = arith.constant dense<0.000000e+00> : vector<32x128xf32>
    %314 = tpu.matmul %0, %313, %cst_207 {dimension_numbers = #tpu.dot_dimension_numbers<[1], [0], [0], [1], [0, 0, 1, 1], [], []>} : vector<32x32xf32>, vector<32x128xf32>, vector<32x128xf32> -> vector<32x128xf32>
    %cst_208 = arith.constant dense<0.000000e+00> : vector<32x128xf32>
    %315 = tpu.matmul %1, %313, %cst_208 {dimension_numbers = #tpu.dot_dimension_numbers<[1], [0], [0], [1], [0, 0, 1, 1], [], []>} : vector<32x32xf32>, vector<32x128xf32>, vector<32x128xf32> -> vector<32x128xf32>
    %c0_209 = arith.constant 0 : index
    %c0_210 = arith.constant 0 : index
    %c0_211 = arith.constant 0 : index
    %316 = vector.load %arg39[%c0_209, %c0_210, %c0_211] : memref<3x128x256xf32, #tpu.memory_space<vmem>>, vector<1x128x256xf32>
    %317 = vector.shape_cast %316 : vector<1x128x256xf32> to vector<128x256xf32>
    %cst_212 = arith.constant dense<0.000000e+00> : vector<32x256xf32>
    %318 = tpu.matmul %314, %317, %cst_212 {dimension_numbers = #tpu.dot_dimension_numbers<[1], [0], [0], [1], [0, 0, 1, 1], [], []>} : vector<32x128xf32>, vector<128x256xf32>, vector<32x256xf32> -> vector<32x256xf32>
    %c1_213 = arith.constant 1 : index
    %c0_214 = arith.constant 0 : index
    %c0_215 = arith.constant 0 : index
    %319 = vector.load %arg39[%c1_213, %c0_214, %c0_215] : memref<3x128x256xf32, #tpu.memory_space<vmem>>, vector<1x128x256xf32>
    %320 = vector.shape_cast %319 : vector<1x128x256xf32> to vector<128x256xf32>
    %cst_216 = arith.constant dense<0.000000e+00> : vector<32x256xf32>
    %321 = tpu.matmul %313, %320, %cst_216 {dimension_numbers = #tpu.dot_dimension_numbers<[1], [0], [0], [1], [0, 0, 1, 1], [], []>} : vector<32x128xf32>, vector<128x256xf32>, vector<32x256xf32> -> vector<32x256xf32>
    %322 = arith.addf %318, %321 : vector<32x256xf32>
    %c2_217 = arith.constant 2 : index
    %c0_218 = arith.constant 0 : index
    %c0_219 = arith.constant 0 : index
    %323 = vector.load %arg39[%c2_217, %c0_218, %c0_219] : memref<3x128x256xf32, #tpu.memory_space<vmem>>, vector<1x128x256xf32>
    %324 = vector.shape_cast %323 : vector<1x128x256xf32> to vector<128x256xf32>
    %cst_220 = arith.constant dense<0.000000e+00> : vector<32x256xf32>
    %325 = tpu.matmul %315, %324, %cst_220 {dimension_numbers = #tpu.dot_dimension_numbers<[1], [0], [0], [1], [0, 0, 1, 1], [], []>} : vector<32x128xf32>, vector<128x256xf32>, vector<32x256xf32> -> vector<32x256xf32>
    %326 = arith.addf %322, %325 : vector<32x256xf32>
    %c0_221 = arith.constant 0 : index
    %c0_222 = arith.constant 0 : index
    %327 = vector.load %arg40[%c0_221, %c0_222] : memref<1x256xf32, #tpu.memory_space<vmem>>, vector<1x256xf32>
    %328 = vector.broadcast %327 : vector<1x256xf32> to vector<32x256xf32>
    %329 = arith.addf %326, %328 : vector<32x256xf32>
    %cst_223 = arith.constant dense<0.000000e+00> : vector<1x256xf32>
    %330 = tpu.matmul %4, %329, %cst_223 {dimension_numbers = #tpu.dot_dimension_numbers<[1], [0], [0], [1], [0, 0, 1, 1], [], []>} : vector<1x32xf32>, vector<32x256xf32>, vector<1x256xf32> -> vector<1x256xf32>
    %331 = arith.mulf %329, %329 : vector<32x256xf32>
    %cst_224 = arith.constant dense<0.000000e+00> : vector<1x256xf32>
    %332 = tpu.matmul %4, %331, %cst_224 {dimension_numbers = #tpu.dot_dimension_numbers<[1], [0], [0], [1], [0, 0, 1, 1], [], []>} : vector<1x32xf32>, vector<32x256xf32>, vector<1x256xf32> -> vector<1x256xf32>
    %cst_225 = arith.constant 3.125000e-02 : f32
    %333 = vector.broadcast %cst_225 : f32 to vector<1x256xf32>
    %334 = arith.mulf %330, %333 : vector<1x256xf32>
    %cst_226 = arith.constant 3.125000e-02 : f32
    %335 = vector.broadcast %cst_226 : f32 to vector<1x256xf32>
    %336 = arith.mulf %332, %335 : vector<1x256xf32>
    %337 = arith.mulf %334, %334 : vector<1x256xf32>
    %338 = arith.subf %336, %337 : vector<1x256xf32>
    %cst_227 = arith.constant 0.000000e+00 : f32
    %339 = vector.broadcast %cst_227 : f32 to vector<1x256xf32>
    %340 = arith.maximumf %338, %339 : vector<1x256xf32>
    %341 = vector.broadcast %334 : vector<1x256xf32> to vector<32x256xf32>
    %342 = arith.subf %329, %341 : vector<32x256xf32>
    %cst_228 = arith.constant 9.99999974E-6 : f32
    %343 = vector.broadcast %cst_228 : f32 to vector<1x256xf32>
    %344 = arith.addf %340, %343 : vector<1x256xf32>
    %345 = math.rsqrt %344 : vector<1x256xf32>
    %346 = vector.broadcast %345 : vector<1x256xf32> to vector<32x256xf32>
    %347 = arith.mulf %342, %346 : vector<32x256xf32>
    %c0_229 = arith.constant 0 : index
    %c0_230 = arith.constant 0 : index
    %348 = vector.load %arg41[%c0_229, %c0_230] : memref<1x256xf32, #tpu.memory_space<vmem>>, vector<1x256xf32>
    %349 = vector.broadcast %348 : vector<1x256xf32> to vector<32x256xf32>
    %350 = arith.mulf %347, %349 : vector<32x256xf32>
    %c0_231 = arith.constant 0 : index
    %c0_232 = arith.constant 0 : index
    %351 = vector.load %arg42[%c0_231, %c0_232] : memref<1x256xf32, #tpu.memory_space<vmem>>, vector<1x256xf32>
    %352 = vector.broadcast %351 : vector<1x256xf32> to vector<32x256xf32>
    %353 = arith.addf %350, %352 : vector<32x256xf32>
    %cst_233 = arith.constant 0.000000e+00 : f32
    %354 = vector.broadcast %cst_233 : f32 to vector<32x256xf32>
    %355 = arith.maximumf %353, %354 : vector<32x256xf32>
    %cst_234 = arith.constant dense<0.000000e+00> : vector<32x256xf32>
    %356 = tpu.matmul %0, %355, %cst_234 {dimension_numbers = #tpu.dot_dimension_numbers<[1], [0], [0], [1], [0, 0, 1, 1], [], []>} : vector<32x32xf32>, vector<32x256xf32>, vector<32x256xf32> -> vector<32x256xf32>
    %cst_235 = arith.constant dense<0.000000e+00> : vector<32x256xf32>
    %357 = tpu.matmul %1, %355, %cst_235 {dimension_numbers = #tpu.dot_dimension_numbers<[1], [0], [0], [1], [0, 0, 1, 1], [], []>} : vector<32x32xf32>, vector<32x256xf32>, vector<32x256xf32> -> vector<32x256xf32>
    %c0_236 = arith.constant 0 : index
    %c0_237 = arith.constant 0 : index
    %c0_238 = arith.constant 0 : index
    %358 = vector.load %arg43[%c0_236, %c0_237, %c0_238] : memref<3x256x256xf32, #tpu.memory_space<vmem>>, vector<1x256x256xf32>
    %359 = vector.shape_cast %358 : vector<1x256x256xf32> to vector<256x256xf32>
    %cst_239 = arith.constant dense<0.000000e+00> : vector<32x256xf32>
    %360 = tpu.matmul %356, %359, %cst_239 {dimension_numbers = #tpu.dot_dimension_numbers<[1], [0], [0], [1], [0, 0, 1, 1], [], []>} : vector<32x256xf32>, vector<256x256xf32>, vector<32x256xf32> -> vector<32x256xf32>
    %c1_240 = arith.constant 1 : index
    %c0_241 = arith.constant 0 : index
    %c0_242 = arith.constant 0 : index
    %361 = vector.load %arg43[%c1_240, %c0_241, %c0_242] : memref<3x256x256xf32, #tpu.memory_space<vmem>>, vector<1x256x256xf32>
    %362 = vector.shape_cast %361 : vector<1x256x256xf32> to vector<256x256xf32>
    %cst_243 = arith.constant dense<0.000000e+00> : vector<32x256xf32>
    %363 = tpu.matmul %355, %362, %cst_243 {dimension_numbers = #tpu.dot_dimension_numbers<[1], [0], [0], [1], [0, 0, 1, 1], [], []>} : vector<32x256xf32>, vector<256x256xf32>, vector<32x256xf32> -> vector<32x256xf32>
    %364 = arith.addf %360, %363 : vector<32x256xf32>
    %c2_244 = arith.constant 2 : index
    %c0_245 = arith.constant 0 : index
    %c0_246 = arith.constant 0 : index
    %365 = vector.load %arg43[%c2_244, %c0_245, %c0_246] : memref<3x256x256xf32, #tpu.memory_space<vmem>>, vector<1x256x256xf32>
    %366 = vector.shape_cast %365 : vector<1x256x256xf32> to vector<256x256xf32>
    %cst_247 = arith.constant dense<0.000000e+00> : vector<32x256xf32>
    %367 = tpu.matmul %357, %366, %cst_247 {dimension_numbers = #tpu.dot_dimension_numbers<[1], [0], [0], [1], [0, 0, 1, 1], [], []>} : vector<32x256xf32>, vector<256x256xf32>, vector<32x256xf32> -> vector<32x256xf32>
    %368 = arith.addf %364, %367 : vector<32x256xf32>
    %c0_248 = arith.constant 0 : index
    %c0_249 = arith.constant 0 : index
    %369 = vector.load %arg44[%c0_248, %c0_249] : memref<1x256xf32, #tpu.memory_space<vmem>>, vector<1x256xf32>
    %370 = vector.broadcast %369 : vector<1x256xf32> to vector<32x256xf32>
    %371 = arith.addf %368, %370 : vector<32x256xf32>
    %cst_250 = arith.constant dense<0.000000e+00> : vector<2x256xf32>
    %372 = tpu.matmul %2, %371, %cst_250 {dimension_numbers = #tpu.dot_dimension_numbers<[1], [0], [0], [1], [0, 0, 1, 1], [], []>} : vector<2x32xf32>, vector<32x256xf32>, vector<2x256xf32> -> vector<2x256xf32>
    %c0_251 = arith.constant 0 : index
    %c0_252 = arith.constant 0 : index
    %373 = vector.load %arg45[%c0_251, %c0_252] : memref<256x16xf32, #tpu.memory_space<vmem>>, vector<256x16xf32>
    %cst_253 = arith.constant dense<0.000000e+00> : vector<2x16xf32>
    %374 = tpu.matmul %372, %373, %cst_253 {dimension_numbers = #tpu.dot_dimension_numbers<[1], [0], [0], [1], [0, 0, 1, 1], [], []>} : vector<2x256xf32>, vector<256x16xf32>, vector<2x16xf32> -> vector<2x16xf32>
    %cst_254 = arith.constant 0.000000e+00 : f32
    %375 = vector.broadcast %cst_254 : f32 to vector<2x16xf32>
    %376 = arith.maximumf %374, %375 : vector<2x16xf32>
    %c0_255 = arith.constant 0 : index
    %c0_256 = arith.constant 0 : index
    %377 = vector.load %arg46[%c0_255, %c0_256] : memref<16x256xf32, #tpu.memory_space<vmem>>, vector<16x256xf32>
    %cst_257 = arith.constant dense<0.000000e+00> : vector<2x256xf32>
    %378 = tpu.matmul %376, %377, %cst_257 {dimension_numbers = #tpu.dot_dimension_numbers<[1], [0], [0], [1], [0, 0, 1, 1], [], []>} : vector<2x16xf32>, vector<16x256xf32>, vector<2x256xf32> -> vector<2x256xf32>
    %379 = arith.negf %378 : vector<2x256xf32>
    %380 = math.exp %379 : vector<2x256xf32>
    %cst_258 = arith.constant 1.000000e+00 : f32
    %381 = vector.broadcast %cst_258 : f32 to vector<2x256xf32>
    %382 = arith.addf %381, %380 : vector<2x256xf32>
    %383 = arith.divf %381, %382 : vector<2x256xf32>
    %c0_259 = arith.constant 0 : index
    %c0_260 = arith.constant 0 : index
    %384 = vector.load %arg47[%c0_259, %c0_260] : memref<256x16xf32, #tpu.memory_space<vmem>>, vector<256x16xf32>
    %cst_261 = arith.constant dense<0.000000e+00> : vector<2x16xf32>
    %385 = tpu.matmul %372, %384, %cst_261 {dimension_numbers = #tpu.dot_dimension_numbers<[1], [0], [0], [1], [0, 0, 1, 1], [], []>} : vector<2x256xf32>, vector<256x16xf32>, vector<2x16xf32> -> vector<2x16xf32>
    %cst_262 = arith.constant 0.000000e+00 : f32
    %386 = vector.broadcast %cst_262 : f32 to vector<2x16xf32>
    %387 = arith.maximumf %385, %386 : vector<2x16xf32>
    %c0_263 = arith.constant 0 : index
    %c0_264 = arith.constant 0 : index
    %388 = vector.load %arg48[%c0_263, %c0_264] : memref<16x128xf32, #tpu.memory_space<vmem>>, vector<16x128xf32>
    %cst_265 = arith.constant dense<0.000000e+00> : vector<2x128xf32>
    %389 = tpu.matmul %387, %388, %cst_265 {dimension_numbers = #tpu.dot_dimension_numbers<[1], [0], [0], [1], [0, 0, 1, 1], [], []>} : vector<2x16xf32>, vector<16x128xf32>, vector<2x128xf32> -> vector<2x128xf32>
    %cst_266 = arith.constant 0.000000e+00 : f32
    %390 = vector.broadcast %cst_266 : f32 to vector<2x128xf32>
    %391 = arith.maximumf %389, %390 : vector<2x128xf32>
    %c0_267 = arith.constant 0 : index
    %c0_268 = arith.constant 0 : index
    %392 = vector.load %arg49[%c0_267, %c0_268] : memref<128x256xf32, #tpu.memory_space<vmem>>, vector<128x256xf32>
    %cst_269 = arith.constant dense<0.000000e+00> : vector<2x256xf32>
    %393 = tpu.matmul %391, %392, %cst_269 {dimension_numbers = #tpu.dot_dimension_numbers<[1], [0], [0], [1], [0, 0, 1, 1], [], []>} : vector<2x128xf32>, vector<128x256xf32>, vector<2x256xf32> -> vector<2x256xf32>
    %394 = arith.negf %393 : vector<2x256xf32>
    %395 = math.exp %394 : vector<2x256xf32>
    %cst_270 = arith.constant 1.000000e+00 : f32
    %396 = vector.broadcast %cst_270 : f32 to vector<2x256xf32>
    %397 = arith.addf %396, %395 : vector<2x256xf32>
    %398 = arith.divf %396, %397 : vector<2x256xf32>
    %399 = arith.addf %383, %398 : vector<2x256xf32>
    %cst_271 = arith.constant dense<0.000000e+00> : vector<32x256xf32>
    %400 = tpu.matmul %3, %399, %cst_271 {dimension_numbers = #tpu.dot_dimension_numbers<[1], [0], [0], [1], [0, 0, 1, 1], [], []>} : vector<32x2xf32>, vector<2x256xf32>, vector<32x256xf32> -> vector<32x256xf32>
    %401 = arith.mulf %371, %400 : vector<32x256xf32>
    %402 = arith.addf %401, %287 : vector<32x256xf32>
    %cst_272 = arith.constant dense<0.000000e+00> : vector<2x256xf32>
    %403 = tpu.matmul %2, %402, %cst_272 {dimension_numbers = #tpu.dot_dimension_numbers<[1], [0], [0], [1], [0, 0, 1, 1], [], []>} : vector<2x32xf32>, vector<32x256xf32>, vector<2x256xf32> -> vector<2x256xf32>
    %c0_273 = arith.constant 0 : index
    %c0_274 = arith.constant 0 : index
    %404 = vector.load %arg52[%c0_273, %c0_274] : memref<256x256xf32, #tpu.memory_space<vmem>>, vector<256x256xf32>
    %cst_275 = arith.constant dense<0.000000e+00> : vector<2x256xf32>
    %405 = tpu.matmul %403, %404, %cst_275 {dimension_numbers = #tpu.dot_dimension_numbers<[1], [0], [0], [1], [0, 0, 1, 1], [], []>} : vector<2x256xf32>, vector<256x256xf32>, vector<2x256xf32> -> vector<2x256xf32>
    %c0_276 = arith.constant 0 : index
    %c0_277 = arith.constant 0 : index
    %406 = vector.load %arg53[%c0_276, %c0_277] : memref<1x256xf32, #tpu.memory_space<vmem>>, vector<1x256xf32>
    %407 = vector.broadcast %406 : vector<1x256xf32> to vector<2x256xf32>
    %408 = arith.addf %405, %407 : vector<2x256xf32>
    %c0_278 = arith.constant 0 : index
    %c0_279 = arith.constant 0 : index
    %409 = vector.load %arg54[%c0_278, %c0_279] : memref<2x256xf32, #tpu.memory_space<vmem>>, vector<2x256xf32>
    tpu.vector_store %arg54[%c0_278, %c0_279], %408 {strides = array<i32>} : memref<2x256xf32, #tpu.memory_space<vmem>>, vector<2x256xf32>,
    return
  }
}

</mosaic_0001>

<llo_original>
// kernel: resnet_forward.1
$region0: #{resnet_forward.1}
  #allocation0 [shape = 'u32[]', space=smem, size = 0x4, offset = 0x4, fixed_abs, tag = 'smem constant byte address 0x4 - core index']
  #allocation1 [shape = 'u32[72,128]{1,0:T(1,128)}', space=vmem, size = 0x9000, scoped, tag = 'internal scratch']
  %s0 = inlined_call_operand.smem [shape: u32[55], index: -1, kind: input, shape index: {}]
  %s1 = sld [smem:[%s0]]
  %s2 = scalar_lea.smem %s0, 1
  %s3 = sld [smem:[%s2]]
  %s4 = scalar_lea.smem %s0, 2
  %s5 = sld [smem:[%s4]]
  %s6 = scalar_lea.smem %s0, 3
  %s7 = sld [smem:[%s6]]
  %s8 = scalar_lea.smem %s0, 4
  %s9 = sld [smem:[%s8]]
  %s10 = scalar_lea.smem %s0, 5
  %s11 = sld [smem:[%s10]]
  %s12 = scalar_lea.smem %s0, 6
  %s13 = sld [smem:[%s12]]
  %s14 = scalar_lea.smem %s0, 7
  %s15 = sld [smem:[%s14]]
  %s16 = scalar_lea.smem %s0, 8
  %s17 = sld [smem:[%s16]]
  %s18 = scalar_lea.smem %s0, 9
  %s19 = sld [smem:[%s18]]
  %s20 = scalar_lea.smem %s0, 10
  %s21 = sld [smem:[%s20]]
  %s22 = scalar_lea.smem %s0, 11
  %s23 = sld [smem:[%s22]]
  %s24 = scalar_lea.smem %s0, 12
  %s25 = sld [smem:[%s24]]
  %s26 = scalar_lea.smem %s0, 13
  %s27 = sld [smem:[%s26]]
  %s28 = scalar_lea.smem %s0, 14
  %s29 = sld [smem:[%s28]]
  %s30 = scalar_lea.smem %s0, 15
  %s31 = sld [smem:[%s30]]
  %s32 = scalar_lea.smem %s0, 16
  %s33 = sld [smem:[%s32]]
  %s34 = scalar_lea.smem %s0, 17
  %s35 = sld [smem:[%s34]]
  %s36 = scalar_lea.smem %s0, 18
  %s37 = sld [smem:[%s36]]
  %s38 = scalar_lea.smem %s0, 19
  %s39 = sld [smem:[%s38]]
  %s40 = scalar_lea.smem %s0, 20
  %s41 = sld [smem:[%s40]]
  %s42 = scalar_lea.smem %s0, 21
  %s43 = sld [smem:[%s42]]
  %s44 = scalar_lea.smem %s0, 22
  %s45 = sld [smem:[%s44]]
  %s46 = scalar_lea.smem %s0, 23
  %s47 = sld [smem:[%s46]]
  %s48 = scalar_lea.smem %s0, 24
  %s49 = sld [smem:[%s48]]
  %s50 = scalar_lea.smem %s0, 25
  %s51 = sld [smem:[%s50]]
  %s52 = scalar_lea.smem %s0, 26
  %s53 = sld [smem:[%s52]]
  %s54 = scalar_lea.smem %s0, 27
  %s55 = sld [smem:[%s54]]
  %s56 = scalar_lea.smem %s0, 28
  %s57 = sld [smem:[%s56]]
  %s58 = scalar_lea.smem %s0, 29
  %s59 = sld [smem:[%s58]]
  %s60 = scalar_lea.smem %s0, 30
  %s61 = sld [smem:[%s60]]
  %s62 = scalar_lea.smem %s0, 31
  %s63 = sld [smem:[%s62]]
  %s64 = scalar_lea.smem %s0, 32
  %s65 = sld [smem:[%s64]]
  %s66 = scalar_lea.smem %s0, 33
  %s67 = sld [smem:[%s66]]
  %s68 = scalar_lea.smem %s0, 34
  %s69 = sld [smem:[%s68]]
  %s70 = scalar_lea.smem %s0, 35
  %s71 = sld [smem:[%s70]]
  %s72 = scalar_lea.smem %s0, 36
  %s73 = sld [smem:[%s72]]
  %s74 = scalar_lea.smem %s0, 37
  %s75 = sld [smem:[%s74]]
  %s76 = scalar_lea.smem %s0, 38
  %s77 = sld [smem:[%s76]]
  %s78 = scalar_lea.smem %s0, 39
  %s79 = sld [smem:[%s78]]
  %s80 = scalar_lea.smem %s0, 40
  %s81 = sld [smem:[%s80]]
  %s82 = scalar_lea.smem %s0, 41
  %s83 = sld [smem:[%s82]]
  %s84 = scalar_lea.smem %s0, 42
  %s85 = sld [smem:[%s84]]
  %s86 = scalar_lea.smem %s0, 43
  %s87 = sld [smem:[%s86]]
  %s88 = scalar_lea.smem %s0, 44
  %s89 = sld [smem:[%s88]]
  %s90 = scalar_lea.smem %s0, 45
  %s91 = sld [smem:[%s90]]
  %s92 = scalar_lea.smem %s0, 46
  %s93 = sld [smem:[%s92]]
  %s94 = scalar_lea.smem %s0, 47
  %s95 = sld [smem:[%s94]]
  %s96 = scalar_lea.smem %s0, 48
  %s97 = sld [smem:[%s96]]
  %s98 = scalar_lea.smem %s0, 49
  %s99 = sld [smem:[%s98]]
  %s100 = scalar_lea.smem %s0, 50
  %s101 = sld [smem:[%s100]]
  %s102 = scalar_lea.smem %s0, 51
  %s103 = sld [smem:[%s102]]
  %s104 = scalar_lea.smem %s0, 52
  %s105 = sld [smem:[%s104]]
  %s106 = scalar_lea.smem %s0, 53
  %s107 = sld [smem:[%s106]]
  %s108 = scalar_lea.smem %s0, 54
  %s109 = sld [smem:[%s108]]
  %s110 = sld [smem:[#allocation0]]
  $region382: #{resnet_forward.1} parent=0
    _
  %s112 = ssub.s32 1, %s110
  %s113 = scalar_select 0, %s112, %s110
  $region1: #{resnet_forward.1} parent=0
    #allocation2 [shape = 'u8[6144]{0}', space=vmem, size = 0x1800, scoped, tag = 'input window, operand 5, single buffered']
    #allocation3 [shape = 's32[1]{0}', space=sflag, size = 0x4, scoped, tag = 'scoped memory for resnet_forward.1']
    #allocation4 [shape = 's32[1]{0}', space=sflag, size = 0x4, scoped, tag = 'scoped memory for resnet_forward.1']
    #allocation5 [shape = 'u8[512]{0}', space=vmem, size = 0x400, scoped, tag = 'input window, operand 7, single buffered']
    #allocation6 [shape = 's32[1]{0}', space=sflag, size = 0x4, scoped, tag = 'scoped memory for resnet_forward.1']
    #allocation7 [shape = 'u8[512]{0}', space=vmem, size = 0x400, scoped, tag = 'input window, operand 8, single buffered']
    #allocation8 [shape = 'u8[512]{0}', space=vmem, size = 0x400, scoped, tag = 'input window, operand 9, single buffered']
    #allocation9 [shape = 's32[1]{0}', space=sflag, size = 0x4, scoped, tag = 'scoped memory for resnet_forward.1']
    #allocation10 [shape = 'u8[512]{0}', space=vmem, size = 0x400, scoped, tag = 'input window, operand 10, single buffered']
    #allocation11 [shape = 'u8[98304]{0}', space=vmem, size = 0x18000, scoped, tag = 'input window, operand 11, single buffered']
    #allocation12 [shape = 's32[1]{0}', space=sflag, size = 0x4, scoped, tag = 'scoped memory for resnet_forward.1']
    #allocation13 [shape = 'u8[512]{0}', space=vmem, size = 0x400, scoped, tag = 'input window, operand 12, single buffered']
    #allocation14 [shape = 'u8[512]{0}', space=vmem, size = 0x400, scoped, tag = 'input window, operand 13, single buffered']
    #allocation15 [shape = 's32[1]{0}', space=sflag, size = 0x4, scoped, tag = 'scoped memory for resnet_forward.1']
    #allocation16 [shape = 'u8[512]{0}', space=vmem, size = 0x400, scoped, tag = 'input window, operand 14, single buffered']
    #allocation17 [shape = 'u8[98304]{0}', space=vmem, size = 0x18000, scoped, tag = 'input window, operand 15, single buffered']
    #allocation18 [shape = 's32[1]{0}', space=sflag, size = 0x4, scoped, tag = 'scoped memory for resnet_forward.1']
    #allocation19 [shape = 'u8[512]{0}', space=vmem, size = 0x400, scoped, tag = 'input window, operand 16, single buffered']
    #allocation20 [shape = 'u8[2048]{0}', space=vmem, size = 0x800, scoped, tag = 'input window, operand 18, single buffered']
    #allocation21 [shape = 's32[1]{0}', space=sflag, size = 0x4, scoped, tag = 'scoped memory for resnet_forward.1']
    #allocation22 [shape = 'u8[2048]{0}', space=vmem, size = 0x800, scoped, tag = 'input window, operand 20, single buffered']
    #allocation23 [shape = 'u8[16384]{0}', space=vmem, size = 0x4000, scoped, tag = 'input window, operand 21, single buffered']
    #allocation24 [shape = 's32[1]{0}', space=sflag, size = 0x4, scoped, tag = 'scoped memory for resnet_forward.1']
    #allocation25 [shape = 'u8[512]{0}', space=vmem, size = 0x400, scoped, tag = 'input window, operand 22, single buffered']
    #allocation26 [shape = 'u8[512]{0}', space=vmem, size = 0x400, scoped, tag = 'input window, operand 23, single buffered']
    #allocation27 [shape = 's32[1]{0}', space=sflag, size = 0x4, scoped, tag = 'scoped memory for resnet_forward.1']
    #allocation28 [shape = 'u8[98304]{0}', space=vmem, size = 0x18000, scoped, tag = 'input window, operand 24, single buffered']
    #allocation29 [shape = 'u8[512]{0}', space=vmem, size = 0x400, scoped, tag = 'input window, operand 25, single buffered']
    #allocation30 [shape = 's32[1]{0}', space=sflag, size = 0x4, scoped, tag = 'scoped memory for resnet_forward.1']
    #allocation31 [shape = 'u8[512]{0}', space=vmem, size = 0x400, scoped, tag = 'input window, operand 26, single buffered']
    #allocation32 [shape = 'u8[512]{0}', space=vmem, size = 0x400, scoped, tag = 'input window, operand 27, single buffered']
    #allocation33 [shape = 's32[1]{0}', space=sflag, size = 0x4, scoped, tag = 'scoped memory for resnet_forward.1']
    #allocation34 [shape = 'u8[512]{0}', space=vmem, size = 0x400, scoped, tag = 'input window, operand 29, single buffered']
    #allocation35 [shape = 'u8[4096]{0}', space=vmem, size = 0x1000, scoped, tag = 'input window, operand 31, single buffered']
    #allocation36 [shape = 's32[1]{0}', space=sflag, size = 0x4, scoped, tag = 'scoped memory for resnet_forward.1']
    #allocation37 [shape = 'u8[4096]{0}', space=vmem, size = 0x1000, scoped, tag = 'input window, operand 33, single buffered']
    #allocation38 [shape = 'u8[32768]{0}', space=vmem, size = 0x8000, scoped, tag = 'input window, operand 34, single buffered']
    #allocation39 [shape = 's32[1]{0}', space=sflag, size = 0x4, scoped, tag = 'scoped memory for resnet_forward.1']
    #allocation40 [shape = 'u8[32768]{0}', space=vmem, size = 0x8000, scoped, tag = 'input window, operand 35, single buffered']
    #allocation41 [shape = 'u8[512]{0}', space=vmem, size = 0x400, scoped, tag = 'input window, operand 36, single buffered']
    #allocation42 [shape = 's32[1]{0}', space=sflag, size = 0x4, scoped, tag = 'scoped memory for resnet_forward.1']
    #allocation43 [shape = 'u8[512]{0}', space=vmem, size = 0x400, scoped, tag = 'input window, operand 37, single buffered']
    #allocation44 [shape = 'u8[512]{0}', space=vmem, size = 0x400, scoped, tag = 'input window, operand 38, single buffered']
    #allocation45 [shape = 's32[1]{0}', space=sflag, size = 0x4, scoped, tag = 'scoped memory for resnet_forward.1']
    #allocation46 [shape = 'u8[1024]{0}', space=vmem, size = 0x400, scoped, tag = 'input window, operand 40, single buffered']
    #allocation47 [shape = 'u8[1024]{0}', space=vmem, size = 0x400, scoped, tag = 'input window, operand 41, single buffered']
    #allocation48 [shape = 's32[1]{0}', space=sflag, size = 0x4, scoped, tag = 'scoped memory for resnet_forward.1']
    #allocation49 [shape = 'u8[1024]{0}', space=vmem, size = 0x400, scoped, tag = 'input window, operand 42, single buffered']
    #allocation50 [shape = 'u8[786432]{0}', space=vmem, size = 0xc0000, scoped, tag = 'input window, operand 43, single buffered']
    #allocation51 [shape = 's32[1]{0}', space=sflag, size = 0x4, scoped, tag = 'scoped memory for resnet_forward.1']
    #allocation52 [shape = 'u8[1024]{0}', space=vmem, size = 0x400, scoped, tag = 'input window, operand 44, single buffered']
    #allocation53 [shape = 'u8[16384]{0}', space=vmem, size = 0x4000, scoped, tag = 'input window, operand 46, single buffered']
    #allocation54 [shape = 's32[1]{0}', space=sflag, size = 0x4, scoped, tag = 'scoped memory for resnet_forward.1']
    #allocation55 [shape = 'u8[131072]{0}', space=vmem, size = 0x20000, scoped, tag = 'input window, operand 49, single buffered']
    #allocation56 [shape = 'u8[131072]{0}', space=vmem, size = 0x20000, scoped, tag = 'input window, operand 50, single buffered']
    #allocation57 [shape = 's32[1]{0}', space=sflag, size = 0x4, scoped, tag = 'scoped memory for resnet_forward.1']
    #allocation58 [shape = 'u8[1024]{0}', space=vmem, size = 0x400, scoped, tag = 'input window, operand 51, single buffered']
    #allocation59 [shape = 'u8[262144]{0}', space=vmem, size = 0x40000, scoped, tag = 'input window, operand 52, single buffered']
    #allocation60 [shape = 's32[1]{0}', space=sflag, size = 0x4, scoped, tag = 'scoped memory for resnet_forward.1']
    #allocation61 [shape = 'u8[1024]{0}', space=vmem, size = 0x400, scoped, tag = 'input window, operand 53, single buffered']
    #allocation62 [shape = 'u8[2048]{0}', space=vmem, size = 0x800, scoped, tag = 'output window, operand 0, single buffered']
    %114 = vsyncpa [#allocation3], 0
    %115 = vsyncpa [#allocation6], 0
    %116 = vsyncpa [#allocation9], 0
    %117 = vsyncpa [#allocation12], 0
    %118 = vsyncpa [#allocation15], 0
    %119 = vsyncpa [#allocation18], 0
    %120 = vsyncpa [#allocation21], 0
    %121 = vsyncpa [#allocation24], 0
    %122 = vsyncpa [#allocation27], 0
    %123 = vsyncpa [#allocation30], 0
    %124 = vsyncpa [#allocation33], 0
    %125 = vsyncpa [#allocation36], 0
    %126 = vsyncpa [#allocation39], 0
    %127 = vsyncpa [#allocation42], 0
    %128 = vsyncpa [#allocation45], 0
    %129 = vsyncpa [#allocation48], 0
    %130 = vsyncpa [#allocation51], 0
    %131 = vsyncpa [#allocation54], 0
    %132 = vsyncpa [#allocation57], 0
    %133 = vsyncpa [#allocation60], 0
    %134 = vsyncpa [#allocation4], 0
    // Predicated region
    $region2: #{resnet_forward.1} parent=1 // pred_check
      _
    $region3: #{resnet_forward.1} parent=1 // pred_check_branch
      %136 = sbr.rel (0) target = $region5
    $region4: #{resnet_forward.1} parent=1 // pred_region
      _
    $region5: #{resnet_forward.1} parent=1 // pred_fallthru
      _
    // Predicated region
    $region6: #{resnet_forward.1} parent=1 // pred_check
      _
    $region7: #{resnet_forward.1} parent=1 // pred_check_branch
      %138 = sbr.rel (0) target = $region9
    $region8: #{resnet_forward.1} parent=1 // pred_region
      _
    $region9: #{resnet_forward.1} parent=1 // pred_fallthru
      _
    // Predicated region
    $region10: #{resnet_forward.1} parent=1 // pred_check
      _
    $region11: #{resnet_forward.1} parent=1 // pred_check_branch
      %140 = sbr.rel (0) target = $region13
    $region12: #{resnet_forward.1} parent=1 // pred_region
      _
    $region13: #{resnet_forward.1} parent=1 // pred_fallthru
      _
    // Predicated region
    $region14: #{resnet_forward.1} parent=1 // pred_check
      _
    $region15: #{resnet_forward.1} parent=1 // pred_check_branch
      %142 = sbr.rel (0) target = $region17
    $region16: #{resnet_forward.1} parent=1 // pred_region
      _
    $region17: #{resnet_forward.1} parent=1 // pred_fallthru
      _
    // Predicated region
    $region18: #{resnet_forward.1} parent=1 // pred_check
      _
    $region19: #{resnet_forward.1} parent=1 // pred_check_branch
      %144 = sbr.rel (0) target = $region21
    $region20: #{resnet_forward.1} parent=1 // pred_region
      _
    $region21: #{resnet_forward.1} parent=1 // pred_fallthru
      _
    // Predicated region
    $region22: #{resnet_forward.1} parent=1 // pred_check
      _
    $region23: #{resnet_forward.1} parent=1 // pred_check_branch
      %146 = sbr.rel (0) target = $region25
    $region24: #{resnet_forward.1} parent=1 // pred_region
      %148 = vsyncadd [#allocation3], 0
      %s149 = sshll.u32 %s11, 4
      %s150 = int_to_ptr.hbm [resolvable:$true] %s149
      %s151 = sshll.u32 [#allocation2], 4
      %s152 = int_to_ptr.vmem [resolvable:$true] %s151
      %157 = dma.hbm_to_vmem [thread:$0]  %s150, 192, %s152, [#allocation3], 64, 64, 4
    $region25: #{resnet_forward.1} parent=1 // pred_fallthru
      _
    // Predicated region
    $region26: #{resnet_forward.1} parent=1 // pred_check
      _
    $region27: #{resnet_forward.1} parent=1 // pred_check_branch
      %159 = sbr.rel (0) target = $region29
    $region28: #{resnet_forward.1} parent=1 // pred_region
      _
    $region29: #{resnet_forward.1} parent=1 // pred_fallthru
      _
    // Predicated region
    $region30: #{resnet_forward.1} parent=1 // pred_check
      _
    $region31: #{resnet_forward.1} parent=1 // pred_check_branch
      %161 = sbr.rel (0) target = $region33
    $region32: #{resnet_forward.1} parent=1 // pred_region
      %163 = vsyncadd [#allocation6], 0
      %s165 = sshll.u32 %s15, 4
      %s166 = int_to_ptr.hbm [resolvable:$true] %s165
      %s167 = sshll.u32 [#allocation5], 4
      %s168 = int_to_ptr.vmem [resolvable:$true] %s167
      %170 = dma.hbm_to_vmem [thread:$0]  %s166, 16, %s168, [#allocation6]
    $region33: #{resnet_forward.1} parent=1 // pred_fallthru
      _
    // Predicated region
    $region34: #{resnet_forward.1} parent=1 // pred_check
      _
    $region35: #{resnet_forward.1} parent=1 // pred_check_branch
      %172 = sbr.rel (0) target = $region37
    $region36: #{resnet_forward.1} parent=1 // pred_region
      %174 = vsyncadd [#allocation6], 0
      %s176 = sshll.u32 %s17, 4
      %s177 = int_to_ptr.hbm [resolvable:$true] %s176
      %s178 = sshll.u32 [#allocation7], 4
      %s179 = int_to_ptr.vmem [resolvable:$true] %s178
      %181 = dma.hbm_to_vmem [thread:$0]  %s177, 16, %s179, [#allocation6]
    $region37: #{resnet_forward.1} parent=1 // pred_fallthru
      _
    // Predicated region
    $region38: #{resnet_forward.1} parent=1 // pred_check
      _
    $region39: #{resnet_forward.1} parent=1 // pred_check_branch
      %183 = sbr.rel (0) target = $region41
    $region40: #{resnet_forward.1} parent=1 // pred_region
      %185 = vsyncadd [#allocation9], 0
      %s187 = sshll.u32 %s19, 4
      %s188 = int_to_ptr.hbm [resolvable:$true] %s187
      %s189 = sshll.u32 [#allocation8], 4
      %s190 = int_to_ptr.vmem [resolvable:$true] %s189
      %192 = dma.hbm_to_vmem [thread:$0]  %s188, 16, %s190, [#allocation9]
    $region41: #{resnet_forward.1} parent=1 // pred_fallthru
      _
    // Predicated region
    $region42: #{resnet_forward.1} parent=1 // pred_check
      _
    $region43: #{resnet_forward.1} parent=1 // pred_check_branch
      %194 = sbr.rel (0) target = $region45
    $region44: #{resnet_forward.1} parent=1 // pred_region
      %196 = vsyncadd [#allocation9], 0
      %s198 = sshll.u32 %s21, 4
      %s199 = int_to_ptr.hbm [resolvable:$true] %s198
      %s200 = sshll.u32 [#allocation10], 4
      %s201 = int_to_ptr.vmem [resolvable:$true] %s200
      %203 = dma.hbm_to_vmem [thread:$0]  %s199, 16, %s201, [#allocation9]
    $region45: #{resnet_forward.1} parent=1 // pred_fallthru
      _
    // Predicated region
    $region46: #{resnet_forward.1} parent=1 // pred_check
      _
    $region47: #{resnet_forward.1} parent=1 // pred_check_branch
      %205 = sbr.rel (0) target = $region49
    $region48: #{resnet_forward.1} parent=1 // pred_region
      %207 = vsyncadd [#allocation12], 0
      %s208 = sshll.u32 %s23, 4
      %s209 = int_to_ptr.hbm [resolvable:$true] %s208
      %s210 = sshll.u32 [#allocation11], 4
      %s211 = int_to_ptr.vmem [resolvable:$true] %s210
      %216 = dma.hbm_to_vmem [thread:$0]  %s209, 3072, %s211, [#allocation12], 128, 128, 8
    $region49: #{resnet_forward.1} parent=1 // pred_fallthru
      _
    // Predicated region
    $region50: #{resnet_forward.1} parent=1 // pred_check
      _
    $region51: #{resnet_forward.1} parent=1 // pred_check_branch
      %218 = sbr.rel (0) target = $region53
    $region52: #{resnet_forward.1} parent=1 // pred_region
      %220 = vsyncadd [#allocation12], 0
      %s222 = sshll.u32 %s25, 4
      %s223 = int_to_ptr.hbm [resolvable:$true] %s222
      %s224 = sshll.u32 [#allocation13], 4
      %s225 = int_to_ptr.vmem [resolvable:$true] %s224
      %227 = dma.hbm_to_vmem [thread:$0]  %s223, 16, %s225, [#allocation12]
    $region53: #{resnet_forward.1} parent=1 // pred_fallthru
      _
    // Predicated region
    $region54: #{resnet_forward.1} parent=1 // pred_check
      _
    $region55: #{resnet_forward.1} parent=1 // pred_check_branch
      %229 = sbr.rel (0) target = $region57
    $region56: #{resnet_forward.1} parent=1 // pred_region
      %231 = vsyncadd [#allocation15], 0
      %s233 = sshll.u32 %s27, 4
      %s234 = int_to_ptr.hbm [resolvable:$true] %s233
      %s235 = sshll.u32 [#allocation14], 4
      %s236 = int_to_ptr.vmem [resolvable:$true] %s235
      %238 = dma.hbm_to_vmem [thread:$0]  %s234, 16, %s236, [#allocation15]
    $region57: #{resnet_forward.1} parent=1 // pred_fallthru
      _
    // Predicated region
    $region58: #{resnet_forward.1} parent=1 // pred_check
      _
    $region59: #{resnet_forward.1} parent=1 // pred_check_branch
      %240 = sbr.rel (0) target = $region61
    $region60: #{resnet_forward.1} parent=1 // pred_region
      %242 = vsyncadd [#allocation15], 0
      %s244 = sshll.u32 %s29, 4
      %s245 = int_to_ptr.hbm [resolvable:$true] %s244
      %s246 = sshll.u32 [#allocation16], 4
      %s247 = int_to_ptr.vmem [resolvable:$true] %s246
      %249 = dma.hbm_to_vmem [thread:$0]  %s245, 16, %s247, [#allocation15]
    $region61: #{resnet_forward.1} parent=1 // pred_fallthru
      _
    // Predicated region
    $region62: #{resnet_forward.1} parent=1 // pred_check
      _
    $region63: #{resnet_forward.1} parent=1 // pred_check_branch
      %251 = sbr.rel (0) target = $region65
    $region64: #{resnet_forward.1} parent=1 // pred_region
      %253 = vsyncadd [#allocation18], 0
      %s254 = sshll.u32 %s31, 4
      %s255 = int_to_ptr.hbm [resolvable:$true] %s254
      %s256 = sshll.u32 [#allocation17], 4
      %s257 = int_to_ptr.vmem [resolvable:$true] %s256
      %262 = dma.hbm_to_vmem [thread:$0]  %s255, 3072, %s257, [#allocation18], 128, 128, 8
    $region65: #{resnet_forward.1} parent=1 // pred_fallthru
      _
    // Predicated region
    $region66: #{resnet_forward.1} parent=1 // pred_check
      _
    $region67: #{resnet_forward.1} parent=1 // pred_check_branch
      %264 = sbr.rel (0) target = $region69
    $region68: #{resnet_forward.1} parent=1 // pred_region
      %266 = vsyncadd [#allocation18], 0
      %s268 = sshll.u32 %s33, 4
      %s269 = int_to_ptr.hbm [resolvable:$true] %s268
      %s270 = sshll.u32 [#allocation19], 4
      %s271 = int_to_ptr.vmem [resolvable:$true] %s270
      %273 = dma.hbm_to_vmem [thread:$0]  %s269, 16, %s271, [#allocation18]
    $region69: #{resnet_forward.1} parent=1 // pred_fallthru
      _
    // Predicated region
    $region70: #{resnet_forward.1} parent=1 // pred_check
      _
    $region71: #{resnet_forward.1} parent=1 // pred_check_branch
      %275 = sbr.rel (0) target = $region73
    $region72: #{resnet_forward.1} parent=1 // pred_region
      _
    $region73: #{resnet_forward.1} parent=1 // pred_fallthru
      _
    // Predicated region
    $region74: #{resnet_forward.1} parent=1 // pred_check
      _
    $region75: #{resnet_forward.1} parent=1 // pred_check_branch
      %277 = sbr.rel (0) target = $region77
    $region76: #{resnet_forward.1} parent=1 // pred_region
      %279 = vsyncadd [#allocation21], 0
      %s281 = sshll.u32 %s37, 4
      %s282 = int_to_ptr.hbm [resolvable:$true] %s281
      %s283 = sshll.u32 [#allocation20], 4
      %s284 = int_to_ptr.vmem [resolvable:$true] %s283
      %286 = dma.hbm_to_vmem [thread:$0]  %s282, 64, %s284, [#allocation21]
    $region77: #{resnet_forward.1} parent=1 // pred_fallthru
      _
    // Predicated region
    $region78: #{resnet_forward.1} parent=1 // pred_check
      _
    $region79: #{resnet_forward.1} parent=1 // pred_check_branch
      %288 = sbr.rel (0) target = $region81
    $region80: #{resnet_forward.1} parent=1 // pred_region
      _
    $region81: #{resnet_forward.1} parent=1 // pred_fallthru
      _
    // Predicated region
    $region82: #{resnet_forward.1} parent=1 // pred_check
      _
    $region83: #{resnet_forward.1} parent=1 // pred_check_branch
      %290 = sbr.rel (0) target = $region85
    $region84: #{resnet_forward.1} parent=1 // pred_region
      %292 = vsyncadd [#allocation21], 0
      %s294 = sshll.u32 %s41, 4
      %s295 = int_to_ptr.hbm [resolvable:$true] %s294
      %s296 = sshll.u32 [#allocation22], 4
      %s297 = int_to_ptr.vmem [resolvable:$true] %s296
      %299 = dma.hbm_to_vmem [thread:$0]  %s295, 64, %s297, [#allocation21]
    $region85: #{resnet_forward.1} parent=1 // pred_fallthru
      _
    // Predicated region
    $region86: #{resnet_forward.1} parent=1 // pred_check
      _
    $region87: #{resnet_forward.1} parent=1 // pred_check_branch
      %301 = sbr.rel (0) target = $region89
    $region88: #{resnet_forward.1} parent=1 // pred_region
      %303 = vsyncadd [#allocation24], 0
      %s304 = sshll.u32 %s43, 4
      %s305 = int_to_ptr.hbm [resolvable:$true] %s304
      %s306 = sshll.u32 [#allocation23], 4
      %s307 = int_to_ptr.vmem [resolvable:$true] %s306
      %312 = dma.hbm_to_vmem [thread:$0]  %s305, 512, %s307, [#allocation24], 128, 128, 8
    $region89: #{resnet_forward.1} parent=1 // pred_fallthru
      _
    // Predicated region
    $region90: #{resnet_forward.1} parent=1 // pred_check
      _
    $region91: #{resnet_forward.1} parent=1 // pred_check_branch
      %314 = sbr.rel (0) target = $region93
    $region92: #{resnet_forward.1} parent=1 // pred_region
      %316 = vsyncadd [#allocation24], 0
      %s318 = sshll.u32 %s45, 4
      %s319 = int_to_ptr.hbm [resolvable:$true] %s318
      %s320 = sshll.u32 [#allocation25], 4
      %s321 = int_to_ptr.vmem [resolvable:$true] %s320
      %323 = dma.hbm_to_vmem [thread:$0]  %s319, 16, %s321, [#allocation24]
    $region93: #{resnet_forward.1} parent=1 // pred_fallthru
      _
    // Predicated region
    $region94: #{resnet_forward.1} parent=1 // pred_check
      _
    $region95: #{resnet_forward.1} parent=1 // pred_check_branch
      %325 = sbr.rel (0) target = $region97
    $region96: #{resnet_forward.1} parent=1 // pred_region
      %327 = vsyncadd [#allocation27], 0
      %s329 = sshll.u32 %s47, 4
      %s330 = int_to_ptr.hbm [resolvable:$true] %s329
      %s331 = sshll.u32 [#allocation26], 4
      %s332 = int_to_ptr.vmem [resolvable:$true] %s331
      %334 = dma.hbm_to_vmem [thread:$0]  %s330, 16, %s332, [#allocation27]
    $region97: #{resnet_forward.1} parent=1 // pred_fallthru
      _
    // Predicated region
    $region98: #{resnet_forward.1} parent=1 // pred_check
      _
    $region99: #{resnet_forward.1} parent=1 // pred_check_branch
      %336 = sbr.rel (0) target = $region101
    $region100: #{resnet_forward.1} parent=1 // pred_region
      %338 = vsyncadd [#allocation27], 0
      %s339 = sshll.u32 %s49, 4
      %s340 = int_to_ptr.hbm [resolvable:$true] %s339
      %s341 = sshll.u32 [#allocation28], 4
      %s342 = int_to_ptr.vmem [resolvable:$true] %s341
      %347 = dma.hbm_to_vmem [thread:$0]  %s340, 3072, %s342, [#allocation27], 128, 128, 8
    $region101: #{resnet_forward.1} parent=1 // pred_fallthru
      _
    // Predicated region
    $region102: #{resnet_forward.1} parent=1 // pred_check
      _
    $region103: #{resnet_forward.1} parent=1 // pred_check_branch
      %349 = sbr.rel (0) target = $region105
    $region104: #{resnet_forward.1} parent=1 // pred_region
      %351 = vsyncadd [#allocation30], 0
      %s353 = sshll.u32 %s51, 4
      %s354 = int_to_ptr.hbm [resolvable:$true] %s353
      %s355 = sshll.u32 [#allocation29], 4
      %s356 = int_to_ptr.vmem [resolvable:$true] %s355
      %358 = dma.hbm_to_vmem [thread:$0]  %s354, 16, %s356, [#allocation30]
    $region105: #{resnet_forward.1} parent=1 // pred_fallthru
      _
    // Predicated region
    $region106: #{resnet_forward.1} parent=1 // pred_check
      _
    $region107: #{resnet_forward.1} parent=1 // pred_check_branch
      %360 = sbr.rel (0) target = $region109
    $region108: #{resnet_forward.1} parent=1 // pred_region
      %362 = vsyncadd [#allocation30], 0
      %s364 = sshll.u32 %s53, 4
      %s365 = int_to_ptr.hbm [resolvable:$true] %s364
      %s366 = sshll.u32 [#allocation31], 4
      %s367 = int_to_ptr.vmem [resolvable:$true] %s366
      %369 = dma.hbm_to_vmem [thread:$0]  %s365, 16, %s367, [#allocation30]
    $region109: #{resnet_forward.1} parent=1 // pred_fallthru
      _
    // Predicated region
    $region110: #{resnet_forward.1} parent=1 // pred_check
      _
    $region111: #{resnet_forward.1} parent=1 // pred_check_branch
      %371 = sbr.rel (0) target = $region113
    $region112: #{resnet_forward.1} parent=1 // pred_region
      %373 = vsyncadd [#allocation33], 0
      %s375 = sshll.u32 %s55, 4
      %s376 = int_to_ptr.hbm [resolvable:$true] %s375
      %s377 = sshll.u32 [#allocation32], 4
      %s378 = int_to_ptr.vmem [resolvable:$true] %s377
      %380 = dma.hbm_to_vmem [thread:$0]  %s376, 16, %s378, [#allocation33]
    $region113: #{resnet_forward.1} parent=1 // pred_fallthru
      _
    // Predicated region
    $region114: #{resnet_forward.1} parent=1 // pred_check
      _
    $region115: #{resnet_forward.1} parent=1 // pred_check_branch
      %382 = sbr.rel (0) target = $region117
    $region116: #{resnet_forward.1} parent=1 // pred_region
      _
    $region117: #{resnet_forward.1} parent=1 // pred_fallthru
      _
    // Predicated region
    $region118: #{resnet_forward.1} parent=1 // pred_check
      _
    $region119: #{resnet_forward.1} parent=1 // pred_check_branch
      %384 = sbr.rel (0) target = $region121
    $region120: #{resnet_forward.1} parent=1 // pred_region
      %386 = vsyncadd [#allocation33], 0
      %s388 = sshll.u32 %s59, 4
      %s389 = int_to_ptr.hbm [resolvable:$true] %s388
      %s390 = sshll.u32 [#allocation34], 4
      %s391 = int_to_ptr.vmem [resolvable:$true] %s390
      %393 = dma.hbm_to_vmem [thread:$0]  %s389, 16, %s391, [#allocation33]
    $region121: #{resnet_forward.1} parent=1 // pred_fallthru
      _
    // Predicated region
    $region122: #{resnet_forward.1} parent=1 // pred_check
      _
    $region123: #{resnet_forward.1} parent=1 // pred_check_branch
      %395 = sbr.rel (0) target = $region125
    $region124: #{resnet_forward.1} parent=1 // pred_region
      _
    $region125: #{resnet_forward.1} parent=1 // pred_fallthru
      _
    // Predicated region
    $region126: #{resnet_forward.1} parent=1 // pred_check
      _
    $region127: #{resnet_forward.1} parent=1 // pred_check_branch
      %397 = sbr.rel (0) target = $region129
    $region128: #{resnet_forward.1} parent=1 // pred_region
      %399 = vsyncadd [#allocation36], 0
      %s401 = sshll.u32 %s63, 4
      %s402 = int_to_ptr.hbm [resolvable:$true] %s401
      %s403 = sshll.u32 [#allocation35], 4
      %s404 = int_to_ptr.vmem [resolvable:$true] %s403
      %406 = dma.hbm_to_vmem [thread:$0]  %s402, 128, %s404, [#allocation36]
    $region129: #{resnet_forward.1} parent=1 // pred_fallthru
      _
    // Predicated region
    $region130: #{resnet_forward.1} parent=1 // pred_check
      _
    $region131: #{resnet_forward.1} parent=1 // pred_check_branch
      %408 = sbr.rel (0) target = $region133
    $region132: #{resnet_forward.1} parent=1 // pred_region
      _
    $region133: #{resnet_forward.1} parent=1 // pred_fallthru
      _
    // Predicated region
    $region134: #{resnet_forward.1} parent=1 // pred_check
      _
    $region135: #{resnet_forward.1} parent=1 // pred_check_branch
      %410 = sbr.rel (0) target = $region137
    $region136: #{resnet_forward.1} parent=1 // pred_region
      %412 = vsyncadd [#allocation36], 0
      %s414 = sshll.u32 %s67, 4
      %s415 = int_to_ptr.hbm [resolvable:$true] %s414
      %s416 = sshll.u32 [#allocation37], 4
      %s417 = int_to_ptr.vmem [resolvable:$true] %s416
      %419 = dma.hbm_to_vmem [thread:$0]  %s415, 128, %s417, [#allocation36]
    $region137: #{resnet_forward.1} parent=1 // pred_fallthru
      _
    // Predicated region
    $region138: #{resnet_forward.1} parent=1 // pred_check
      _
    $region139: #{resnet_forward.1} parent=1 // pred_check_branch
      %421 = sbr.rel (0) target = $region141
    $region140: #{resnet_forward.1} parent=1 // pred_region
      %423 = vsyncadd [#allocation39], 0
      %s424 = sshll.u32 %s69, 4
      %s425 = int_to_ptr.hbm [resolvable:$true] %s424
      %s426 = sshll.u32 [#allocation38], 4
      %s427 = int_to_ptr.vmem [resolvable:$true] %s426
      %432 = dma.hbm_to_vmem [thread:$0]  %s425, 1024, %s427, [#allocation39], 128, 128, 8
    $region141: #{resnet_forward.1} parent=1 // pred_fallthru
      _
    // Predicated region
    $region142: #{resnet_forward.1} parent=1 // pred_check
      _
    $region143: #{resnet_forward.1} parent=1 // pred_check_branch
      %434 = sbr.rel (0) target = $region145
    $region144: #{resnet_forward.1} parent=1 // pred_region
      %436 = vsyncadd [#allocation39], 0
      %s437 = sshll.u32 %s71, 4
      %s438 = int_to_ptr.hbm [resolvable:$true] %s437
      %s439 = sshll.u32 [#allocation40], 4
      %s440 = int_to_ptr.vmem [resolvable:$true] %s439
      %445 = dma.hbm_to_vmem [thread:$0]  %s438, 1024, %s440, [#allocation39], 128, 128, 8
    $region145: #{resnet_forward.1} parent=1 // pred_fallthru
      _
    // Predicated region
    $region146: #{resnet_forward.1} parent=1 // pred_check
      _
    $region147: #{resnet_forward.1} parent=1 // pred_check_branch
      %447 = sbr.rel (0) target = $region149
    $region148: #{resnet_forward.1} parent=1 // pred_region
      %449 = vsyncadd [#allocation42], 0
      %s451 = sshll.u32 %s73, 4
      %s452 = int_to_ptr.hbm [resolvable:$true] %s451
      %s453 = sshll.u32 [#allocation41], 4
      %s454 = int_to_ptr.vmem [resolvable:$true] %s453
      %456 = dma.hbm_to_vmem [thread:$0]  %s452, 16, %s454, [#allocation42]
    $region149: #{resnet_forward.1} parent=1 // pred_fallthru
      _
    // Predicated region
    $region150: #{resnet_forward.1} parent=1 // pred_check
      _
    $region151: #{resnet_forward.1} parent=1 // pred_check_branch
      %458 = sbr.rel (0) target = $region153
    $region152: #{resnet_forward.1} parent=1 // pred_region
      %460 = vsyncadd [#allocation42], 0
      %s462 = sshll.u32 %s75, 4
      %s463 = int_to_ptr.hbm [resolvable:$true] %s462
      %s464 = sshll.u32 [#allocation43], 4
      %s465 = int_to_ptr.vmem [resolvable:$true] %s464
      %467 = dma.hbm_to_vmem [thread:$0]  %s463, 16, %s465, [#allocation42]
    $region153: #{resnet_forward.1} parent=1 // pred_fallthru
      _
    // Predicated region
    $region154: #{resnet_forward.1} parent=1 // pred_check
      _
    $region155: #{resnet_forward.1} parent=1 // pred_check_branch
      %469 = sbr.rel (0) target = $region157
    $region156: #{resnet_forward.1} parent=1 // pred_region
      %471 = vsyncadd [#allocation45], 0
      %s473 = sshll.u32 %s77, 4
      %s474 = int_to_ptr.hbm [resolvable:$true] %s473
      %s475 = sshll.u32 [#allocation44], 4
      %s476 = int_to_ptr.vmem [resolvable:$true] %s475
      %478 = dma.hbm_to_vmem [thread:$0]  %s474, 16, %s476, [#allocation45]
    $region157: #{resnet_forward.1} parent=1 // pred_fallthru
      _
    // Predicated region
    $region158: #{resnet_forward.1} parent=1 // pred_check
      _
    $region159: #{resnet_forward.1} parent=1 // pred_check_branch
      %480 = sbr.rel (0) target = $region161
    $region160: #{resnet_forward.1} parent=1 // pred_region
      _
    $region161: #{resnet_forward.1} parent=1 // pred_fallthru
      _
    // Predicated region
    $region162: #{resnet_forward.1} parent=1 // pred_check
      _
    $region163: #{resnet_forward.1} parent=1 // pred_check_branch
      %482 = sbr.rel (0) target = $region165
    $region164: #{resnet_forward.1} parent=1 // pred_region
      %484 = vsyncadd [#allocation45], 0
      %s486 = sshll.u32 %s81, 4
      %s487 = int_to_ptr.hbm [resolvable:$true] %s486
      %s488 = sshll.u32 [#allocation46], 4
      %s489 = int_to_ptr.vmem [resolvable:$true] %s488
      %491 = dma.hbm_to_vmem [thread:$0]  %s487, 32, %s489, [#allocation45]
    $region165: #{resnet_forward.1} parent=1 // pred_fallthru
      _
    // Predicated region
    $region166: #{resnet_forward.1} parent=1 // pred_check
      _
    $region167: #{resnet_forward.1} parent=1 // pred_check_branch
      %493 = sbr.rel (0) target = $region169
    $region168: #{resnet_forward.1} parent=1 // pred_region
      %495 = vsyncadd [#allocation48], 0
      %s497 = sshll.u32 %s83, 4
      %s498 = int_to_ptr.hbm [resolvable:$true] %s497
      %s499 = sshll.u32 [#allocation47], 4
      %s500 = int_to_ptr.vmem [resolvable:$true] %s499
      %502 = dma.hbm_to_vmem [thread:$0]  %s498, 32, %s500, [#allocation48]
    $region169: #{resnet_forward.1} parent=1 // pred_fallthru
      _
    // Predicated region
    $region170: #{resnet_forward.1} parent=1 // pred_check
      _
    $region171: #{resnet_forward.1} parent=1 // pred_check_branch
      %504 = sbr.rel (0) target = $region173
    $region172: #{resnet_forward.1} parent=1 // pred_region
      %506 = vsyncadd [#allocation48], 0
      %s508 = sshll.u32 %s85, 4
      %s509 = int_to_ptr.hbm [resolvable:$true] %s508
      %s510 = sshll.u32 [#allocation49], 4
      %s511 = int_to_ptr.vmem [resolvable:$true] %s510
      %513 = dma.hbm_to_vmem [thread:$0]  %s509, 32, %s511, [#allocation48]
    $region173: #{resnet_forward.1} parent=1 // pred_fallthru
      _
    // Predicated region
    $region174: #{resnet_forward.1} parent=1 // pred_check
      _
    $region175: #{resnet_forward.1} parent=1 // pred_check_branch
      %515 = sbr.rel (0) target = $region177
    $region176: #{resnet_forward.1} parent=1 // pred_region
      %517 = vsyncadd [#allocation51], 0
      %s518 = sshll.u32 %s87, 4
      %s519 = int_to_ptr.hbm [resolvable:$true] %s518
      %s520 = sshll.u32 [#allocation50], 4
      %s521 = int_to_ptr.vmem [resolvable:$true] %s520
      %526 = dma.hbm_to_vmem [thread:$0]  %s519, 24576, %s521, [#allocation51], 256, 256, 16
    $region177: #{resnet_forward.1} parent=1 // pred_fallthru
      _
    // Predicated region
    $region178: #{resnet_forward.1} parent=1 // pred_check
      _
    $region179: #{resnet_forward.1} parent=1 // pred_check_branch
      %528 = sbr.rel (0) target = $region181
    $region180: #{resnet_forward.1} parent=1 // pred_region
      %530 = vsyncadd [#allocation51], 0
      %s532 = sshll.u32 %s89, 4
      %s533 = int_to_ptr.hbm [resolvable:$true] %s532
      %s534 = sshll.u32 [#allocation52], 4
      %s535 = int_to_ptr.vmem [resolvable:$true] %s534
      %537 = dma.hbm_to_vmem [thread:$0]  %s533, 32, %s535, [#allocation51]
    $region181: #{resnet_forward.1} parent=1 // pred_fallthru
      _
    // Predicated region
    $region182: #{resnet_forward.1} parent=1 // pred_check
      _
    $region183: #{resnet_forward.1} parent=1 // pred_check_branch
      %539 = sbr.rel (0) target = $region185
    $region184: #{resnet_forward.1} parent=1 // pred_region
      _
    $region185: #{resnet_forward.1} parent=1 // pred_fallthru
      _
    // Predicated region
    $region186: #{resnet_forward.1} parent=1 // pred_check
      _
    $region187: #{resnet_forward.1} parent=1 // pred_check_branch
      %541 = sbr.rel (0) target = $region189
    $region188: #{resnet_forward.1} parent=1 // pred_region
      %543 = vsyncadd [#allocation54], 0
      %s544 = sshll.u32 %s93, 4
      %s545 = int_to_ptr.hbm [resolvable:$true] %s544
      %s546 = sshll.u32 [#allocation53], 4
      %s547 = int_to_ptr.vmem [resolvable:$true] %s546
      %552 = dma.hbm_to_vmem [thread:$0]  %s545, 512, %s547, [#allocation54], 256, 256, 16
    $region189: #{resnet_forward.1} parent=1 // pred_fallthru
      _
    // Predicated region
    $region190: #{resnet_forward.1} parent=1 // pred_check
      _
    $region191: #{resnet_forward.1} parent=1 // pred_check_branch
      %554 = sbr.rel (0) target = $region193
    $region192: #{resnet_forward.1} parent=1 // pred_region
      _
    $region193: #{resnet_forward.1} parent=1 // pred_fallthru
      _
    // Predicated region
    $region194: #{resnet_forward.1} parent=1 // pred_check
      _
    $region195: #{resnet_forward.1} parent=1 // pred_check_branch
      %556 = sbr.rel (0) target = $region197
    $region196: #{resnet_forward.1} parent=1 // pred_region
      _
    $region197: #{resnet_forward.1} parent=1 // pred_fallthru
      _
    // Predicated region
    $region198: #{resnet_forward.1} parent=1 // pred_check
      _
    $region199: #{resnet_forward.1} parent=1 // pred_check_branch
      %558 = sbr.rel (0) target = $region201
    $region200: #{resnet_forward.1} parent=1 // pred_region
      %560 = vsyncadd [#allocation54], 0
      %s561 = sshll.u32 %s99, 4
      %s562 = int_to_ptr.hbm [resolvable:$true] %s561
      %s563 = sshll.u32 [#allocation55], 4
      %s564 = int_to_ptr.vmem [resolvable:$true] %s563
      %569 = dma.hbm_to_vmem [thread:$0]  %s562, 4096, %s564, [#allocation54], 256, 256, 16
    $region201: #{resnet_forward.1} parent=1 // pred_fallthru
      _
    // Predicated region
    $region202: #{resnet_forward.1} parent=1 // pred_check
      _
    $region203: #{resnet_forward.1} parent=1 // pred_check_branch
      %571 = sbr.rel (0) target = $region205
    $region204: #{resnet_forward.1} parent=1 // pred_region
      %573 = vsyncadd [#allocation57], 0
      %s574 = sshll.u32 %s101, 4
      %s575 = int_to_ptr.hbm [resolvable:$true] %s574
      %s576 = sshll.u32 [#allocation56], 4
      %s577 = int_to_ptr.vmem [resolvable:$true] %s576
      %582 = dma.hbm_to_vmem [thread:$0]  %s575, 4096, %s577, [#allocation57], 256, 256, 16
    $region205: #{resnet_forward.1} parent=1 // pred_fallthru
      _
    // Predicated region
    $region206: #{resnet_forward.1} parent=1 // pred_check
      _
    $region207: #{resnet_forward.1} parent=1 // pred_check_branch
      %584 = sbr.rel (0) target = $region209
    $region208: #{resnet_forward.1} parent=1 // pred_region
      %586 = vsyncadd [#allocation57], 0
      %s588 = sshll.u32 %s103, 4
      %s589 = int_to_ptr.hbm [resolvable:$true] %s588
      %s590 = sshll.u32 [#allocation58], 4
      %s591 = int_to_ptr.vmem [resolvable:$true] %s590
      %593 = dma.hbm_to_vmem [thread:$0]  %s589, 32, %s591, [#allocation57]
    $region209: #{resnet_forward.1} parent=1 // pred_fallthru
      _
    // Predicated region
    $region210: #{resnet_forward.1} parent=1 // pred_check
      _
    $region211: #{resnet_forward.1} parent=1 // pred_check_branch
      %595 = sbr.rel (0) target = $region213
    $region212: #{resnet_forward.1} parent=1 // pred_region
      %597 = vsyncadd [#allocation60], 0
      %s598 = sshll.u32 %s105, 4
      %s599 = int_to_ptr.hbm [resolvable:$true] %s598
      %s600 = sshll.u32 [#allocation59], 4
      %s601 = int_to_ptr.vmem [resolvable:$true] %s600
      %606 = dma.hbm_to_vmem [thread:$0]  %s599, 8192, %s601, [#allocation60], 256, 256, 16
    $region213: #{resnet_forward.1} parent=1 // pred_fallthru
      _
    // Predicated region
    $region214: #{resnet_forward.1} parent=1 // pred_check
      _
    $region215: #{resnet_forward.1} parent=1 // pred_check_branch
      %608 = sbr.rel (0) target = $region217
    $region216: #{resnet_forward.1} parent=1 // pred_region
      %610 = vsyncadd [#allocation60], 0
      %s612 = sshll.u32 %s107, 4
      %s613 = int_to_ptr.hbm [resolvable:$true] %s612
      %s614 = sshll.u32 [#allocation61], 4
      %s615 = int_to_ptr.vmem [resolvable:$true] %s614
      %617 = dma.hbm_to_vmem [thread:$0]  %s613, 32, %s615, [#allocation60]
    $region217: #{resnet_forward.1} parent=1 // pred_fallthru
      _
    // Predicated region
    $region218: #{resnet_forward.1} parent=1 // pred_check
      _
    $region219: #{resnet_forward.1} parent=1 // pred_check_branch
      %619 = sbr.rel (0) target = $region221
    $region220: #{resnet_forward.1} parent=1 // pred_region
      %621 = dma.done [#allocation3], 192
    $region221: #{resnet_forward.1} parent=1 // pred_fallthru
      _
    // Predicated region
    $region222: #{resnet_forward.1} parent=1 // pred_check
      _
    $region223: #{resnet_forward.1} parent=1 // pred_check_branch
      %623 = sbr.rel (0) target = $region225
    $region224: #{resnet_forward.1} parent=1 // pred_region
      %625 = dma.done [#allocation6], 16
    $region225: #{resnet_forward.1} parent=1 // pred_fallthru
      _
    // Predicated region
    $region226: #{resnet_forward.1} parent=1 // pred_check
      _
    $region227: #{resnet_forward.1} parent=1 // pred_check_branch
      %627 = sbr.rel (0) target = $region229
    $region228: #{resnet_forward.1} parent=1 // pred_region
      %629 = dma.done [#allocation6], 16
    $region229: #{resnet_forward.1} parent=1 // pred_fallthru
      _
    // Predicated region
    $region230: #{resnet_forward.1} parent=1 // pred_check
      _
    $region231: #{resnet_forward.1} parent=1 // pred_check_branch
      %631 = sbr.rel (0) target = $region233
    $region232: #{resnet_forward.1} parent=1 // pred_region
      %633 = dma.done [#allocation9], 16
    $region233: #{resnet_forward.1} parent=1 // pred_fallthru
      _
    // Predicated region
    $region234: #{resnet_forward.1} parent=1 // pred_check
      _
    $region235: #{resnet_forward.1} parent=1 // pred_check_branch
      %635 = sbr.rel (0) target = $region237
    $region236: #{resnet_forward.1} parent=1 // pred_region
      %637 = dma.done [#allocation9], 16
    $region237: #{resnet_forward.1} parent=1 // pred_fallthru
      _
    // Predicated region
    $region238: #{resnet_forward.1} parent=1 // pred_check
      _
    $region239: #{resnet_forward.1} parent=1 // pred_check_branch
      %639 = sbr.rel (0) target = $region241
    $region240: #{resnet_forward.1} parent=1 // pred_region
      %641 = dma.done [#allocation12], 3072
    $region241: #{resnet_forward.1} parent=1 // pred_fallthru
      _
    // Predicated region
    $region242: #{resnet_forward.1} parent=1 // pred_check
      _
    $region243: #{resnet_forward.1} parent=1 // pred_check_branch
      %643 = sbr.rel (0) target = $region245
    $region244: #{resnet_forward.1} parent=1 // pred_region
      %645 = dma.done [#allocation12], 16
    $region245: #{resnet_forward.1} parent=1 // pred_fallthru
      _
    // Predicated region
    $region246: #{resnet_forward.1} parent=1 // pred_check
      _
    $region247: #{resnet_forward.1} parent=1 // pred_check_branch
      %647 = sbr.rel (0) target = $region249
    $region248: #{resnet_forward.1} parent=1 // pred_region
      %649 = dma.done [#allocation15], 16
    $region249: #{resnet_forward.1} parent=1 // pred_fallthru
      _
    // Predicated region
    $region250: #{resnet_forward.1} parent=1 // pred_check
      _
    $region251: #{resnet_forward.1} parent=1 // pred_check_branch
      %651 = sbr.rel (0) target = $region253
    $region252: #{resnet_forward.1} parent=1 // pred_region
      %653 = dma.done [#allocation15], 16
    $region253: #{resnet_forward.1} parent=1 // pred_fallthru
      _
    // Predicated region
    $region254: #{resnet_forward.1} parent=1 // pred_check
      _
    $region255: #{resnet_forward.1} parent=1 // pred_check_branch
      %655 = sbr.rel (0) target = $region257
    $region256: #{resnet_forward.1} parent=1 // pred_region
      %657 = dma.done [#allocation18], 3072
    $region257: #{resnet_forward.1} parent=1 // pred_fallthru
      _
    // Predicated region
    $region258: #{resnet_forward.1} parent=1 // pred_check
      _
    $region259: #{resnet_forward.1} parent=1 // pred_check_branch
      %659 = sbr.rel (0) target = $region261
    $region260: #{resnet_forward.1} parent=1 // pred_region
      %661 = dma.done [#allocation18], 16
    $region261: #{resnet_forward.1} parent=1 // pred_fallthru
      _
    // Predicated region
    $region262: #{resnet_forward.1} parent=1 // pred_check
      _
    $region263: #{resnet_forward.1} parent=1 // pred_check_branch
      %663 = sbr.rel (0) target = $region265
    $region264: #{resnet_forward.1} parent=1 // pred_region
      %665 = dma.done [#allocation21], 64
    $region265: #{resnet_forward.1} parent=1 // pred_fallthru
      _
    // Predicated region
    $region266: #{resnet_forward.1} parent=1 // pred_check
      _
    $region267: #{resnet_forward.1} parent=1 // pred_check_branch
      %667 = sbr.rel (0) target = $region269
    $region268: #{resnet_forward.1} parent=1 // pred_region
      %669 = dma.done [#allocation21], 64
    $region269: #{resnet_forward.1} parent=1 // pred_fallthru
      _
    // Predicated region
    $region270: #{resnet_forward.1} parent=1 // pred_check
      _
    $region271: #{resnet_forward.1} parent=1 // pred_check_branch
      %671 = sbr.rel (0) target = $region273
    $region272: #{resnet_forward.1} parent=1 // pred_region
      %673 = dma.done [#allocation24], 512
    $region273: #{resnet_forward.1} parent=1 // pred_fallthru
      _
    // Predicated region
    $region274: #{resnet_forward.1} parent=1 // pred_check
      _
    $region275: #{resnet_forward.1} parent=1 // pred_check_branch
      %675 = sbr.rel (0) target = $region277
    $region276: #{resnet_forward.1} parent=1 // pred_region
      %677 = dma.done [#allocation24], 16
    $region277: #{resnet_forward.1} parent=1 // pred_fallthru
      _
    // Predicated region
    $region278: #{resnet_forward.1} parent=1 // pred_check
      _
    $region279: #{resnet_forward.1} parent=1 // pred_check_branch
      %679 = sbr.rel (0) target = $region281
    $region280: #{resnet_forward.1} parent=1 // pred_region
      %681 = dma.done [#allocation27], 16
    $region281: #{resnet_forward.1} parent=1 // pred_fallthru
      _
    // Predicated region
    $region282: #{resnet_forward.1} parent=1 // pred_check
      _
    $region283: #{resnet_forward.1} parent=1 // pred_check_branch
      %683 = sbr.rel (0) target = $region285
    $region284: #{resnet_forward.1} parent=1 // pred_region
      %685 = dma.done [#allocation27], 3072
    $region285: #{resnet_forward.1} parent=1 // pred_fallthru
      _
    // Predicated region
    $region286: #{resnet_forward.1} parent=1 // pred_check
      _
    $region287: #{resnet_forward.1} parent=1 // pred_check_branch
      %687 = sbr.rel (0) target = $region289
    $region288: #{resnet_forward.1} parent=1 // pred_region
      %689 = dma.done [#allocation30], 16
    $region289: #{resnet_forward.1} parent=1 // pred_fallthru
      _
    // Predicated region
    $region290: #{resnet_forward.1} parent=1 // pred_check
      _
    $region291: #{resnet_forward.1} parent=1 // pred_check_branch
      %691 = sbr.rel (0) target = $region293
    $region292: #{resnet_forward.1} parent=1 // pred_region
      %693 = dma.done [#allocation30], 16
    $region293: #{resnet_forward.1} parent=1 // pred_fallthru
      _
    // Predicated region
    $region294: #{resnet_forward.1} parent=1 // pred_check
      _
    $region295: #{resnet_forward.1} parent=1 // pred_check_branch
      %695 = sbr.rel (0) target = $region297
    $region296: #{resnet_forward.1} parent=1 // pred_region
      %697 = dma.done [#allocation33], 16
    $region297: #{resnet_forward.1} parent=1 // pred_fallthru
      _
    // Predicated region
    $region298: #{resnet_forward.1} parent=1 // pred_check
      _
    $region299: #{resnet_forward.1} parent=1 // pred_check_branch
      %699 = sbr.rel (0) target = $region301
    $region300: #{resnet_forward.1} parent=1 // pred_region
      %701 = dma.done [#allocation33], 16
    $region301: #{resnet_forward.1} parent=1 // pred_fallthru
      _
    // Predicated region
    $region302: #{resnet_forward.1} parent=1 // pred_check
      _
    $region303: #{resnet_forward.1} parent=1 // pred_check_branch
      %703 = sbr.rel (0) target = $region305
    $region304: #{resnet_forward.1} parent=1 // pred_region
      %705 = dma.done [#allocation36], 128
    $region305: #{resnet_forward.1} parent=1 // pred_fallthru
      _
    // Predicated region
    $region306: #{resnet_forward.1} parent=1 // pred_check
      _
    $region307: #{resnet_forward.1} parent=1 // pred_check_branch
      %707 = sbr.rel (0) target = $region309
    $region308: #{resnet_forward.1} parent=1 // pred_region
      %709 = dma.done [#allocation36], 128
    $region309: #{resnet_forward.1} parent=1 // pred_fallthru
      _
    // Predicated region
    $region310: #{resnet_forward.1} parent=1 // pred_check
      _
    $region311: #{resnet_forward.1} parent=1 // pred_check_branch
      %711 = sbr.rel (0) target = $region313
    $region312: #{resnet_forward.1} parent=1 // pred_region
      %713 = dma.done [#allocation39], 1024
    $region313: #{resnet_forward.1} parent=1 // pred_fallthru
      _
    // Predicated region
    $region314: #{resnet_forward.1} parent=1 // pred_check
      _
    $region315: #{resnet_forward.1} parent=1 // pred_check_branch
      %715 = sbr.rel (0) target = $region317
    $region316: #{resnet_forward.1} parent=1 // pred_region
      %717 = dma.done [#allocation39], 1024
    $region317: #{resnet_forward.1} parent=1 // pred_fallthru
      _
    // Predicated region
    $region318: #{resnet_forward.1} parent=1 // pred_check
      _
    $region319: #{resnet_forward.1} parent=1 // pred_check_branch
      %719 = sbr.rel (0) target = $region321
    $region320: #{resnet_forward.1} parent=1 // pred_region
      %721 = dma.done [#allocation42], 16
    $region321: #{resnet_forward.1} parent=1 // pred_fallthru
      _
    // Predicated region
    $region322: #{resnet_forward.1} parent=1 // pred_check
      _
    $region323: #{resnet_forward.1} parent=1 // pred_check_branch
      %723 = sbr.rel (0) target = $region325
    $region324: #{resnet_forward.1} parent=1 // pred_region
      %725 = dma.done [#allocation42], 16
    $region325: #{resnet_forward.1} parent=1 // pred_fallthru
      _
    // Predicated region
    $region326: #{resnet_forward.1} parent=1 // pred_check
      _
    $region327: #{resnet_forward.1} parent=1 // pred_check_branch
      %727 = sbr.rel (0) target = $region329
    $region328: #{resnet_forward.1} parent=1 // pred_region
      %729 = dma.done [#allocation45], 16
    $region329: #{resnet_forward.1} parent=1 // pred_fallthru
      _
    // Predicated region
    $region330: #{resnet_forward.1} parent=1 // pred_check
      _
    $region331: #{resnet_forward.1} parent=1 // pred_check_branch
      %731 = sbr.rel (0) target = $region333
    $region332: #{resnet_forward.1} parent=1 // pred_region
      %733 = dma.done [#allocation45], 32
    $region333: #{resnet_forward.1} parent=1 // pred_fallthru
      _
    // Predicated region
    $region334: #{resnet_forward.1} parent=1 // pred_check
      _
    $region335: #{resnet_forward.1} parent=1 // pred_check_branch
      %735 = sbr.rel (0) target = $region337
    $region336: #{resnet_forward.1} parent=1 // pred_region
      %737 = dma.done [#allocation48], 32
    $region337: #{resnet_forward.1} parent=1 // pred_fallthru
      _
    // Predicated region
    $region338: #{resnet_forward.1} parent=1 // pred_check
      _
    $region339: #{resnet_forward.1} parent=1 // pred_check_branch
      %739 = sbr.rel (0) target = $region341
    $region340: #{resnet_forward.1} parent=1 // pred_region
      %741 = dma.done [#allocation48], 32
    $region341: #{resnet_forward.1} parent=1 // pred_fallthru
      _
    // Predicated region
    $region342: #{resnet_forward.1} parent=1 // pred_check
      _
    $region343: #{resnet_forward.1} parent=1 // pred_check_branch
      %743 = sbr.rel (0) target = $region345
    $region344: #{resnet_forward.1} parent=1 // pred_region
      %745 = dma.done [#allocation51], 24576
    $region345: #{resnet_forward.1} parent=1 // pred_fallthru
      _
    // Predicated region
    $region346: #{resnet_forward.1} parent=1 // pred_check
      _
    $region347: #{resnet_forward.1} parent=1 // pred_check_branch
      %747 = sbr.rel (0) target = $region349
    $region348: #{resnet_forward.1} parent=1 // pred_region
      %749 = dma.done [#allocation51], 32
    $region349: #{resnet_forward.1} parent=1 // pred_fallthru
      _
    // Predicated region
    $region350: #{resnet_forward.1} parent=1 // pred_check
      _
    $region351: #{resnet_forward.1} parent=1 // pred_check_branch
      %751 = sbr.rel (0) target = $region353
    $region352: #{resnet_forward.1} parent=1 // pred_region
      %753 = dma.done [#allocation54], 512
    $region353: #{resnet_forward.1} parent=1 // pred_fallthru
      _
    // Predicated region
    $region354: #{resnet_forward.1} parent=1 // pred_check
      _
    $region355: #{resnet_forward.1} parent=1 // pred_check_branch
      %755 = sbr.rel (0) target = $region357
    $region356: #{resnet_forward.1} parent=1 // pred_region
      %757 = dma.done [#allocation54], 4096
    $region357: #{resnet_forward.1} parent=1 // pred_fallthru
      _
    // Predicated region
    $region358: #{resnet_forward.1} parent=1 // pred_check
      _
    $region359: #{resnet_forward.1} parent=1 // pred_check_branch
      %759 = sbr.rel (0) target = $region361
    $region360: #{resnet_forward.1} parent=1 // pred_region
      %761 = dma.done [#allocation57], 4096
    $region361: #{resnet_forward.1} parent=1 // pred_fallthru
      _
    // Predicated region
    $region362: #{resnet_forward.1} parent=1 // pred_check
      _
    $region363: #{resnet_forward.1} parent=1 // pred_check_branch
      %763 = sbr.rel (0) target = $region365
    $region364: #{resnet_forward.1} parent=1 // pred_region
      %765 = dma.done [#allocation57], 32
    $region365: #{resnet_forward.1} parent=1 // pred_fallthru
      _
    // Predicated region
    $region366: #{resnet_forward.1} parent=1 // pred_check
      _
    $region367: #{resnet_forward.1} parent=1 // pred_check_branch
      %767 = sbr.rel (0) target = $region369
    $region368: #{resnet_forward.1} parent=1 // pred_region
      %769 = dma.done [#allocation60], 8192
    $region369: #{resnet_forward.1} parent=1 // pred_fallthru
      _
    // Predicated region
    $region370: #{resnet_forward.1} parent=1 // pred_check
      _
    $region371: #{resnet_forward.1} parent=1 // pred_check_branch
      %771 = sbr.rel (0) target = $region373
    $region372: #{resnet_forward.1} parent=1 // pred_region
      %773 = dma.done [#allocation60], 32
    $region373: #{resnet_forward.1} parent=1 // pred_fallthru
      _
    %v774 = vld [vmem:[%s3] sm:$0xff]
    %v775 = vld [vmem:[%s3 + $0x8] sm:$0xff]
    %v776 = vld [vmem:[%s3 + $0x10] sm:$0xff]
    %v777 = vld [vmem:[%s3 + $0x18] sm:$0xff]
    %v778 = vld [vmem:[%s5] sm:$0xff]
    %v779 = vld [vmem:[%s5 + $0x8] sm:$0xff]
    %v780 = vld [vmem:[%s5 + $0x10] sm:$0xff]
    %v781 = vld [vmem:[%s5 + $0x18] sm:$0xff]
    %v782 = vld [vmem:[%s7] sm:$0x3]
    %v783 = vld [vmem:[%s9] sm:$0xff]
    %v784 = vld [vmem:[%s9 + $0x8] sm:$0xff]
    %v785 = vld [vmem:[%s9 + $0x10] sm:$0xff]
    %v786 = vld [vmem:[%s9 + $0x18] sm:$0xff]
    %v787 = vld [vmem:[%s1] sm:$0xff]
    %v788 = vld [vmem:[%s1 + $0x8] sm:$0xff]
    %v789 = vld [vmem:[%s1 + $0x10] sm:$0xff]
    %v790 = vld [vmem:[%s1 + $0x18] sm:$0xff]
    %vm791 = vcmask 261120
    %v793 = vsel %vm791, %v774, 0
    %v796 = vsel %vm791, %v775, 0
    %v799 = vsel %vm791, %v776, 0
    %v802 = vsel %vm791, %v777, 0
    %804 = vmatpush.msra.mxu0 0.0
    %805 = vmatpush.msra.mxu0 0.0
    %806 = vmatpush.msra.mxu0 0.0
    %807 = vmatpush.msra.mxu0 0.0
    %808 = vmatpush.msra.mxu0 0.0
    %809 = vmatpush.msra.mxu0 0.0
    %810 = vmatpush.msra.mxu0 0.0
    %811 = vmatpush.msra.mxu0 0.0
    %812 = vmatpush.msra.mxu0 0.0
    %813 = vmatpush.msra.mxu0 0.0
    %814 = vmatpush.msra.mxu0 0.0
    %815 = vmatpush.msra.mxu0 0.0
    %816 = vmatpush.msra.mxu0 %v790
    %817 = vmatpush.msra.mxu0 %v789
    %818 = vmatpush.msra.mxu0 %v788
    %819 = vmatpush.msra.mxu0 %v787
    %820 = vmatmul.f32.gmra.mxu0 %v793
    %v821 = vpop.f32.mrf.mxu0
    %v822 = vadd.f32 0.0, %v821
    %823 = vmatmul.f32.gmra.mxu0 %v796
    %v824 = vpop.f32.mrf.mxu0
    %v825 = vadd.f32 0.0, %v824
    %826 = vmatmul.f32.gmra.mxu0 %v799
    %v827 = vpop.f32.mrf.mxu0
    %v828 = vadd.f32 0.0, %v827
    %829 = vmatmul.f32.gmra.mxu0 %v802
    %v830 = vpop.f32.mrf.mxu0
    %v831 = vadd.f32 0.0, %v830
    %832 = vdwg.mxu0
    %v834 = vsel %vm791, %v778, 0
    %v837 = vsel %vm791, %v779, 0
    %v840 = vsel %vm791, %v780, 0
    %v843 = vsel %vm791, %v781, 0
    %845 = vmatpush.msra.mxu0 0.0
    %846 = vmatpush.msra.mxu0 0.0
    %847 = vmatpush.msra.mxu0 0.0
    %848 = vmatpush.msra.mxu0 0.0
    %849 = vmatpush.msra.mxu0 0.0
    %850 = vmatpush.msra.mxu0 0.0
    %851 = vmatpush.msra.mxu0 0.0
    %852 = vmatpush.msra.mxu0 0.0
    %853 = vmatpush.msra.mxu0 0.0
    %854 = vmatpush.msra.mxu0 0.0
    %855 = vmatpush.msra.mxu0 0.0
    %856 = vmatpush.msra.mxu0 0.0
    %857 = vmatpush.msra.mxu0 %v790
    %858 = vmatpush.msra.mxu0 %v789
    %859 = vmatpush.msra.mxu0 %v788
    %860 = vmatpush.msra.mxu0 %v787
    %861 = vmatmul.f32.gmra.mxu0 %v834
    %v862 = vpop.f32.mrf.mxu0
    %v863 = vadd.f32 0.0, %v862
    %864 = vmatmul.f32.gmra.mxu0 %v837
    %v865 = vpop.f32.mrf.mxu0
    %v866 = vadd.f32 0.0, %v865
    %867 = vmatmul.f32.gmra.mxu0 %v840
    %v868 = vpop.f32.mrf.mxu0
    %v869 = vadd.f32 0.0, %v868
    %870 = vmatmul.f32.gmra.mxu0 %v843
    %v871 = vpop.f32.mrf.mxu0
    %v872 = vadd.f32 0.0, %v871
    %873 = vdwg.mxu0
    %v874 = vld [vmem:[#allocation2] sm:$0xf]
    %s875 = scalar_lea.vmem [#allocation2], 4
    %v876 = vld [vmem:[%s875] sm:$0xf]
    %vm877 = vcmask 31744
    %v879 = vsel %vm877, %v787, 0
    %v882 = vsel %vm877, %v788, 0
    %v885 = vsel %vm877, %v789, 0
    %v888 = vsel %vm877, %v790, 0
    %vm890 = vcmask 1043456
    %v892 = vsel %vm890, %v876, 0
    %894 = vmatpush.msra.mxu0 0.0
    %895 = vmatpush.msra.mxu0 0.0
    %896 = vmatpush.msra.mxu0 0.0
    %897 = vmatpush.msra.mxu0 0.0
    %898 = vmatpush.msra.mxu0 0.0
    %899 = vmatpush.msra.mxu0 0.0
    %900 = vmatpush.msra.mxu0 0.0
    %901 = vmatpush.msra.mxu0 0.0
    %902 = vmatpush.msra.mxu0 0.0
    %903 = vmatpush.msra.mxu0 0.0
    %904 = vmatpush.msra.mxu0 0.0
    %905 = vmatpush.msra.mxu0 0.0
    %906 = vmatpush.msra.mxu0 0.0
    %907 = vmatpush.msra.mxu0 0.0
    %908 = vmatpush.msra.mxu0 0.0
    %909 = vmatpush.msra.mxu0 %v892
    %910 = vmatmul.f32.gmra.mxu0 %v879
    %v911 = vpop.f32.mrf.mxu0
    %v912 = vadd.f32 0.0, %v911
    %913 = vmatmul.f32.gmra.mxu0 %v882
    %v914 = vpop.f32.mrf.mxu0
    %v915 = vadd.f32 0.0, %v914
    %916 = vmatmul.f32.gmra.mxu0 %v885
    %v917 = vpop.f32.mrf.mxu0
    %v918 = vadd.f32 0.0, %v917
    %919 = vmatmul.f32.gmra.mxu0 %v888
    %v920 = vpop.f32.mrf.mxu0
    %v921 = vadd.f32 0.0, %v920
    %922 = vdwg.mxu0
    %v924 = vsel %vm877, %v822, 0
    %v927 = vsel %vm877, %v825, 0
    %v930 = vsel %vm877, %v828, 0
    %v933 = vsel %vm877, %v831, 0
    %v936 = vsel %vm890, %v874, 0
    %938 = vmatpush.msra.mxu0 0.0
    %939 = vmatpush.msra.mxu0 0.0
    %940 = vmatpush.msra.mxu0 0.0
    %941 = vmatpush.msra.mxu0 0.0
    %942 = vmatpush.msra.mxu0 0.0
    %943 = vmatpush.msra.mxu0 0.0
    %944 = vmatpush.msra.mxu0 0.0
    %945 = vmatpush.msra.mxu0 0.0
    %946 = vmatpush.msra.mxu0 0.0
    %947 = vmatpush.msra.mxu0 0.0
    %948 = vmatpush.msra.mxu0 0.0
    %949 = vmatpush.msra.mxu0 0.0
    %950 = vmatpush.msra.mxu0 0.0
    %951 = vmatpush.msra.mxu0 0.0
    %952 = vmatpush.msra.mxu0 0.0
    %953 = vmatpush.msra.mxu0 %v936
    %954 = vmatmul.f32.gmra.mxu0 %v924
    %v955 = vpop.f32.mrf.mxu0
    %v956 = vadd.f32 %v912, %v955
    %957 = vmatmul.f32.gmra.mxu0 %v927
    %v958 = vpop.f32.mrf.mxu0
    %v959 = vadd.f32 %v915, %v958
    %960 = vmatmul.f32.gmra.mxu0 %v930
    %v961 = vpop.f32.mrf.mxu0
    %v962 = vadd.f32 %v918, %v961
    %963 = vmatmul.f32.gmra.mxu0 %v933
    %v964 = vpop.f32.mrf.mxu0
    %v965 = vadd.f32 %v921, %v964
    %966 = vdwg.mxu0
    %s967 = scalar_lea.vmem [#allocation2], 8
    %v968 = vld [vmem:[%s967] sm:$0xf]
    %v970 = vsel %vm877, %v863, 0
    %v973 = vsel %vm877, %v866, 0
    %v976 = vsel %vm877, %v869, 0
    %v979 = vsel %vm877, %v872, 0
    %v982 = vsel %vm890, %v968, 0
    %984 = vmatpush.msra.mxu0 0.0
    %985 = vmatpush.msra.mxu0 0.0
    %986 = vmatpush.msra.mxu0 0.0
    %987 = vmatpush.msra.mxu0 0.0
    %988 = vmatpush.msra.mxu0 0.0
    %989 = vmatpush.msra.mxu0 0.0
    %990 = vmatpush.msra.mxu0 0.0
    %991 = vmatpush.msra.mxu0 0.0
    %992 = vmatpush.msra.mxu0 0.0
    %993 = vmatpush.msra.mxu0 0.0
    %994 = vmatpush.msra.mxu0 0.0
    %995 = vmatpush.msra.mxu0 0.0
    %996 = vmatpush.msra.mxu0 0.0
    %997 = vmatpush.msra.mxu0 0.0
    %998 = vmatpush.msra.mxu0 0.0
    %999 = vmatpush.msra.mxu0 %v982
    %1000 = vmatmul.f32.gmra.mxu0 %v970
    %v1001 = vpop.f32.mrf.mxu0
    %v1002 = vadd.f32 0.0, %v1001
    %1003 = vmatmul.f32.gmra.mxu0 %v973
    %v1004 = vpop.f32.mrf.mxu0
    %v1005 = vadd.f32 0.0, %v1004
    %1006 = vmatmul.f32.gmra.mxu0 %v976
    %v1007 = vpop.f32.mrf.mxu0
    %v1008 = vadd.f32 0.0, %v1007
    %1009 = vmatmul.f32.gmra.mxu0 %v979
    %v1010 = vpop.f32.mrf.mxu0
    %v1011 = vadd.f32 0.0, %v1010
    %1012 = vdwg.mxu0
    %v1013 = vadd.f32 %v956, %v1002
    %v1014 = vadd.f32 %v959, %v1005
    %v1015 = vadd.f32 %v962, %v1008
    %v1016 = vadd.f32 %v965, %v1011
    %v1017 = vld [vmem:[%s13] sm:$0x1]
    %v1019 = vperm.slane %v1017, 0
    %v1021 = vadd.f32 %v1013, %v1019
    %v1022 = vadd.f32 %v1014, %v1019
    %v1023 = vadd.f32 %v1015, %v1019
    %v1024 = vadd.f32 %v1016, %v1019
    %v1026 = vsel %vm791, 1.0, 0
    %1028 = vmatpush.msra.mxu0 0.0
    %1029 = vmatpush.msra.mxu0 0.0
    %1030 = vmatpush.msra.mxu0 0.0
    %1031 = vmatpush.msra.mxu0 0.0
    %1032 = vmatpush.msra.mxu0 0.0
    %1033 = vmatpush.msra.mxu0 0.0
    %1034 = vmatpush.msra.mxu0 0.0
    %1035 = vmatpush.msra.mxu0 0.0
    %1036 = vmatpush.msra.mxu0 0.0
    %1037 = vmatpush.msra.mxu0 0.0
    %1038 = vmatpush.msra.mxu0 0.0
    %1039 = vmatpush.msra.mxu0 0.0
    %1040 = vmatpush.msra.mxu0 %v1024
    %1041 = vmatpush.msra.mxu0 %v1023
    %1042 = vmatpush.msra.mxu0 %v1022
    %1043 = vmatpush.msra.mxu0 %v1021
    %1044 = vmatmul.f32.gmra.mxu0 %v1026
    %v1045 = vpop.f32.mrf.mxu0
    %v1046 = vadd.f32 0.0, %v1045
    %1047 = vdwg.mxu0
    %v1048 = vmul.f32 %v1021, %v1021
    %v1049 = vmul.f32 %v1022, %v1022
    %v1050 = vmul.f32 %v1023, %v1023
    %v1051 = vmul.f32 %v1024, %v1024
    %1052 = vmatpush.msra.mxu0 0.0
    %1053 = vmatpush.msra.mxu0 0.0
    %1054 = vmatpush.msra.mxu0 0.0
    %1055 = vmatpush.msra.mxu0 0.0
    %1056 = vmatpush.msra.mxu0 0.0
    %1057 = vmatpush.msra.mxu0 0.0
    %1058 = vmatpush.msra.mxu0 0.0
    %1059 = vmatpush.msra.mxu0 0.0
    %1060 = vmatpush.msra.mxu0 0.0
    %1061 = vmatpush.msra.mxu0 0.0
    %1062 = vmatpush.msra.mxu0 0.0
    %1063 = vmatpush.msra.mxu0 0.0
    %1064 = vmatpush.msra.mxu0 %v1051
    %1065 = vmatpush.msra.mxu0 %v1050
    %1066 = vmatpush.msra.mxu0 %v1049
    %1067 = vmatpush.msra.mxu0 %v1048
    %1068 = vmatmul.f32.gmra.mxu0 %v1026
    %v1069 = vpop.f32.mrf.mxu0
    %v1070 = vadd.f32 0.0, %v1069
    %1071 = vdwg.mxu0
    %v1072 = vmul.f32 %v1046, 0.03125
    %v1073 = vmul.f32 %v1070, 0.03125
    %v1074 = vmul.f32 %v1072, %v1072
    %v1075 = vsub.f32 %v1073, %v1074
    %v1076 = vmax.f32 %v1075, 0.0
    %v1077 = vperm.slane %v1072, 0
    %v1078 = vsub.f32 %v1021, %v1077
    %v1079 = vsub.f32 %v1022, %v1077
    %v1080 = vsub.f32 %v1023, %v1077
    %v1081 = vsub.f32 %v1024, %v1077
    %v1082 = vadd.f32 %v1076, 1e-05
    %v1083 = vrsqrt.pop %v1082
    %v1084 = vmul.f32 %v1083, %v1082
    %v1085 = vmul.f32 %v1084, %v1083
    %v1086 = vmul.f32 0.5, %v1085
    %v1087 = vsub.f32 1.5, %v1086
    %v1088 = vmul.f32 %v1083, %v1087
    %vm1089 = vweird.f32 %v1082
    %vm1090 = vweird.f32 %v1083
    %vm1091 = vmor %vm1089, %vm1090
    %v1092 = vsel %vm1091, %v1083, %v1088
    %v1093 = vperm.slane %v1092, 0
    %v1094 = vmul.f32 %v1078, %v1093
    %v1095 = vmul.f32 %v1079, %v1093
    %v1096 = vmul.f32 %v1080, %v1093
    %v1097 = vmul.f32 %v1081, %v1093
    %v1098 = vld [vmem:[#allocation5] sm:$0x1]
    %v1100 = vperm.slane %v1098, 0
    %v1102 = vmul.f32 %v1094, %v1100
    %v1103 = vmul.f32 %v1095, %v1100
    %v1104 = vmul.f32 %v1096, %v1100
    %v1105 = vmul.f32 %v1097, %v1100
    %v1106 = vld [vmem:[#allocation7] sm:$0x1]
    %v1108 = vperm.slane %v1106, 0
    %v1110 = vadd.f32 %v1102, %v1108
    %v1111 = vadd.f32 %v1103, %v1108
    %v1112 = vadd.f32 %v1104, %v1108
    %v1113 = vadd.f32 %v1105, %v1108
    %v1114 = vmax.f32 %v1110, 0.0
    %v1115 = vmax.f32 %v1111, 0.0
    %v1116 = vmax.f32 %v1112, 0.0
    %v1117 = vmax.f32 %v1113, 0.0
    %1118 = vmatpush.msra.mxu0 0.0
    %1119 = vmatpush.msra.mxu0 0.0
    %1120 = vmatpush.msra.mxu0 0.0
    %1121 = vmatpush.msra.mxu0 0.0
    %1122 = vmatpush.msra.mxu0 0.0
    %1123 = vmatpush.msra.mxu0 0.0
    %1124 = vmatpush.msra.mxu0 0.0
    %1125 = vmatpush.msra.mxu0 0.0
    %1126 = vmatpush.msra.mxu0 0.0
    %1127 = vmatpush.msra.mxu0 0.0
    %1128 = vmatpush.msra.mxu0 0.0
    %1129 = vmatpush.msra.mxu0 0.0
    %1130 = vmatpush.msra.mxu0 %v1117
    %1131 = vmatpush.msra.mxu0 %v1116
    %1132 = vmatpush.msra.mxu0 %v1115
    %1133 = vmatpush.msra.mxu0 %v1114
    %1134 = vmatmul.f32.gmra.mxu0 %v1026
    %v1135 = vpop.f32.mrf.mxu0
    %v1136 = vadd.f32 0.0, %v1135
    %1137 = vdwg.mxu0
    %v1138 = vmul.f32 %v1114, %v1114
    %v1139 = vmul.f32 %v1115, %v1115
    %v1140 = vmul.f32 %v1116, %v1116
    %v1141 = vmul.f32 %v1117, %v1117
    %1142 = vmatpush.msra.mxu0 0.0
    %1143 = vmatpush.msra.mxu0 0.0
    %1144 = vmatpush.msra.mxu0 0.0
    %1145 = vmatpush.msra.mxu0 0.0
    %1146 = vmatpush.msra.mxu0 0.0
    %1147 = vmatpush.msra.mxu0 0.0
    %1148 = vmatpush.msra.mxu0 0.0
    %1149 = vmatpush.msra.mxu0 0.0
    %1150 = vmatpush.msra.mxu0 0.0
    %1151 = vmatpush.msra.mxu0 0.0
    %1152 = vmatpush.msra.mxu0 0.0
    %1153 = vmatpush.msra.mxu0 0.0
    %1154 = vmatpush.msra.mxu0 %v1141
    %1155 = vmatpush.msra.mxu0 %v1140
    %1156 = vmatpush.msra.mxu0 %v1139
    %1157 = vmatpush.msra.mxu0 %v1138
    %1158 = vmatmul.f32.gmra.mxu0 %v1026
    %v1159 = vpop.f32.mrf.mxu0
    %v1160 = vadd.f32 0.0, %v1159
    %1161 = vdwg.mxu0
    %v1162 = vmul.f32 %v1136, 0.03125
    %v1163 = vmul.f32 %v1160, 0.03125
    %v1164 = vmul.f32 %v1162, %v1162
    %v1165 = vsub.f32 %v1163, %v1164
    %v1166 = vmax.f32 %v1165, 0.0
    %v1167 = vperm.slane %v1162, 0
    %v1168 = vsub.f32 %v1114, %v1167
    %v1169 = vsub.f32 %v1115, %v1167
    %v1170 = vsub.f32 %v1116, %v1167
    %v1171 = vsub.f32 %v1117, %v1167
    %v1172 = vadd.f32 %v1166, 1e-05
    %v1173 = vrsqrt.pop %v1172
    %v1174 = vmul.f32 %v1173, %v1172
    %v1175 = vmul.f32 %v1174, %v1173
    %v1176 = vmul.f32 0.5, %v1175
    %v1177 = vsub.f32 1.5, %v1176
    %v1178 = vmul.f32 %v1173, %v1177
    %vm1179 = vweird.f32 %v1172
    %vm1180 = vweird.f32 %v1173
    %vm1181 = vmor %vm1179, %vm1180
    %v1182 = vsel %vm1181, %v1173, %v1178
    %v1183 = vperm.slane %v1182, 0
    %v1184 = vmul.f32 %v1168, %v1183
    %v1185 = vmul.f32 %v1169, %v1183
    %v1186 = vmul.f32 %v1170, %v1183
    %v1187 = vmul.f32 %v1171, %v1183
    %v1188 = vld [vmem:[#allocation8] sm:$0x1]
    %v1190 = vperm.slane %v1188, 0
    %v1192 = vmul.f32 %v1184, %v1190
    %v1193 = vmul.f32 %v1185, %v1190
    %v1194 = vmul.f32 %v1186, %v1190
    %v1195 = vmul.f32 %v1187, %v1190
    %v1196 = vld [vmem:[#allocation10] sm:$0x1]
    %v1198 = vperm.slane %v1196, 0
    %v1200 = vadd.f32 %v1192, %v1198
    %v1201 = vadd.f32 %v1193, %v1198
    %v1202 = vadd.f32 %v1194, %v1198
    %v1203 = vadd.f32 %v1195, %v1198
    %v1204 = vmax.f32 %v1200, 0.0
    %v1205 = vmax.f32 %v1201, 0.0
    %v1206 = vmax.f32 %v1202, 0.0
    %v1207 = vmax.f32 %v1203, 0.0
    %1208 = vmatpush.msra.mxu0 0.0
    %1209 = vmatpush.msra.mxu0 0.0
    %1210 = vmatpush.msra.mxu0 0.0
    %1211 = vmatpush.msra.mxu0 0.0
    %1212 = vmatpush.msra.mxu0 0.0
    %1213 = vmatpush.msra.mxu0 0.0
    %1214 = vmatpush.msra.mxu0 0.0
    %1215 = vmatpush.msra.mxu0 0.0
    %1216 = vmatpush.msra.mxu0 0.0
    %1217 = vmatpush.msra.mxu0 0.0
    %1218 = vmatpush.msra.mxu0 0.0
    %1219 = vmatpush.msra.mxu0 0.0
    %1220 = vmatpush.msra.mxu0 %v1207
    %1221 = vmatpush.msra.mxu0 %v1206
    %1222 = vmatpush.msra.mxu0 %v1205
    %1223 = vmatpush.msra.mxu0 %v1204
    %1224 = vmatmul.f32.gmra.mxu0 %v793
    %v1225 = vpop.f32.mrf.mxu0
    %v1226 = vadd.f32 0.0, %v1225
    %1227 = vmatmul.f32.gmra.mxu0 %v796
    %v1228 = vpop.f32.mrf.mxu0
    %v1229 = vadd.f32 0.0, %v1228
    %1230 = vmatmul.f32.gmra.mxu0 %v799
    %v1231 = vpop.f32.mrf.mxu0
    %v1232 = vadd.f32 0.0, %v1231
    %1233 = vmatmul.f32.gmra.mxu0 %v802
    %v1234 = vpop.f32.mrf.mxu0
    %v1235 = vadd.f32 0.0, %v1234
    %1236 = vdwg.mxu0
    %1237 = vmatpush.msra.mxu0 0.0
    %1238 = vmatpush.msra.mxu0 0.0
    %1239 = vmatpush.msra.mxu0 0.0
    %1240 = vmatpush.msra.mxu0 0.0
    %1241 = vmatpush.msra.mxu0 0.0
    %1242 = vmatpush.msra.mxu0 0.0
    %1243 = vmatpush.msra.mxu0 0.0
    %1244 = vmatpush.msra.mxu0 0.0
    %1245 = vmatpush.msra.mxu0 0.0
    %1246 = vmatpush.msra.mxu0 0.0
    %1247 = vmatpush.msra.mxu0 0.0
    %1248 = vmatpush.msra.mxu0 0.0
    %1249 = vmatpush.msra.mxu0 %v1207
    %1250 = vmatpush.msra.mxu0 %v1206
    %1251 = vmatpush.msra.mxu0 %v1205
    %1252 = vmatpush.msra.mxu0 %v1204
    %1253 = vmatmul.f32.gmra.mxu0 %v834
    %v1254 = vpop.f32.mrf.mxu0
    %v1255 = vadd.f32 0.0, %v1254
    %1256 = vmatmul.f32.gmra.mxu0 %v837
    %v1257 = vpop.f32.mrf.mxu0
    %v1258 = vadd.f32 0.0, %v1257
    %1259 = vmatmul.f32.gmra.mxu0 %v840
    %v1260 = vpop.f32.mrf.mxu0
    %v1261 = vadd.f32 0.0, %v1260
    %1262 = vmatmul.f32.gmra.mxu0 %v843
    %v1263 = vpop.f32.mrf.mxu0
    %v1264 = vadd.f32 0.0, %v1263
    %1265 = vdwg.mxu0
    %v1266 = vld [vmem:[#allocation11] sm:$0xff]
    %v1267 = vld [vmem:[#allocation11 + $0x8] sm:$0xff]
    %v1268 = vld [vmem:[#allocation11 + $0x10] sm:$0xff]
    %v1269 = vld [vmem:[#allocation11 + $0x18] sm:$0xff]
    %v1270 = vld [vmem:[#allocation11 + $0x20] sm:$0xff]
    %v1271 = vld [vmem:[#allocation11 + $0x28] sm:$0xff]
    %v1272 = vld [vmem:[#allocation11 + $0x30] sm:$0xff]
    %v1273 = vld [vmem:[#allocation11 + $0x38] sm:$0xff]
    %s1274 = scalar_lea.vmem [#allocation11], 64
    %v1275 = vld [vmem:[%s1274] sm:$0xff]
    %v1276 = vld [vmem:[%s1274 + $0x8] sm:$0xff]
    %v1277 = vld [vmem:[%s1274 + $0x10] sm:$0xff]
    %v1278 = vld [vmem:[%s1274 + $0x18] sm:$0xff]
    %v1279 = vld [vmem:[%s1274 + $0x20] sm:$0xff]
    %v1280 = vld [vmem:[%s1274 + $0x28] sm:$0xff]
    %v1281 = vld [vmem:[%s1274 + $0x30] sm:$0xff]
    %v1282 = vld [vmem:[%s1274 + $0x38] sm:$0xff]
    %vm1283 = vcmask 523264
    %v1285 = vsel %vm1283, %v1204, 0
    %v1288 = vsel %vm1283, %v1205, 0
    %v1291 = vsel %vm1283, %v1206, 0
    %v1294 = vsel %vm1283, %v1207, 0
    %1296 = vmatpush.msra.mxu0 0.0
    %1297 = vmatpush.msra.mxu0 0.0
    %1298 = vmatpush.msra.mxu0 0.0
    %1299 = vmatpush.msra.mxu0 0.0
    %1300 = vmatpush.msra.mxu0 0.0
    %1301 = vmatpush.msra.mxu0 0.0
    %1302 = vmatpush.msra.mxu0 0.0
    %1303 = vmatpush.msra.mxu0 0.0
    %1304 = vmatpush.msra.mxu0 %v1282
    %1305 = vmatpush.msra.mxu0 %v1281
    %1306 = vmatpush.msra.mxu0 %v1280
    %1307 = vmatpush.msra.mxu0 %v1279
    %1308 = vmatpush.msra.mxu0 %v1278
    %1309 = vmatpush.msra.mxu0 %v1277
    %1310 = vmatpush.msra.mxu0 %v1276
    %1311 = vmatpush.msra.mxu0 %v1275
    %1312 = vmatmul.f32.gmra.mxu0 %v1285
    %v1313 = vpop.f32.mrf.mxu0
    %v1314 = vadd.f32 0.0, %v1313
    %1315 = vmatmul.f32.gmra.mxu0 %v1288
    %v1316 = vpop.f32.mrf.mxu0
    %v1317 = vadd.f32 0.0, %v1316
    %1318 = vmatmul.f32.gmra.mxu0 %v1291
    %v1319 = vpop.f32.mrf.mxu0
    %v1320 = vadd.f32 0.0, %v1319
    %1321 = vmatmul.f32.gmra.mxu0 %v1294
    %v1322 = vpop.f32.mrf.mxu0
    %v1323 = vadd.f32 0.0, %v1322
    %1324 = vdwg.mxu0
    %v1326 = vsel %vm1283, %v1226, 0
    %v1329 = vsel %vm1283, %v1229, 0
    %v1332 = vsel %vm1283, %v1232, 0
    %v1335 = vsel %vm1283, %v1235, 0
    %1337 = vmatpush.msra.mxu0 0.0
    %1338 = vmatpush.msra.mxu0 0.0
    %1339 = vmatpush.msra.mxu0 0.0
    %1340 = vmatpush.msra.mxu0 0.0
    %1341 = vmatpush.msra.mxu0 0.0
    %1342 = vmatpush.msra.mxu0 0.0
    %1343 = vmatpush.msra.mxu0 0.0
    %1344 = vmatpush.msra.mxu0 0.0
    %1345 = vmatpush.msra.mxu0 %v1273
    %1346 = vmatpush.msra.mxu0 %v1272
    %1347 = vmatpush.msra.mxu0 %v1271
    %1348 = vmatpush.msra.mxu0 %v1270
    %1349 = vmatpush.msra.mxu0 %v1269
    %1350 = vmatpush.msra.mxu0 %v1268
    %1351 = vmatpush.msra.mxu0 %v1267
    %1352 = vmatpush.msra.mxu0 %v1266
    %1353 = vmatmul.f32.gmra.mxu0 %v1326
    %v1354 = vpop.f32.mrf.mxu0
    %v1355 = vadd.f32 %v1314, %v1354
    %1356 = vmatmul.f32.gmra.mxu0 %v1329
    %v1357 = vpop.f32.mrf.mxu0
    %v1358 = vadd.f32 %v1317, %v1357
    %1359 = vmatmul.f32.gmra.mxu0 %v1332
    %v1360 = vpop.f32.mrf.mxu0
    %v1361 = vadd.f32 %v1320, %v1360
    %1362 = vmatmul.f32.gmra.mxu0 %v1335
    %v1363 = vpop.f32.mrf.mxu0
    %v1364 = vadd.f32 %v1323, %v1363
    %1365 = vdwg.mxu0
    %s1366 = scalar_lea.vmem [#allocation11], 128
    %v1367 = vld [vmem:[%s1366] sm:$0xff]
    %v1368 = vld [vmem:[%s1366 + $0x8] sm:$0xff]
    %v1369 = vld [vmem:[%s1366 + $0x10] sm:$0xff]
    %v1370 = vld [vmem:[%s1366 + $0x18] sm:$0xff]
    %v1371 = vld [vmem:[%s1366 + $0x20] sm:$0xff]
    %v1372 = vld [vmem:[%s1366 + $0x28] sm:$0xff]
    %v1373 = vld [vmem:[%s1366 + $0x30] sm:$0xff]
    %v1374 = vld [vmem:[%s1366 + $0x38] sm:$0xff]
    %v1376 = vsel %vm1283, %v1255, 0
    %v1379 = vsel %vm1283, %v1258, 0
    %v1382 = vsel %vm1283, %v1261, 0
    %v1385 = vsel %vm1283, %v1264, 0
    %1387 = vmatpush.msra.mxu0 0.0
    %1388 = vmatpush.msra.mxu0 0.0
    %1389 = vmatpush.msra.mxu0 0.0
    %1390 = vmatpush.msra.mxu0 0.0
    %1391 = vmatpush.msra.mxu0 0.0
    %1392 = vmatpush.msra.mxu0 0.0
    %1393 = vmatpush.msra.mxu0 0.0
    %1394 = vmatpush.msra.mxu0 0.0
    %1395 = vmatpush.msra.mxu0 %v1374
    %1396 = vmatpush.msra.mxu0 %v1373
    %1397 = vmatpush.msra.mxu0 %v1372
    %1398 = vmatpush.msra.mxu0 %v1371
    %1399 = vmatpush.msra.mxu0 %v1370
    %1400 = vmatpush.msra.mxu0 %v1369
    %1401 = vmatpush.msra.mxu0 %v1368
    %1402 = vmatpush.msra.mxu0 %v1367
    %1403 = vmatmul.f32.gmra.mxu0 %v1376
    %v1404 = vpop.f32.mrf.mxu0
    %v1405 = vadd.f32 0.0, %v1404
    %1406 = vmatmul.f32.gmra.mxu0 %v1379
    %v1407 = vpop.f32.mrf.mxu0
    %v1408 = vadd.f32 0.0, %v1407
    %1409 = vmatmul.f32.gmra.mxu0 %v1382
    %v1410 = vpop.f32.mrf.mxu0
    %v1411 = vadd.f32 0.0, %v1410
    %1412 = vmatmul.f32.gmra.mxu0 %v1385
    %v1413 = vpop.f32.mrf.mxu0
    %v1414 = vadd.f32 0.0, %v1413
    %1415 = vdwg.mxu0
    %v1416 = vadd.f32 %v1355, %v1405
    %v1417 = vadd.f32 %v1358, %v1408
    %v1418 = vadd.f32 %v1361, %v1411
    %v1419 = vadd.f32 %v1364, %v1414
    %v1420 = vld [vmem:[#allocation13] sm:$0x1]
    %v1422 = vperm.slane %v1420, 0
    %v1424 = vadd.f32 %v1416, %v1422
    %v1425 = vadd.f32 %v1417, %v1422
    %v1426 = vadd.f32 %v1418, %v1422
    %v1427 = vadd.f32 %v1419, %v1422
    %1428 = vmatpush.msra.mxu0 0.0
    %1429 = vmatpush.msra.mxu0 0.0
    %1430 = vmatpush.msra.mxu0 0.0
    %1431 = vmatpush.msra.mxu0 0.0
    %1432 = vmatpush.msra.mxu0 0.0
    %1433 = vmatpush.msra.mxu0 0.0
    %1434 = vmatpush.msra.mxu0 0.0
    %1435 = vmatpush.msra.mxu0 0.0
    %1436 = vmatpush.msra.mxu0 0.0
    %1437 = vmatpush.msra.mxu0 0.0
    %1438 = vmatpush.msra.mxu0 0.0
    %1439 = vmatpush.msra.mxu0 0.0
    %1440 = vmatpush.msra.mxu0 %v1427
    %1441 = vmatpush.msra.mxu0 %v1426
    %1442 = vmatpush.msra.mxu0 %v1425
    %1443 = vmatpush.msra.mxu0 %v1424
    %1444 = vmatmul.f32.gmra.mxu0 %v1026
    %v1445 = vpop.f32.mrf.mxu0
    %v1446 = vadd.f32 0.0, %v1445
    %1447 = vdwg.mxu0
    %v1448 = vmul.f32 %v1424, %v1424
    %v1449 = vmul.f32 %v1425, %v1425
    %v1450 = vmul.f32 %v1426, %v1426
    %v1451 = vmul.f32 %v1427, %v1427
    %1452 = vmatpush.msra.mxu0 0.0
    %1453 = vmatpush.msra.mxu0 0.0
    %1454 = vmatpush.msra.mxu0 0.0
    %1455 = vmatpush.msra.mxu0 0.0
    %1456 = vmatpush.msra.mxu0 0.0
    %1457 = vmatpush.msra.mxu0 0.0
    %1458 = vmatpush.msra.mxu0 0.0
    %1459 = vmatpush.msra.mxu0 0.0
    %1460 = vmatpush.msra.mxu0 0.0
    %1461 = vmatpush.msra.mxu0 0.0
    %1462 = vmatpush.msra.mxu0 0.0
    %1463 = vmatpush.msra.mxu0 0.0
    %1464 = vmatpush.msra.mxu0 %v1451
    %1465 = vmatpush.msra.mxu0 %v1450
    %1466 = vmatpush.msra.mxu0 %v1449
    %1467 = vmatpush.msra.mxu0 %v1448
    %1468 = vmatmul.f32.gmra.mxu0 %v1026
    %v1469 = vpop.f32.mrf.mxu0
    %v1470 = vadd.f32 0.0, %v1469
    %1471 = vdwg.mxu0
    %v1472 = vmul.f32 %v1446, 0.03125
    %v1473 = vmul.f32 %v1470, 0.03125
    %v1474 = vmul.f32 %v1472, %v1472
    %v1475 = vsub.f32 %v1473, %v1474
    %v1476 = vmax.f32 %v1475, 0.0
    %v1477 = vperm.slane %v1472, 0
    %v1478 = vsub.f32 %v1424, %v1477
    %v1479 = vsub.f32 %v1425, %v1477
    %v1480 = vsub.f32 %v1426, %v1477
    %v1481 = vsub.f32 %v1427, %v1477
    %v1482 = vadd.f32 %v1476, 1e-05
    %v1483 = vrsqrt.pop %v1482
    %v1484 = vmul.f32 %v1483, %v1482
    %v1485 = vmul.f32 %v1484, %v1483
    %v1486 = vmul.f32 0.5, %v1485
    %v1487 = vsub.f32 1.5, %v1486
    %v1488 = vmul.f32 %v1483, %v1487
    %vm1489 = vweird.f32 %v1482
    %vm1490 = vweird.f32 %v1483
    %vm1491 = vmor %vm1489, %vm1490
    %v1492 = vsel %vm1491, %v1483, %v1488
    %v1493 = vperm.slane %v1492, 0
    %v1494 = vmul.f32 %v1478, %v1493
    %v1495 = vmul.f32 %v1479, %v1493
    %v1496 = vmul.f32 %v1480, %v1493
    %v1497 = vmul.f32 %v1481, %v1493
    %v1498 = vld [vmem:[#allocation14] sm:$0x1]
    %v1500 = vperm.slane %v1498, 0
    %v1502 = vmul.f32 %v1494, %v1500
    %v1503 = vmul.f32 %v1495, %v1500
    %v1504 = vmul.f32 %v1496, %v1500
    %v1505 = vmul.f32 %v1497, %v1500
    %v1506 = vld [vmem:[#allocation16] sm:$0x1]
    %v1508 = vperm.slane %v1506, 0
    %v1510 = vadd.f32 %v1502, %v1508
    %v1511 = vadd.f32 %v1503, %v1508
    %v1512 = vadd.f32 %v1504, %v1508
    %v1513 = vadd.f32 %v1505, %v1508
    %v1514 = vmax.f32 %v1510, 0.0
    %v1515 = vmax.f32 %v1511, 0.0
    %v1516 = vmax.f32 %v1512, 0.0
    %v1517 = vmax.f32 %v1513, 0.0
    %1518 = vmatpush.msra.mxu0 0.0
    %1519 = vmatpush.msra.mxu0 0.0
    %1520 = vmatpush.msra.mxu0 0.0
    %1521 = vmatpush.msra.mxu0 0.0
    %1522 = vmatpush.msra.mxu0 0.0
    %1523 = vmatpush.msra.mxu0 0.0
    %1524 = vmatpush.msra.mxu0 0.0
    %1525 = vmatpush.msra.mxu0 0.0
    %1526 = vmatpush.msra.mxu0 0.0
    %1527 = vmatpush.msra.mxu0 0.0
    %1528 = vmatpush.msra.mxu0 0.0
    %1529 = vmatpush.msra.mxu0 0.0
    %1530 = vmatpush.msra.mxu0 %v1517
    %1531 = vmatpush.msra.mxu0 %v1516
    %1532 = vmatpush.msra.mxu0 %v1515
    %1533 = vmatpush.msra.mxu0 %v1514
    %1534 = vmatmul.f32.gmra.mxu0 %v793
    %v1535 = vpop.f32.mrf.mxu0
    %v1536 = vadd.f32 0.0, %v1535
    %1537 = vmatmul.f32.gmra.mxu0 %v796
    %v1538 = vpop.f32.mrf.mxu0
    %v1539 = vadd.f32 0.0, %v1538
    %1540 = vmatmul.f32.gmra.mxu0 %v799
    %v1541 = vpop.f32.mrf.mxu0
    %v1542 = vadd.f32 0.0, %v1541
    %1543 = vmatmul.f32.gmra.mxu0 %v802
    %v1544 = vpop.f32.mrf.mxu0
    %v1545 = vadd.f32 0.0, %v1544
    %1546 = vdwg.mxu0
    %1547 = vmatpush.msra.mxu0 0.0
    %1548 = vmatpush.msra.mxu0 0.0
    %1549 = vmatpush.msra.mxu0 0.0
    %1550 = vmatpush.msra.mxu0 0.0
    %1551 = vmatpush.msra.mxu0 0.0
    %1552 = vmatpush.msra.mxu0 0.0
    %1553 = vmatpush.msra.mxu0 0.0
    %1554 = vmatpush.msra.mxu0 0.0
    %1555 = vmatpush.msra.mxu0 0.0
    %1556 = vmatpush.msra.mxu0 0.0
    %1557 = vmatpush.msra.mxu0 0.0
    %1558 = vmatpush.msra.mxu0 0.0
    %1559 = vmatpush.msra.mxu0 %v1517
    %1560 = vmatpush.msra.mxu0 %v1516
    %1561 = vmatpush.msra.mxu0 %v1515
    %1562 = vmatpush.msra.mxu0 %v1514
    %1563 = vmatmul.f32.gmra.mxu0 %v834
    %v1564 = vpop.f32.mrf.mxu0
    %v1565 = vadd.f32 0.0, %v1564
    %1566 = vmatmul.f32.gmra.mxu0 %v837
    %v1567 = vpop.f32.mrf.mxu0
    %v1568 = vadd.f32 0.0, %v1567
    %1569 = vmatmul.f32.gmra.mxu0 %v840
    %v1570 = vpop.f32.mrf.mxu0
    %v1571 = vadd.f32 0.0, %v1570
    %1572 = vmatmul.f32.gmra.mxu0 %v843
    %v1573 = vpop.f32.mrf.mxu0
    %v1574 = vadd.f32 0.0, %v1573
    %1575 = vdwg.mxu0
    %v1576 = vld [vmem:[#allocation17] sm:$0xff]
    %v1577 = vld [vmem:[#allocation17 + $0x8] sm:$0xff]
    %v1578 = vld [vmem:[#allocation17 + $0x10] sm:$0xff]
    %v1579 = vld [vmem:[#allocation17 + $0x18] sm:$0xff]
    %v1580 = vld [vmem:[#allocation17 + $0x20] sm:$0xff]
    %v1581 = vld [vmem:[#allocation17 + $0x28] sm:$0xff]
    %v1582 = vld [vmem:[#allocation17 + $0x30] sm:$0xff]
    %v1583 = vld [vmem:[#allocation17 + $0x38] sm:$0xff]
    %s1584 = scalar_lea.vmem [#allocation17], 64
    %v1585 = vld [vmem:[%s1584] sm:$0xff]
    %v1586 = vld [vmem:[%s1584 + $0x8] sm:$0xff]
    %v1587 = vld [vmem:[%s1584 + $0x10] sm:$0xff]
    %v1588 = vld [vmem:[%s1584 + $0x18] sm:$0xff]
    %v1589 = vld [vmem:[%s1584 + $0x20] sm:$0xff]
    %v1590 = vld [vmem:[%s1584 + $0x28] sm:$0xff]
    %v1591 = vld [vmem:[%s1584 + $0x30] sm:$0xff]
    %v1592 = vld [vmem:[%s1584 + $0x38] sm:$0xff]
    %v1594 = vsel %vm1283, %v1514, 0
    %v1597 = vsel %vm1283, %v1515, 0
    %v1600 = vsel %vm1283, %v1516, 0
    %v1603 = vsel %vm1283, %v1517, 0
    %1605 = vmatpush.msra.mxu0 0.0
    %1606 = vmatpush.msra.mxu0 0.0
    %1607 = vmatpush.msra.mxu0 0.0
    %1608 = vmatpush.msra.mxu0 0.0
    %1609 = vmatpush.msra.mxu0 0.0
    %1610 = vmatpush.msra.mxu0 0.0
    %1611 = vmatpush.msra.mxu0 0.0
    %1612 = vmatpush.msra.mxu0 0.0
    %1613 = vmatpush.msra.mxu0 %v1592
    %1614 = vmatpush.msra.mxu0 %v1591
    %1615 = vmatpush.msra.mxu0 %v1590
    %1616 = vmatpush.msra.mxu0 %v1589
    %1617 = vmatpush.msra.mxu0 %v1588
    %1618 = vmatpush.msra.mxu0 %v1587
    %1619 = vmatpush.msra.mxu0 %v1586
    %1620 = vmatpush.msra.mxu0 %v1585
    %1621 = vmatmul.f32.gmra.mxu0 %v1594
    %v1622 = vpop.f32.mrf.mxu0
    %v1623 = vadd.f32 0.0, %v1622
    %1624 = vmatmul.f32.gmra.mxu0 %v1597
    %v1625 = vpop.f32.mrf.mxu0
    %v1626 = vadd.f32 0.0, %v1625
    %1627 = vmatmul.f32.gmra.mxu0 %v1600
    %v1628 = vpop.f32.mrf.mxu0
    %v1629 = vadd.f32 0.0, %v1628
    %1630 = vmatmul.f32.gmra.mxu0 %v1603
    %v1631 = vpop.f32.mrf.mxu0
    %v1632 = vadd.f32 0.0, %v1631
    %1633 = vdwg.mxu0
    %v1635 = vsel %vm1283, %v1536, 0
    %v1638 = vsel %vm1283, %v1539, 0
    %v1641 = vsel %vm1283, %v1542, 0
    %v1644 = vsel %vm1283, %v1545, 0
    %1646 = vmatpush.msra.mxu0 0.0
    %1647 = vmatpush.msra.mxu0 0.0
    %1648 = vmatpush.msra.mxu0 0.0
    %1649 = vmatpush.msra.mxu0 0.0
    %1650 = vmatpush.msra.mxu0 0.0
    %1651 = vmatpush.msra.mxu0 0.0
    %1652 = vmatpush.msra.mxu0 0.0
    %1653 = vmatpush.msra.mxu0 0.0
    %1654 = vmatpush.msra.mxu0 %v1583
    %1655 = vmatpush.msra.mxu0 %v1582
    %1656 = vmatpush.msra.mxu0 %v1581
    %1657 = vmatpush.msra.mxu0 %v1580
    %1658 = vmatpush.msra.mxu0 %v1579
    %1659 = vmatpush.msra.mxu0 %v1578
    %1660 = vmatpush.msra.mxu0 %v1577
    %1661 = vmatpush.msra.mxu0 %v1576
    %1662 = vmatmul.f32.gmra.mxu0 %v1635
    %v1663 = vpop.f32.mrf.mxu0
    %v1664 = vadd.f32 %v1623, %v1663
    %1665 = vmatmul.f32.gmra.mxu0 %v1638
    %v1666 = vpop.f32.mrf.mxu0
    %v1667 = vadd.f32 %v1626, %v1666
    %1668 = vmatmul.f32.gmra.mxu0 %v1641
    %v1669 = vpop.f32.mrf.mxu0
    %v1670 = vadd.f32 %v1629, %v1669
    %1671 = vmatmul.f32.gmra.mxu0 %v1644
    %v1672 = vpop.f32.mrf.mxu0
    %v1673 = vadd.f32 %v1632, %v1672
    %1674 = vdwg.mxu0
    %s1675 = scalar_lea.vmem [#allocation17], 128
    %v1676 = vld [vmem:[%s1675] sm:$0xff]
    %v1677 = vld [vmem:[%s1675 + $0x8] sm:$0xff]
    %v1678 = vld [vmem:[%s1675 + $0x10] sm:$0xff]
    %v1679 = vld [vmem:[%s1675 + $0x18] sm:$0xff]
    %v1680 = vld [vmem:[%s1675 + $0x20] sm:$0xff]
    %v1681 = vld [vmem:[%s1675 + $0x28] sm:$0xff]
    %v1682 = vld [vmem:[%s1675 + $0x30] sm:$0xff]
    %v1683 = vld [vmem:[%s1675 + $0x38] sm:$0xff]
    %v1685 = vsel %vm1283, %v1565, 0
    %v1688 = vsel %vm1283, %v1568, 0
    %v1691 = vsel %vm1283, %v1571, 0
    %v1694 = vsel %vm1283, %v1574, 0
    %1696 = vmatpush.msra.mxu0 0.0
    %1697 = vmatpush.msra.mxu0 0.0
    %1698 = vmatpush.msra.mxu0 0.0
    %1699 = vmatpush.msra.mxu0 0.0
    %1700 = vmatpush.msra.mxu0 0.0
    %1701 = vmatpush.msra.mxu0 0.0
    %1702 = vmatpush.msra.mxu0 0.0
    %1703 = vmatpush.msra.mxu0 0.0
    %1704 = vmatpush.msra.mxu0 %v1683
    %1705 = vmatpush.msra.mxu0 %v1682
    %1706 = vmatpush.msra.mxu0 %v1681
    %1707 = vmatpush.msra.mxu0 %v1680
    %1708 = vmatpush.msra.mxu0 %v1679
    %1709 = vmatpush.msra.mxu0 %v1678
    %1710 = vmatpush.msra.mxu0 %v1677
    %1711 = vmatpush.msra.mxu0 %v1676
    %1712 = vmatmul.f32.gmra.mxu0 %v1685
    %v1713 = vpop.f32.mrf.mxu0
    %v1714 = vadd.f32 0.0, %v1713
    %1715 = vmatmul.f32.gmra.mxu0 %v1688
    %v1716 = vpop.f32.mrf.mxu0
    %v1717 = vadd.f32 0.0, %v1716
    %1718 = vmatmul.f32.gmra.mxu0 %v1691
    %v1719 = vpop.f32.mrf.mxu0
    %v1720 = vadd.f32 0.0, %v1719
    %1721 = vmatmul.f32.gmra.mxu0 %v1694
    %v1722 = vpop.f32.mrf.mxu0
    %v1723 = vadd.f32 0.0, %v1722
    %1724 = vdwg.mxu0
    %v1725 = vadd.f32 %v1664, %v1714
    %v1726 = vadd.f32 %v1667, %v1717
    %v1727 = vadd.f32 %v1670, %v1720
    %v1728 = vadd.f32 %v1673, %v1723
    %v1729 = vld [vmem:[#allocation19] sm:$0x1]
    %v1731 = vperm.slane %v1729, 0
    %v1733 = vadd.f32 %v1725, %v1731
    %v1734 = vadd.f32 %v1726, %v1731
    %v1735 = vadd.f32 %v1727, %v1731
    %v1736 = vadd.f32 %v1728, %v1731
    %v1738 = vsel %vm791, %v782, 0
    %1740 = vmatpush.msra.mxu0 0.0
    %1741 = vmatpush.msra.mxu0 0.0
    %1742 = vmatpush.msra.mxu0 0.0
    %1743 = vmatpush.msra.mxu0 0.0
    %1744 = vmatpush.msra.mxu0 0.0
    %1745 = vmatpush.msra.mxu0 0.0
    %1746 = vmatpush.msra.mxu0 0.0
    %1747 = vmatpush.msra.mxu0 0.0
    %1748 = vmatpush.msra.mxu0 0.0
    %1749 = vmatpush.msra.mxu0 0.0
    %1750 = vmatpush.msra.mxu0 0.0
    %1751 = vmatpush.msra.mxu0 0.0
    %1752 = vmatpush.msra.mxu0 %v1736
    %1753 = vmatpush.msra.mxu0 %v1735
    %1754 = vmatpush.msra.mxu0 %v1734
    %1755 = vmatpush.msra.mxu0 %v1733
    %1756 = vmatmul.f32.gmra.mxu0 %v1738
    %v1757 = vpop.f32.mrf.mxu0
    %v1758 = vadd.f32 0.0, %v1757
    %1759 = vdwg.mxu0
    %v1760 = vld [vmem:[%s35] sm:$0xff]
    %v1761 = vld [vmem:[%s35 + $0x8] sm:$0xff]
    %v1762 = vld [vmem:[%s35 + $0x10] sm:$0xff]
    %v1763 = vld [vmem:[%s35 + $0x18] sm:$0xff]
    %v1764 = vld [vmem:[%s35 + $0x20] sm:$0xff]
    %v1765 = vld [vmem:[%s35 + $0x28] sm:$0xff]
    %v1766 = vld [vmem:[%s35 + $0x30] sm:$0xff]
    %v1767 = vld [vmem:[%s35 + $0x38] sm:$0xff]
    %v1769 = vsel %vm1283, %v1758, 0
    %1771 = vmatpush.msra.mxu0 0.0
    %1772 = vmatpush.msra.mxu0 0.0
    %1773 = vmatpush.msra.mxu0 0.0
    %1774 = vmatpush.msra.mxu0 0.0
    %1775 = vmatpush.msra.mxu0 0.0
    %1776 = vmatpush.msra.mxu0 0.0
    %1777 = vmatpush.msra.mxu0 0.0
    %1778 = vmatpush.msra.mxu0 0.0
    %1779 = vmatpush.msra.mxu0 %v1767
    %1780 = vmatpush.msra.mxu0 %v1766
    %1781 = vmatpush.msra.mxu0 %v1765
    %1782 = vmatpush.msra.mxu0 %v1764
    %1783 = vmatpush.msra.mxu0 %v1763
    %1784 = vmatpush.msra.mxu0 %v1762
    %1785 = vmatpush.msra.mxu0 %v1761
    %1786 = vmatpush.msra.mxu0 %v1760
    %1787 = vmatmul.f32.gmra.mxu0 %v1769
    %v1788 = vpop.f32.mrf.mxu0
    %v1789 = vadd.f32 0.0, %v1788
    %1790 = vdwg.mxu0
    %v1791 = vmax.f32 %v1789, 0.0
    %v1792 = vld [vmem:[#allocation20] sm:$0xf]
    %v1794 = vsel %vm877, %v1791, 0
    %v1797 = vsel %vm890, %v1792, 0
    %1799 = vmatpush.msra.mxu0 0.0
    %1800 = vmatpush.msra.mxu0 0.0
    %1801 = vmatpush.msra.mxu0 0.0
    %1802 = vmatpush.msra.mxu0 0.0
    %1803 = vmatpush.msra.mxu0 0.0
    %1804 = vmatpush.msra.mxu0 0.0
    %1805 = vmatpush.msra.mxu0 0.0
    %1806 = vmatpush.msra.mxu0 0.0
    %1807 = vmatpush.msra.mxu0 0.0
    %1808 = vmatpush.msra.mxu0 0.0
    %1809 = vmatpush.msra.mxu0 0.0
    %1810 = vmatpush.msra.mxu0 0.0
    %1811 = vmatpush.msra.mxu0 0.0
    %1812 = vmatpush.msra.mxu0 0.0
    %1813 = vmatpush.msra.mxu0 0.0
    %1814 = vmatpush.msra.mxu0 %v1797
    %1815 = vmatmul.f32.gmra.mxu0 %v1794
    %v1816 = vpop.f32.mrf.mxu0
    %v1817 = vadd.f32 0.0, %v1816
    %1818 = vdwg.mxu0
    %v1819 = vxor.u32 %v1817, 2147483648
    %v1820 = vmul.f32 %v1819, 1.442695
    %v1821 = vpow.pop %v1820
    %v1822 = vadd.f32 %v1821, 1.0
    %v1823 = vrcp.pop %v1822
    %v1824 = vmul.f32 %v1822, %v1823
    %v1825 = vsub.f32 1.0, %v1824
    %v1826 = vmul.f32 %v1823, %v1825
    %v1827 = vadd.f32 %v1823, %v1826
    %vm1828 = vweird.f32 %v1822
    %vm1829 = vweird.f32 %v1823
    %vm1830 = vmor %vm1828, %vm1829
    %v1831 = vsel %vm1830, %v1823, %v1827
    %v1832 = vand.u32 2147483647, %v1822
    %vm1833 = vcmp.eq.f32.partialorder %v1832, 8.507059e+37
    %v1834 = vand.u32 %v1822, 2147483648
    %v1835 = vor.u32 1.1754944e-38, %v1834
    %v1836 = vsel %vm1833, %v1835, %v1831
    %v1837 = vmul.f32 1.0, %v1836
    %v1838 = vld [vmem:[%s39] sm:$0xff]
    %v1839 = vld [vmem:[%s39 + $0x8] sm:$0xff]
    %v1840 = vld [vmem:[%s39 + $0x10] sm:$0xff]
    %v1841 = vld [vmem:[%s39 + $0x18] sm:$0xff]
    %v1842 = vld [vmem:[%s39 + $0x20] sm:$0xff]
    %v1843 = vld [vmem:[%s39 + $0x28] sm:$0xff]
    %v1844 = vld [vmem:[%s39 + $0x30] sm:$0xff]
    %v1845 = vld [vmem:[%s39 + $0x38] sm:$0xff]
    %1846 = vmatpush.msra.mxu0 0.0
    %1847 = vmatpush.msra.mxu0 0.0
    %1848 = vmatpush.msra.mxu0 0.0
    %1849 = vmatpush.msra.mxu0 0.0
    %1850 = vmatpush.msra.mxu0 0.0
    %1851 = vmatpush.msra.mxu0 0.0
    %1852 = vmatpush.msra.mxu0 0.0
    %1853 = vmatpush.msra.mxu0 0.0
    %1854 = vmatpush.msra.mxu0 %v1845
    %1855 = vmatpush.msra.mxu0 %v1844
    %1856 = vmatpush.msra.mxu0 %v1843
    %1857 = vmatpush.msra.mxu0 %v1842
    %1858 = vmatpush.msra.mxu0 %v1841
    %1859 = vmatpush.msra.mxu0 %v1840
    %1860 = vmatpush.msra.mxu0 %v1839
    %1861 = vmatpush.msra.mxu0 %v1838
    %1862 = vmatmul.f32.gmra.mxu0 %v1769
    %v1863 = vpop.f32.mrf.mxu0
    %v1864 = vadd.f32 0.0, %v1863
    %1865 = vdwg.mxu0
    %v1866 = vmax.f32 %v1864, 0.0
    %v1867 = vld [vmem:[#allocation22] sm:$0xf]
    %v1869 = vsel %vm877, %v1866, 0
    %v1872 = vsel %vm890, %v1867, 0
    %1874 = vmatpush.msra.mxu0 0.0
    %1875 = vmatpush.msra.mxu0 0.0
    %1876 = vmatpush.msra.mxu0 0.0
    %1877 = vmatpush.msra.mxu0 0.0
    %1878 = vmatpush.msra.mxu0 0.0
    %1879 = vmatpush.msra.mxu0 0.0
    %1880 = vmatpush.msra.mxu0 0.0
    %1881 = vmatpush.msra.mxu0 0.0
    %1882 = vmatpush.msra.mxu0 0.0
    %1883 = vmatpush.msra.mxu0 0.0
    %1884 = vmatpush.msra.mxu0 0.0
    %1885 = vmatpush.msra.mxu0 0.0
    %1886 = vmatpush.msra.mxu0 0.0
    %1887 = vmatpush.msra.mxu0 0.0
    %1888 = vmatpush.msra.mxu0 0.0
    %1889 = vmatpush.msra.mxu0 %v1872
    %1890 = vmatmul.f32.gmra.mxu0 %v1869
    %v1891 = vpop.f32.mrf.mxu0
    %v1892 = vadd.f32 0.0, %v1891
    %1893 = vdwg.mxu0
    %v1894 = vmax.f32 %v1892, 0.0
    %v1895 = vld [vmem:[#allocation23] sm:$0xff]
    %v1896 = vld [vmem:[#allocation23 + $0x8] sm:$0xff]
    %v1897 = vld [vmem:[#allocation23 + $0x10] sm:$0xff]
    %v1898 = vld [vmem:[#allocation23 + $0x18] sm:$0xff]
    %v1900 = vsel %vm791, %v1894, 0
    %1902 = vmatpush.msra.mxu0 0.0
    %1903 = vmatpush.msra.mxu0 0.0
    %1904 = vmatpush.msra.mxu0 0.0
    %1905 = vmatpush.msra.mxu0 0.0
    %1906 = vmatpush.msra.mxu0 0.0
    %1907 = vmatpush.msra.mxu0 0.0
    %1908 = vmatpush.msra.mxu0 0.0
    %1909 = vmatpush.msra.mxu0 0.0
    %1910 = vmatpush.msra.mxu0 0.0
    %1911 = vmatpush.msra.mxu0 0.0
    %1912 = vmatpush.msra.mxu0 0.0
    %1913 = vmatpush.msra.mxu0 0.0
    %1914 = vmatpush.msra.mxu0 %v1898
    %1915 = vmatpush.msra.mxu0 %v1897
    %1916 = vmatpush.msra.mxu0 %v1896
    %1917 = vmatpush.msra.mxu0 %v1895
    %1918 = vmatmul.f32.gmra.mxu0 %v1900
    %v1919 = vpop.f32.mrf.mxu0
    %v1920 = vadd.f32 0.0, %v1919
    %1921 = vdwg.mxu0
    %v1922 = vxor.u32 %v1920, 2147483648
    %v1923 = vmul.f32 %v1922, 1.442695
    %v1924 = vpow.pop %v1923
    %v1925 = vadd.f32 %v1924, 1.0
    %v1926 = vrcp.pop %v1925
    %v1927 = vmul.f32 %v1925, %v1926
    %v1928 = vsub.f32 1.0, %v1927
    %v1929 = vmul.f32 %v1926, %v1928
    %v1930 = vadd.f32 %v1926, %v1929
    %vm1931 = vweird.f32 %v1925
    %vm1932 = vweird.f32 %v1926
    %vm1933 = vmor %vm1931, %vm1932
    %v1934 = vsel %vm1933, %v1926, %v1930
    %v1935 = vand.u32 2147483647, %v1925
    %vm1936 = vcmp.eq.f32.partialorder %v1935, 8.507059e+37
    %v1937 = vand.u32 %v1925, 2147483648
    %v1938 = vor.u32 1.1754944e-38, %v1937
    %v1939 = vsel %vm1936, %v1938, %v1934
    %v1940 = vmul.f32 1.0, %v1939
    %v1941 = vadd.f32 %v1837, %v1940
    %vm1942 = vcmask 15360
    %v1944 = vsel %vm1942, %v783, 0
    %v1947 = vsel %vm1942, %v784, 0
    %v1950 = vsel %vm1942, %v785, 0
    %v1953 = vsel %vm1942, %v786, 0
    %vm1955 = vcmask 1041408
    %v1957 = vsel %vm1955, %v1941, 0
    %1959 = vmatpush.msra.mxu0 0.0
    %1960 = vmatpush.msra.mxu0 0.0
    %1961 = vmatpush.msra.mxu0 0.0
    %1962 = vmatpush.msra.mxu0 0.0
    %1963 = vmatpush.msra.mxu0 0.0
    %1964 = vmatpush.msra.mxu0 0.0
    %1965 = vmatpush.msra.mxu0 0.0
    %1966 = vmatpush.msra.mxu0 0.0
    %1967 = vmatpush.msra.mxu0 0.0
    %1968 = vmatpush.msra.mxu0 0.0
    %1969 = vmatpush.msra.mxu0 0.0
    %1970 = vmatpush.msra.mxu0 0.0
    %1971 = vmatpush.msra.mxu0 0.0
    %1972 = vmatpush.msra.mxu0 0.0
    %1973 = vmatpush.msra.mxu0 0.0
    %1974 = vmatpush.msra.mxu0 %v1957
    %1975 = vmatmul.f32.gmra.mxu0 %v1944
    %v1976 = vpop.f32.mrf.mxu0
    %v1977 = vadd.f32 0.0, %v1976
    %1978 = vmatmul.f32.gmra.mxu0 %v1947
    %v1979 = vpop.f32.mrf.mxu0
    %v1980 = vadd.f32 0.0, %v1979
    %1981 = vmatmul.f32.gmra.mxu0 %v1950
    %v1982 = vpop.f32.mrf.mxu0
    %v1983 = vadd.f32 0.0, %v1982
    %1984 = vmatmul.f32.gmra.mxu0 %v1953
    %v1985 = vpop.f32.mrf.mxu0
    %v1986 = vadd.f32 0.0, %v1985
    %1987 = vdwg.mxu0
    %v1988 = vmul.f32 %v1733, %v1977
    %v1989 = vmul.f32 %v1734, %v1980
    %v1990 = vmul.f32 %v1735, %v1983
    %v1991 = vmul.f32 %v1736, %v1986
    %v1992 = vadd.f32 %v1988, %v1114
    %v1993 = vadd.f32 %v1989, %v1115
    %v1994 = vadd.f32 %v1990, %v1116
    %v1995 = vadd.f32 %v1991, %v1117
    %v1996 = vld [vmem:[#allocation40] sm:$0xff]
    %v1997 = vld [vmem:[#allocation40 + $0x8] sm:$0xff]
    %v1998 = vld [vmem:[#allocation40 + $0x10] sm:$0xff]
    %v1999 = vld [vmem:[#allocation40 + $0x18] sm:$0xff]
    %v2000 = vld [vmem:[#allocation40 + $0x20] sm:$0xff]
    %v2001 = vld [vmem:[#allocation40 + $0x28] sm:$0xff]
    %v2002 = vld [vmem:[#allocation40 + $0x30] sm:$0xff]
    %v2003 = vld [vmem:[#allocation40 + $0x38] sm:$0xff]
    %v2004 = vld [vmem:[#allocation41] sm:$0x1]
    %v2006 = vperm.slane %v2004, 0
    %v2009 = vsel %vm1283, %v1992, 0
    %v2012 = vsel %vm1283, %v1993, 0
    %v2015 = vsel %vm1283, %v1994, 0
    %v2018 = vsel %vm1283, %v1995, 0
    %2020 = vmatpush.msra.mxu0 0.0
    %2021 = vmatpush.msra.mxu0 0.0
    %2022 = vmatpush.msra.mxu0 0.0
    %2023 = vmatpush.msra.mxu0 0.0
    %2024 = vmatpush.msra.mxu0 0.0
    %2025 = vmatpush.msra.mxu0 0.0
    %2026 = vmatpush.msra.mxu0 0.0
    %2027 = vmatpush.msra.mxu0 0.0
    %2028 = vmatpush.msra.mxu0 %v2003
    %2029 = vmatpush.msra.mxu0 %v2002
    %2030 = vmatpush.msra.mxu0 %v2001
    %2031 = vmatpush.msra.mxu0 %v2000
    %2032 = vmatpush.msra.mxu0 %v1999
    %2033 = vmatpush.msra.mxu0 %v1998
    %2034 = vmatpush.msra.mxu0 %v1997
    %2035 = vmatpush.msra.mxu0 %v1996
    %2036 = vmatmul.f32.gmra.mxu0 %v2009
    %v2037 = vpop.f32.mrf.mxu0
    %v2038 = vadd.f32 %v2006, %v2037
    %2039 = vmatmul.f32.gmra.mxu0 %v2012
    %v2040 = vpop.f32.mrf.mxu0
    %v2041 = vadd.f32 %v2006, %v2040
    %2042 = vmatmul.f32.gmra.mxu0 %v2015
    %v2043 = vpop.f32.mrf.mxu0
    %v2044 = vadd.f32 %v2006, %v2043
    %2045 = vmatmul.f32.gmra.mxu0 %v2018
    %v2046 = vpop.f32.mrf.mxu0
    %v2047 = vadd.f32 %v2006, %v2046
    %2048 = vdwg.mxu0
    %2049 = vmatpush.msra.mxu0 0.0
    %2050 = vmatpush.msra.mxu0 0.0
    %2051 = vmatpush.msra.mxu0 0.0
    %2052 = vmatpush.msra.mxu0 0.0
    %2053 = vmatpush.msra.mxu0 0.0
    %2054 = vmatpush.msra.mxu0 0.0
    %2055 = vmatpush.msra.mxu0 0.0
    %2056 = vmatpush.msra.mxu0 0.0
    %2057 = vmatpush.msra.mxu0 0.0
    %2058 = vmatpush.msra.mxu0 0.0
    %2059 = vmatpush.msra.mxu0 0.0
    %2060 = vmatpush.msra.mxu0 0.0
    %2061 = vmatpush.msra.mxu0 %v1995
    %2062 = vmatpush.msra.mxu0 %v1994
    %2063 = vmatpush.msra.mxu0 %v1993
    %2064 = vmatpush.msra.mxu0 %v1992
    %2065 = vmatmul.f32.gmra.mxu0 %v1026
    %v2066 = vpop.f32.mrf.mxu0
    %v2067 = vadd.f32 0.0, %v2066
    %2068 = vdwg.mxu0
    %v2069 = vmul.f32 %v1992, %v1992
    %v2070 = vmul.f32 %v1993, %v1993
    %v2071 = vmul.f32 %v1994, %v1994
    %v2072 = vmul.f32 %v1995, %v1995
    %2073 = vmatpush.msra.mxu0 0.0
    %2074 = vmatpush.msra.mxu0 0.0
    %2075 = vmatpush.msra.mxu0 0.0
    %2076 = vmatpush.msra.mxu0 0.0
    %2077 = vmatpush.msra.mxu0 0.0
    %2078 = vmatpush.msra.mxu0 0.0
    %2079 = vmatpush.msra.mxu0 0.0
    %2080 = vmatpush.msra.mxu0 0.0
    %2081 = vmatpush.msra.mxu0 0.0
    %2082 = vmatpush.msra.mxu0 0.0
    %2083 = vmatpush.msra.mxu0 0.0
    %2084 = vmatpush.msra.mxu0 0.0
    %2085 = vmatpush.msra.mxu0 %v2072
    %2086 = vmatpush.msra.mxu0 %v2071
    %2087 = vmatpush.msra.mxu0 %v2070
    %2088 = vmatpush.msra.mxu0 %v2069
    %2089 = vmatmul.f32.gmra.mxu0 %v1026
    %v2090 = vpop.f32.mrf.mxu0
    %v2091 = vadd.f32 0.0, %v2090
    %2092 = vdwg.mxu0
    %v2093 = vmul.f32 %v2067, 0.03125
    %v2094 = vmul.f32 %v2091, 0.03125
    %v2095 = vmul.f32 %v2093, %v2093
    %v2096 = vsub.f32 %v2094, %v2095
    %v2097 = vmax.f32 %v2096, 0.0
    %v2098 = vperm.slane %v2093, 0
    %v2099 = vsub.f32 %v1992, %v2098
    %v2100 = vsub.f32 %v1993, %v2098
    %v2101 = vsub.f32 %v1994, %v2098
    %v2102 = vsub.f32 %v1995, %v2098
    %v2103 = vadd.f32 %v2097, 1e-05
    %v2104 = vrsqrt.pop %v2103
    %v2105 = vmul.f32 %v2104, %v2103
    %v2106 = vmul.f32 %v2105, %v2104
    %v2107 = vmul.f32 0.5, %v2106
    %v2108 = vsub.f32 1.5, %v2107
    %v2109 = vmul.f32 %v2104, %v2108
    %vm2110 = vweird.f32 %v2103
    %vm2111 = vweird.f32 %v2104
    %vm2112 = vmor %vm2110, %vm2111
    %v2113 = vsel %vm2112, %v2104, %v2109
    %v2114 = vperm.slane %v2113, 0
    %v2115 = vmul.f32 %v2099, %v2114
    %v2116 = vmul.f32 %v2100, %v2114
    %v2117 = vmul.f32 %v2101, %v2114
    %v2118 = vmul.f32 %v2102, %v2114
    %v2119 = vld [vmem:[#allocation25] sm:$0x1]
    %v2121 = vperm.slane %v2119, 0
    %v2123 = vmul.f32 %v2115, %v2121
    %v2124 = vmul.f32 %v2116, %v2121
    %v2125 = vmul.f32 %v2117, %v2121
    %v2126 = vmul.f32 %v2118, %v2121
    %v2127 = vld [vmem:[#allocation26] sm:$0x1]
    %v2129 = vperm.slane %v2127, 0
    %v2131 = vadd.f32 %v2123, %v2129
    %v2132 = vadd.f32 %v2124, %v2129
    %v2133 = vadd.f32 %v2125, %v2129
    %v2134 = vadd.f32 %v2126, %v2129
    %v2135 = vmax.f32 %v2131, 0.0
    %v2136 = vmax.f32 %v2132, 0.0
    %v2137 = vmax.f32 %v2133, 0.0
    %v2138 = vmax.f32 %v2134, 0.0
    %2139 = vmatpush.msra.mxu0 0.0
    %2140 = vmatpush.msra.mxu0 0.0
    %2141 = vmatpush.msra.mxu0 0.0
    %2142 = vmatpush.msra.mxu0 0.0
    %2143 = vmatpush.msra.mxu0 0.0
    %2144 = vmatpush.msra.mxu0 0.0
    %2145 = vmatpush.msra.mxu0 0.0
    %2146 = vmatpush.msra.mxu0 0.0
    %2147 = vmatpush.msra.mxu0 0.0
    %2148 = vmatpush.msra.mxu0 0.0
    %2149 = vmatpush.msra.mxu0 0.0
    %2150 = vmatpush.msra.mxu0 0.0
    %2151 = vmatpush.msra.mxu0 %v2138
    %2152 = vmatpush.msra.mxu0 %v2137
    %2153 = vmatpush.msra.mxu0 %v2136
    %2154 = vmatpush.msra.mxu0 %v2135
    %2155 = vmatmul.f32.gmra.mxu0 %v793
    %v2156 = vpop.f32.mrf.mxu0
    %v2157 = vadd.f32 0.0, %v2156
    %2158 = vmatmul.f32.gmra.mxu0 %v796
    %v2159 = vpop.f32.mrf.mxu0
    %v2160 = vadd.f32 0.0, %v2159
    %2161 = vmatmul.f32.gmra.mxu0 %v799
    %v2162 = vpop.f32.mrf.mxu0
    %v2163 = vadd.f32 0.0, %v2162
    %2164 = vmatmul.f32.gmra.mxu0 %v802
    %v2165 = vpop.f32.mrf.mxu0
    %v2166 = vadd.f32 0.0, %v2165
    %2167 = vdwg.mxu0
    %2168 = vmatpush.msra.mxu0 0.0
    %2169 = vmatpush.msra.mxu0 0.0
    %2170 = vmatpush.msra.mxu0 0.0
    %2171 = vmatpush.msra.mxu0 0.0
    %2172 = vmatpush.msra.mxu0 0.0
    %2173 = vmatpush.msra.mxu0 0.0
    %2174 = vmatpush.msra.mxu0 0.0
    %2175 = vmatpush.msra.mxu0 0.0
    %2176 = vmatpush.msra.mxu0 0.0
    %2177 = vmatpush.msra.mxu0 0.0
    %2178 = vmatpush.msra.mxu0 0.0
    %2179 = vmatpush.msra.mxu0 0.0
    %2180 = vmatpush.msra.mxu0 %v2138
    %2181 = vmatpush.msra.mxu0 %v2137
    %2182 = vmatpush.msra.mxu0 %v2136
    %2183 = vmatpush.msra.mxu0 %v2135
    %2184 = vmatmul.f32.gmra.mxu0 %v834
    %v2185 = vpop.f32.mrf.mxu0
    %v2186 = vadd.f32 0.0, %v2185
    %2187 = vmatmul.f32.gmra.mxu0 %v837
    %v2188 = vpop.f32.mrf.mxu0
    %v2189 = vadd.f32 0.0, %v2188
    %2190 = vmatmul.f32.gmra.mxu0 %v840
    %v2191 = vpop.f32.mrf.mxu0
    %v2192 = vadd.f32 0.0, %v2191
    %2193 = vmatmul.f32.gmra.mxu0 %v843
    %v2194 = vpop.f32.mrf.mxu0
    %v2195 = vadd.f32 0.0, %v2194
    %2196 = vdwg.mxu0
    %v2197 = vld [vmem:[#allocation28] sm:$0xff]
    %v2198 = vld [vmem:[#allocation28 + $0x8] sm:$0xff]
    %v2199 = vld [vmem:[#allocation28 + $0x10] sm:$0xff]
    %v2200 = vld [vmem:[#allocation28 + $0x18] sm:$0xff]
    %v2201 = vld [vmem:[#allocation28 + $0x20] sm:$0xff]
    %v2202 = vld [vmem:[#allocation28 + $0x28] sm:$0xff]
    %v2203 = vld [vmem:[#allocation28 + $0x30] sm:$0xff]
    %v2204 = vld [vmem:[#allocation28 + $0x38] sm:$0xff]
    %s2205 = scalar_lea.vmem [#allocation28], 64
    %v2206 = vld [vmem:[%s2205] sm:$0xff]
    %v2207 = vld [vmem:[%s2205 + $0x8] sm:$0xff]
    %v2208 = vld [vmem:[%s2205 + $0x10] sm:$0xff]
    %v2209 = vld [vmem:[%s2205 + $0x18] sm:$0xff]
    %v2210 = vld [vmem:[%s2205 + $0x20] sm:$0xff]
    %v2211 = vld [vmem:[%s2205 + $0x28] sm:$0xff]
    %v2212 = vld [vmem:[%s2205 + $0x30] sm:$0xff]
    %v2213 = vld [vmem:[%s2205 + $0x38] sm:$0xff]
    %v2215 = vsel %vm1283, %v2135, 0
    %v2218 = vsel %vm1283, %v2136, 0
    %v2221 = vsel %vm1283, %v2137, 0
    %v2224 = vsel %vm1283, %v2138, 0
    %2226 = vmatpush.msra.mxu0 0.0
    %2227 = vmatpush.msra.mxu0 0.0
    %2228 = vmatpush.msra.mxu0 0.0
    %2229 = vmatpush.msra.mxu0 0.0
    %2230 = vmatpush.msra.mxu0 0.0
    %2231 = vmatpush.msra.mxu0 0.0
    %2232 = vmatpush.msra.mxu0 0.0
    %2233 = vmatpush.msra.mxu0 0.0
    %2234 = vmatpush.msra.mxu0 %v2213
    %2235 = vmatpush.msra.mxu0 %v2212
    %2236 = vmatpush.msra.mxu0 %v2211
    %2237 = vmatpush.msra.mxu0 %v2210
    %2238 = vmatpush.msra.mxu0 %v2209
    %2239 = vmatpush.msra.mxu0 %v2208
    %2240 = vmatpush.msra.mxu0 %v2207
    %2241 = vmatpush.msra.mxu0 %v2206
    %2242 = vmatmul.f32.gmra.mxu0 %v2215
    %v2243 = vpop.f32.mrf.mxu0
    %v2244 = vadd.f32 0.0, %v2243
    %2245 = vmatmul.f32.gmra.mxu0 %v2218
    %v2246 = vpop.f32.mrf.mxu0
    %v2247 = vadd.f32 0.0, %v2246
    %2248 = vmatmul.f32.gmra.mxu0 %v2221
    %v2249 = vpop.f32.mrf.mxu0
    %v2250 = vadd.f32 0.0, %v2249
    %2251 = vmatmul.f32.gmra.mxu0 %v2224
    %v2252 = vpop.f32.mrf.mxu0
    %v2253 = vadd.f32 0.0, %v2252
    %2254 = vdwg.mxu0
    %v2256 = vsel %vm1283, %v2157, 0
    %v2259 = vsel %vm1283, %v2160, 0
    %v2262 = vsel %vm1283, %v2163, 0
    %v2265 = vsel %vm1283, %v2166, 0
    %2267 = vmatpush.msra.mxu0 0.0
    %2268 = vmatpush.msra.mxu0 0.0
    %2269 = vmatpush.msra.mxu0 0.0
    %2270 = vmatpush.msra.mxu0 0.0
    %2271 = vmatpush.msra.mxu0 0.0
    %2272 = vmatpush.msra.mxu0 0.0
    %2273 = vmatpush.msra.mxu0 0.0
    %2274 = vmatpush.msra.mxu0 0.0
    %2275 = vmatpush.msra.mxu0 %v2204
    %2276 = vmatpush.msra.mxu0 %v2203
    %2277 = vmatpush.msra.mxu0 %v2202
    %2278 = vmatpush.msra.mxu0 %v2201
    %2279 = vmatpush.msra.mxu0 %v2200
    %2280 = vmatpush.msra.mxu0 %v2199
    %2281 = vmatpush.msra.mxu0 %v2198
    %2282 = vmatpush.msra.mxu0 %v2197
    %2283 = vmatmul.f32.gmra.mxu0 %v2256
    %v2284 = vpop.f32.mrf.mxu0
    %v2285 = vadd.f32 %v2244, %v2284
    %2286 = vmatmul.f32.gmra.mxu0 %v2259
    %v2287 = vpop.f32.mrf.mxu0
    %v2288 = vadd.f32 %v2247, %v2287
    %2289 = vmatmul.f32.gmra.mxu0 %v2262
    %v2290 = vpop.f32.mrf.mxu0
    %v2291 = vadd.f32 %v2250, %v2290
    %2292 = vmatmul.f32.gmra.mxu0 %v2265
    %v2293 = vpop.f32.mrf.mxu0
    %v2294 = vadd.f32 %v2253, %v2293
    %2295 = vdwg.mxu0
    %s2296 = scalar_lea.vmem [#allocation28], 128
    %v2297 = vld [vmem:[%s2296] sm:$0xff]
    %v2298 = vld [vmem:[%s2296 + $0x8] sm:$0xff]
    %v2299 = vld [vmem:[%s2296 + $0x10] sm:$0xff]
    %v2300 = vld [vmem:[%s2296 + $0x18] sm:$0xff]
    %v2301 = vld [vmem:[%s2296 + $0x20] sm:$0xff]
    %v2302 = vld [vmem:[%s2296 + $0x28] sm:$0xff]
    %v2303 = vld [vmem:[%s2296 + $0x30] sm:$0xff]
    %v2304 = vld [vmem:[%s2296 + $0x38] sm:$0xff]
    %v2306 = vsel %vm1283, %v2186, 0
    %v2309 = vsel %vm1283, %v2189, 0
    %v2312 = vsel %vm1283, %v2192, 0
    %v2315 = vsel %vm1283, %v2195, 0
    %2317 = vmatpush.msra.mxu0 0.0
    %2318 = vmatpush.msra.mxu0 0.0
    %2319 = vmatpush.msra.mxu0 0.0
    %2320 = vmatpush.msra.mxu0 0.0
    %2321 = vmatpush.msra.mxu0 0.0
    %2322 = vmatpush.msra.mxu0 0.0
    %2323 = vmatpush.msra.mxu0 0.0
    %2324 = vmatpush.msra.mxu0 0.0
    %2325 = vmatpush.msra.mxu0 %v2304
    %2326 = vmatpush.msra.mxu0 %v2303
    %2327 = vmatpush.msra.mxu0 %v2302
    %2328 = vmatpush.msra.mxu0 %v2301
    %2329 = vmatpush.msra.mxu0 %v2300
    %2330 = vmatpush.msra.mxu0 %v2299
    %2331 = vmatpush.msra.mxu0 %v2298
    %2332 = vmatpush.msra.mxu0 %v2297
    %2333 = vmatmul.f32.gmra.mxu0 %v2306
    %v2334 = vpop.f32.mrf.mxu0
    %v2335 = vadd.f32 0.0, %v2334
    %2336 = vmatmul.f32.gmra.mxu0 %v2309
    %v2337 = vpop.f32.mrf.mxu0
    %v2338 = vadd.f32 0.0, %v2337
    %2339 = vmatmul.f32.gmra.mxu0 %v2312
    %v2340 = vpop.f32.mrf.mxu0
    %v2341 = vadd.f32 0.0, %v2340
    %2342 = vmatmul.f32.gmra.mxu0 %v2315
    %v2343 = vpop.f32.mrf.mxu0
    %v2344 = vadd.f32 0.0, %v2343
    %2345 = vdwg.mxu0
    %v2346 = vadd.f32 %v2285, %v2335
    %v2347 = vadd.f32 %v2288, %v2338
    %v2348 = vadd.f32 %v2291, %v2341
    %v2349 = vadd.f32 %v2294, %v2344
    %v2350 = vld [vmem:[#allocation29] sm:$0x1]
    %v2352 = vperm.slane %v2350, 0
    %v2354 = vadd.f32 %v2346, %v2352
    %v2355 = vadd.f32 %v2347, %v2352
    %v2356 = vadd.f32 %v2348, %v2352
    %v2357 = vadd.f32 %v2349, %v2352
    %2358 = vmatpush.msra.mxu0 0.0
    %2359 = vmatpush.msra.mxu0 0.0
    %2360 = vmatpush.msra.mxu0 0.0
    %2361 = vmatpush.msra.mxu0 0.0
    %2362 = vmatpush.msra.mxu0 0.0
    %2363 = vmatpush.msra.mxu0 0.0
    %2364 = vmatpush.msra.mxu0 0.0
    %2365 = vmatpush.msra.mxu0 0.0
    %2366 = vmatpush.msra.mxu0 0.0
    %2367 = vmatpush.msra.mxu0 0.0
    %2368 = vmatpush.msra.mxu0 0.0
    %2369 = vmatpush.msra.mxu0 0.0
    %2370 = vmatpush.msra.mxu0 %v2357
    %2371 = vmatpush.msra.mxu0 %v2356
    %2372 = vmatpush.msra.mxu0 %v2355
    %2373 = vmatpush.msra.mxu0 %v2354
    %2374 = vmatmul.f32.gmra.mxu0 %v1026
    %v2375 = vpop.f32.mrf.mxu0
    %v2376 = vadd.f32 0.0, %v2375
    %2377 = vdwg.mxu0
    %v2378 = vmul.f32 %v2354, %v2354
    %v2379 = vmul.f32 %v2355, %v2355
    %v2380 = vmul.f32 %v2356, %v2356
    %v2381 = vmul.f32 %v2357, %v2357
    %2382 = vmatpush.msra.mxu0 0.0
    %2383 = vmatpush.msra.mxu0 0.0
    %2384 = vmatpush.msra.mxu0 0.0
    %2385 = vmatpush.msra.mxu0 0.0
    %2386 = vmatpush.msra.mxu0 0.0
    %2387 = vmatpush.msra.mxu0 0.0
    %2388 = vmatpush.msra.mxu0 0.0
    %2389 = vmatpush.msra.mxu0 0.0
    %2390 = vmatpush.msra.mxu0 0.0
    %2391 = vmatpush.msra.mxu0 0.0
    %2392 = vmatpush.msra.mxu0 0.0
    %2393 = vmatpush.msra.mxu0 0.0
    %2394 = vmatpush.msra.mxu0 %v2381
    %2395 = vmatpush.msra.mxu0 %v2380
    %2396 = vmatpush.msra.mxu0 %v2379
    %2397 = vmatpush.msra.mxu0 %v2378
    %2398 = vmatmul.f32.gmra.mxu0 %v1026
    %v2399 = vpop.f32.mrf.mxu0
    %v2400 = vadd.f32 0.0, %v2399
    %2401 = vdwg.mxu0
    %v2402 = vmul.f32 %v2376, 0.03125
    %v2403 = vmul.f32 %v2400, 0.03125
    %v2404 = vmul.f32 %v2402, %v2402
    %v2405 = vsub.f32 %v2403, %v2404
    %v2406 = vmax.f32 %v2405, 0.0
    %v2407 = vperm.slane %v2402, 0
    %v2408 = vsub.f32 %v2354, %v2407
    %v2409 = vsub.f32 %v2355, %v2407
    %v2410 = vsub.f32 %v2356, %v2407
    %v2411 = vsub.f32 %v2357, %v2407
    %v2412 = vadd.f32 %v2406, 1e-05
    %v2413 = vrsqrt.pop %v2412
    %v2414 = vmul.f32 %v2413, %v2412
    %v2415 = vmul.f32 %v2414, %v2413
    %v2416 = vmul.f32 0.5, %v2415
    %v2417 = vsub.f32 1.5, %v2416
    %v2418 = vmul.f32 %v2413, %v2417
    %vm2419 = vweird.f32 %v2412
    %vm2420 = vweird.f32 %v2413
    %vm2421 = vmor %vm2419, %vm2420
    %v2422 = vsel %vm2421, %v2413, %v2418
    %v2423 = vperm.slane %v2422, 0
    %v2424 = vmul.f32 %v2408, %v2423
    %v2425 = vmul.f32 %v2409, %v2423
    %v2426 = vmul.f32 %v2410, %v2423
    %v2427 = vmul.f32 %v2411, %v2423
    %v2428 = vld [vmem:[#allocation31] sm:$0x1]
    %v2430 = vperm.slane %v2428, 0
    %v2432 = vmul.f32 %v2424, %v2430
    %v2433 = vmul.f32 %v2425, %v2430
    %v2434 = vmul.f32 %v2426, %v2430
    %v2435 = vmul.f32 %v2427, %v2430
    %v2436 = vld [vmem:[#allocation32] sm:$0x1]
    %v2438 = vperm.slane %v2436, 0
    %v2440 = vadd.f32 %v2432, %v2438
    %v2441 = vadd.f32 %v2433, %v2438
    %v2442 = vadd.f32 %v2434, %v2438
    %v2443 = vadd.f32 %v2435, %v2438
    %v2444 = vmax.f32 %v2440, 0.0
    %v2445 = vmax.f32 %v2441, 0.0
    %v2446 = vmax.f32 %v2442, 0.0
    %v2447 = vmax.f32 %v2443, 0.0
    %2448 = vmatpush.msra.mxu0 0.0
    %2449 = vmatpush.msra.mxu0 0.0
    %2450 = vmatpush.msra.mxu0 0.0
    %2451 = vmatpush.msra.mxu0 0.0
    %2452 = vmatpush.msra.mxu0 0.0
    %2453 = vmatpush.msra.mxu0 0.0
    %2454 = vmatpush.msra.mxu0 0.0
    %2455 = vmatpush.msra.mxu0 0.0
    %2456 = vmatpush.msra.mxu0 0.0
    %2457 = vmatpush.msra.mxu0 0.0
    %2458 = vmatpush.msra.mxu0 0.0
    %2459 = vmatpush.msra.mxu0 0.0
    %2460 = vmatpush.msra.mxu0 %v2447
    %2461 = vmatpush.msra.mxu0 %v2446
    %2462 = vmatpush.msra.mxu0 %v2445
    %2463 = vmatpush.msra.mxu0 %v2444
    %2464 = vmatmul.f32.gmra.mxu0 %v793
    %v2465 = vpop.f32.mrf.mxu0
    %v2466 = vadd.f32 0.0, %v2465
    %2467 = vmatmul.f32.gmra.mxu0 %v796
    %v2468 = vpop.f32.mrf.mxu0
    %v2469 = vadd.f32 0.0, %v2468
    %2470 = vmatmul.f32.gmra.mxu0 %v799
    %v2471 = vpop.f32.mrf.mxu0
    %v2472 = vadd.f32 0.0, %v2471
    %2473 = vmatmul.f32.gmra.mxu0 %v802
    %v2474 = vpop.f32.mrf.mxu0
    %v2475 = vadd.f32 0.0, %v2474
    %2476 = vdwg.mxu0
    %2477 = vmatpush.msra.mxu0 0.0
    %2478 = vmatpush.msra.mxu0 0.0
    %2479 = vmatpush.msra.mxu0 0.0
    %2480 = vmatpush.msra.mxu0 0.0
    %2481 = vmatpush.msra.mxu0 0.0
    %2482 = vmatpush.msra.mxu0 0.0
    %2483 = vmatpush.msra.mxu0 0.0
    %2484 = vmatpush.msra.mxu0 0.0
    %2485 = vmatpush.msra.mxu0 0.0
    %2486 = vmatpush.msra.mxu0 0.0
    %2487 = vmatpush.msra.mxu0 0.0
    %2488 = vmatpush.msra.mxu0 0.0
    %2489 = vmatpush.msra.mxu0 %v2447
    %2490 = vmatpush.msra.mxu0 %v2446
    %2491 = vmatpush.msra.mxu0 %v2445
    %2492 = vmatpush.msra.mxu0 %v2444
    %2493 = vmatmul.f32.gmra.mxu0 %v834
    %v2494 = vpop.f32.mrf.mxu0
    %v2495 = vadd.f32 0.0, %v2494
    %2496 = vmatmul.f32.gmra.mxu0 %v837
    %v2497 = vpop.f32.mrf.mxu0
    %v2498 = vadd.f32 0.0, %v2497
    %2499 = vmatmul.f32.gmra.mxu0 %v840
    %v2500 = vpop.f32.mrf.mxu0
    %v2501 = vadd.f32 0.0, %v2500
    %2502 = vmatmul.f32.gmra.mxu0 %v843
    %v2503 = vpop.f32.mrf.mxu0
    %v2504 = vadd.f32 0.0, %v2503
    %2505 = vdwg.mxu0
    %v2506 = vld [vmem:[%s57] sm:$0xff]
    %v2507 = vld [vmem:[%s57 + $0x8] sm:$0xff]
    %v2508 = vld [vmem:[%s57 + $0x10] sm:$0xff]
    %v2509 = vld [vmem:[%s57 + $0x18] sm:$0xff]
    %v2510 = vld [vmem:[%s57 + $0x20] sm:$0xff]
    %v2511 = vld [vmem:[%s57 + $0x28] sm:$0xff]
    %v2512 = vld [vmem:[%s57 + $0x30] sm:$0xff]
    %v2513 = vld [vmem:[%s57 + $0x38] sm:$0xff]
    %v2514 = vld [vmem:[%s57 + $0x40] sm:$0xff]
    %v2515 = vld [vmem:[%s57 + $0x48] sm:$0xff]
    %v2516 = vld [vmem:[%s57 + $0x50] sm:$0xff]
    %v2517 = vld [vmem:[%s57 + $0x58] sm:$0xff]
    %v2518 = vld [vmem:[%s57 + $0x60] sm:$0xff]
    %v2519 = vld [vmem:[%s57 + $0x68] sm:$0xff]
    %v2520 = vld [vmem:[%s57 + $0x70] sm:$0xff]
    %v2521 = vld [vmem:[%s57 + $0x78] sm:$0xff]
    %s2522 = scalar_lea.vmem %s57, 128
    %v2523 = vld [vmem:[%s2522] sm:$0xff]
    %v2524 = vld [vmem:[%s2522 + $0x8] sm:$0xff]
    %v2525 = vld [vmem:[%s2522 + $0x10] sm:$0xff]
    %v2526 = vld [vmem:[%s2522 + $0x18] sm:$0xff]
    %v2527 = vld [vmem:[%s2522 + $0x20] sm:$0xff]
    %v2528 = vld [vmem:[%s2522 + $0x28] sm:$0xff]
    %v2529 = vld [vmem:[%s2522 + $0x30] sm:$0xff]
    %v2530 = vld [vmem:[%s2522 + $0x38] sm:$0xff]
    %v2531 = vld [vmem:[%s2522 + $0x40] sm:$0xff]
    %v2532 = vld [vmem:[%s2522 + $0x48] sm:$0xff]
    %v2533 = vld [vmem:[%s2522 + $0x50] sm:$0xff]
    %v2534 = vld [vmem:[%s2522 + $0x58] sm:$0xff]
    %v2535 = vld [vmem:[%s2522 + $0x60] sm:$0xff]
    %v2536 = vld [vmem:[%s2522 + $0x68] sm:$0xff]
    %v2537 = vld [vmem:[%s2522 + $0x70] sm:$0xff]
    %v2538 = vld [vmem:[%s2522 + $0x78] sm:$0xff]
    %2539 = vmatpush.msra.mxu0 %v2538
    %2540 = vmatpush.msra.mxu0 %v2537
    %2541 = vmatpush.msra.mxu0 %v2536
    %2542 = vmatpush.msra.mxu0 %v2535
    %2543 = vmatpush.msra.mxu0 %v2534
    %2544 = vmatpush.msra.mxu0 %v2533
    %2545 = vmatpush.msra.mxu0 %v2532
    %2546 = vmatpush.msra.mxu0 %v2531
    %2547 = vmatpush.msra.mxu0 %v2530
    %2548 = vmatpush.msra.mxu0 %v2529
    %2549 = vmatpush.msra.mxu0 %v2528
    %2550 = vmatpush.msra.mxu0 %v2527
    %2551 = vmatpush.msra.mxu0 %v2526
    %2552 = vmatpush.msra.mxu0 %v2525
    %2553 = vmatpush.msra.mxu0 %v2524
    %2554 = vmatpush.msra.mxu0 %v2523
    %2555 = vmatmul.f32.gmra.mxu0 %v2444
    %v2556 = vpop.f32.mrf.mxu0
    %v2557 = vadd.f32 0.0, %v2556
    %2558 = vmatmul.f32.gmra.mxu0 %v2445
    %v2559 = vpop.f32.mrf.mxu0
    %v2560 = vadd.f32 0.0, %v2559
    %2561 = vmatmul.f32.gmra.mxu0 %v2446
    %v2562 = vpop.f32.mrf.mxu0
    %v2563 = vadd.f32 0.0, %v2562
    %2564 = vmatmul.f32.gmra.mxu0 %v2447
    %v2565 = vpop.f32.mrf.mxu0
    %v2566 = vadd.f32 0.0, %v2565
    %2567 = vdwg.mxu0
    %2568 = vmatpush.msra.mxu0 %v2521
    %2569 = vmatpush.msra.mxu0 %v2520
    %2570 = vmatpush.msra.mxu0 %v2519
    %2571 = vmatpush.msra.mxu0 %v2518
    %2572 = vmatpush.msra.mxu0 %v2517
    %2573 = vmatpush.msra.mxu0 %v2516
    %2574 = vmatpush.msra.mxu0 %v2515
    %2575 = vmatpush.msra.mxu0 %v2514
    %2576 = vmatpush.msra.mxu0 %v2513
    %2577 = vmatpush.msra.mxu0 %v2512
    %2578 = vmatpush.msra.mxu0 %v2511
    %2579 = vmatpush.msra.mxu0 %v2510
    %2580 = vmatpush.msra.mxu0 %v2509
    %2581 = vmatpush.msra.mxu0 %v2508
    %2582 = vmatpush.msra.mxu0 %v2507
    %2583 = vmatpush.msra.mxu0 %v2506
    %2584 = vmatmul.f32.gmra.mxu0 %v2466
    %v2585 = vpop.f32.mrf.mxu0
    %v2586 = vadd.f32 %v2557, %v2585
    %2587 = vmatmul.f32.gmra.mxu0 %v2469
    %v2588 = vpop.f32.mrf.mxu0
    %v2589 = vadd.f32 %v2560, %v2588
    %2590 = vmatmul.f32.gmra.mxu0 %v2472
    %v2591 = vpop.f32.mrf.mxu0
    %v2592 = vadd.f32 %v2563, %v2591
    %2593 = vmatmul.f32.gmra.mxu0 %v2475
    %v2594 = vpop.f32.mrf.mxu0
    %v2595 = vadd.f32 %v2566, %v2594
    %2596 = vdwg.mxu0
    %s2597 = scalar_lea.vmem %s57, 256
    %v2598 = vld [vmem:[%s2597] sm:$0xff]
    %v2599 = vld [vmem:[%s2597 + $0x8] sm:$0xff]
    %v2600 = vld [vmem:[%s2597 + $0x10] sm:$0xff]
    %v2601 = vld [vmem:[%s2597 + $0x18] sm:$0xff]
    %v2602 = vld [vmem:[%s2597 + $0x20] sm:$0xff]
    %v2603 = vld [vmem:[%s2597 + $0x28] sm:$0xff]
    %v2604 = vld [vmem:[%s2597 + $0x30] sm:$0xff]
    %v2605 = vld [vmem:[%s2597 + $0x38] sm:$0xff]
    %v2606 = vld [vmem:[%s2597 + $0x40] sm:$0xff]
    %v2607 = vld [vmem:[%s2597 + $0x48] sm:$0xff]
    %v2608 = vld [vmem:[%s2597 + $0x50] sm:$0xff]
    %v2609 = vld [vmem:[%s2597 + $0x58] sm:$0xff]
    %v2610 = vld [vmem:[%s2597 + $0x60] sm:$0xff]
    %v2611 = vld [vmem:[%s2597 + $0x68] sm:$0xff]
    %v2612 = vld [vmem:[%s2597 + $0x70] sm:$0xff]
    %v2613 = vld [vmem:[%s2597 + $0x78] sm:$0xff]
    %2614 = vmatpush.msra.mxu0 %v2613
    %2615 = vmatpush.msra.mxu0 %v2612
    %2616 = vmatpush.msra.mxu0 %v2611
    %2617 = vmatpush.msra.mxu0 %v2610
    %2618 = vmatpush.msra.mxu0 %v2609
    %2619 = vmatpush.msra.mxu0 %v2608
    %2620 = vmatpush.msra.mxu0 %v2607
    %2621 = vmatpush.msra.mxu0 %v2606
    %2622 = vmatpush.msra.mxu0 %v2605
    %2623 = vmatpush.msra.mxu0 %v2604
    %2624 = vmatpush.msra.mxu0 %v2603
    %2625 = vmatpush.msra.mxu0 %v2602
    %2626 = vmatpush.msra.mxu0 %v2601
    %2627 = vmatpush.msra.mxu0 %v2600
    %2628 = vmatpush.msra.mxu0 %v2599
    %2629 = vmatpush.msra.mxu0 %v2598
    %2630 = vmatmul.f32.gmra.mxu0 %v2495
    %v2631 = vpop.f32.mrf.mxu0
    %v2632 = vadd.f32 0.0, %v2631
    %2633 = vmatmul.f32.gmra.mxu0 %v2498
    %v2634 = vpop.f32.mrf.mxu0
    %v2635 = vadd.f32 0.0, %v2634
    %2636 = vmatmul.f32.gmra.mxu0 %v2501
    %v2637 = vpop.f32.mrf.mxu0
    %v2638 = vadd.f32 0.0, %v2637
    %2639 = vmatmul.f32.gmra.mxu0 %v2504
    %v2640 = vpop.f32.mrf.mxu0
    %v2641 = vadd.f32 0.0, %v2640
    %2642 = vdwg.mxu0
    %v2643 = vadd.f32 %v2586, %v2632
    %v2644 = vadd.f32 %v2589, %v2635
    %v2645 = vadd.f32 %v2592, %v2638
    %v2646 = vadd.f32 %v2595, %v2641
    %v2647 = vld [vmem:[#allocation34] sm:$0x1]
    %v2649 = vperm.slane %v2647, 0
    %v2651 = vadd.f32 %v2643, %v2649
    %v2652 = vadd.f32 %v2644, %v2649
    %v2653 = vadd.f32 %v2645, %v2649
    %v2654 = vadd.f32 %v2646, %v2649
    %2655 = vmatpush.msra.mxu0 0.0
    %2656 = vmatpush.msra.mxu0 0.0
    %2657 = vmatpush.msra.mxu0 0.0
    %2658 = vmatpush.msra.mxu0 0.0
    %2659 = vmatpush.msra.mxu0 0.0
    %2660 = vmatpush.msra.mxu0 0.0
    %2661 = vmatpush.msra.mxu0 0.0
    %2662 = vmatpush.msra.mxu0 0.0
    %2663 = vmatpush.msra.mxu0 0.0
    %2664 = vmatpush.msra.mxu0 0.0
    %2665 = vmatpush.msra.mxu0 0.0
    %2666 = vmatpush.msra.mxu0 0.0
    %2667 = vmatpush.msra.mxu0 %v2654
    %2668 = vmatpush.msra.mxu0 %v2653
    %2669 = vmatpush.msra.mxu0 %v2652
    %2670 = vmatpush.msra.mxu0 %v2651
    %2671 = vmatmul.f32.gmra.mxu0 %v1738
    %v2672 = vpop.f32.mrf.mxu0
    %v2673 = vadd.f32 0.0, %v2672
    %2674 = vdwg.mxu0
    %v2675 = vld [vmem:[%s61] sm:$0xff]
    %v2676 = vld [vmem:[%s61 + $0x8] sm:$0xff]
    %v2677 = vld [vmem:[%s61 + $0x10] sm:$0xff]
    %v2678 = vld [vmem:[%s61 + $0x18] sm:$0xff]
    %v2679 = vld [vmem:[%s61 + $0x20] sm:$0xff]
    %v2680 = vld [vmem:[%s61 + $0x28] sm:$0xff]
    %v2681 = vld [vmem:[%s61 + $0x30] sm:$0xff]
    %v2682 = vld [vmem:[%s61 + $0x38] sm:$0xff]
    %v2683 = vld [vmem:[%s61 + $0x40] sm:$0xff]
    %v2684 = vld [vmem:[%s61 + $0x48] sm:$0xff]
    %v2685 = vld [vmem:[%s61 + $0x50] sm:$0xff]
    %v2686 = vld [vmem:[%s61 + $0x58] sm:$0xff]
    %v2687 = vld [vmem:[%s61 + $0x60] sm:$0xff]
    %v2688 = vld [vmem:[%s61 + $0x68] sm:$0xff]
    %v2689 = vld [vmem:[%s61 + $0x70] sm:$0xff]
    %v2690 = vld [vmem:[%s61 + $0x78] sm:$0xff]
    %2691 = vmatpush.msra.mxu0 %v2690
    %2692 = vmatpush.msra.mxu0 %v2689
    %2693 = vmatpush.msra.mxu0 %v2688
    %2694 = vmatpush.msra.mxu0 %v2687
    %2695 = vmatpush.msra.mxu0 %v2686
    %2696 = vmatpush.msra.mxu0 %v2685
    %2697 = vmatpush.msra.mxu0 %v2684
    %2698 = vmatpush.msra.mxu0 %v2683
    %2699 = vmatpush.msra.mxu0 %v2682
    %2700 = vmatpush.msra.mxu0 %v2681
    %2701 = vmatpush.msra.mxu0 %v2680
    %2702 = vmatpush.msra.mxu0 %v2679
    %2703 = vmatpush.msra.mxu0 %v2678
    %2704 = vmatpush.msra.mxu0 %v2677
    %2705 = vmatpush.msra.mxu0 %v2676
    %2706 = vmatpush.msra.mxu0 %v2675
    %2707 = vmatmul.f32.gmra.mxu0 %v2673
    %v2708 = vpop.f32.mrf.mxu0
    %v2709 = vadd.f32 0.0, %v2708
    %2710 = vdwg.mxu0
    %v2711 = vmax.f32 %v2709, 0.0
    %v2712 = vld [vmem:[#allocation35] sm:$0xff]
    %vm2713 = vcmask 64512
    %v2715 = vsel %vm2713, %v2711, 0
    %2717 = vmatpush.msra.mxu0 0.0
    %2718 = vmatpush.msra.mxu0 0.0
    %2719 = vmatpush.msra.mxu0 0.0
    %2720 = vmatpush.msra.mxu0 0.0
    %2721 = vmatpush.msra.mxu0 0.0
    %2722 = vmatpush.msra.mxu0 0.0
    %2723 = vmatpush.msra.mxu0 0.0
    %2724 = vmatpush.msra.mxu0 0.0
    %2725 = vmatpush.msra.mxu0 0.0
    %2726 = vmatpush.msra.mxu0 0.0
    %2727 = vmatpush.msra.mxu0 0.0
    %2728 = vmatpush.msra.mxu0 0.0
    %2729 = vmatpush.msra.mxu0 0.0
    %2730 = vmatpush.msra.mxu0 0.0
    %2731 = vmatpush.msra.mxu0 0.0
    %2732 = vmatpush.msra.mxu0 %v2712
    %2733 = vmatmul.f32.gmra.mxu0 %v2715
    %v2734 = vpop.f32.mrf.mxu0
    %v2735 = vadd.f32 0.0, %v2734
    %2736 = vdwg.mxu0
    %v2737 = vxor.u32 %v2735, 2147483648
    %v2738 = vmul.f32 %v2737, 1.442695
    %v2739 = vpow.pop %v2738
    %v2740 = vadd.f32 %v2739, 1.0
    %v2741 = vrcp.pop %v2740
    %v2742 = vmul.f32 %v2740, %v2741
    %v2743 = vsub.f32 1.0, %v2742
    %v2744 = vmul.f32 %v2741, %v2743
    %v2745 = vadd.f32 %v2741, %v2744
    %vm2746 = vweird.f32 %v2740
    %vm2747 = vweird.f32 %v2741
    %vm2748 = vmor %vm2746, %vm2747
    %v2749 = vsel %vm2748, %v2741, %v2745
    %v2750 = vand.u32 2147483647, %v2740
    %vm2751 = vcmp.eq.f32.partialorder %v2750, 8.507059e+37
    %v2752 = vand.u32 %v2740, 2147483648
    %v2753 = vor.u32 1.1754944e-38, %v2752
    %v2754 = vsel %vm2751, %v2753, %v2749
    %v2755 = vmul.f32 1.0, %v2754
    %v2756 = vld [vmem:[%s65] sm:$0xff]
    %v2757 = vld [vmem:[%s65 + $0x8] sm:$0xff]
    %v2758 = vld [vmem:[%s65 + $0x10] sm:$0xff]
    %v2759 = vld [vmem:[%s65 + $0x18] sm:$0xff]
    %v2760 = vld [vmem:[%s65 + $0x20] sm:$0xff]
    %v2761 = vld [vmem:[%s65 + $0x28] sm:$0xff]
    %v2762 = vld [vmem:[%s65 + $0x30] sm:$0xff]
    %v2763 = vld [vmem:[%s65 + $0x38] sm:$0xff]
    %v2764 = vld [vmem:[%s65 + $0x40] sm:$0xff]
    %v2765 = vld [vmem:[%s65 + $0x48] sm:$0xff]
    %v2766 = vld [vmem:[%s65 + $0x50] sm:$0xff]
    %v2767 = vld [vmem:[%s65 + $0x58] sm:$0xff]
    %v2768 = vld [vmem:[%s65 + $0x60] sm:$0xff]
    %v2769 = vld [vmem:[%s65 + $0x68] sm:$0xff]
    %v2770 = vld [vmem:[%s65 + $0x70] sm:$0xff]
    %v2771 = vld [vmem:[%s65 + $0x78] sm:$0xff]
    %2772 = vmatpush.msra.mxu0 %v2771
    %2773 = vmatpush.msra.mxu0 %v2770
    %2774 = vmatpush.msra.mxu0 %v2769
    %2775 = vmatpush.msra.mxu0 %v2768
    %2776 = vmatpush.msra.mxu0 %v2767
    %2777 = vmatpush.msra.mxu0 %v2766
    %2778 = vmatpush.msra.mxu0 %v2765
    %2779 = vmatpush.msra.mxu0 %v2764
    %2780 = vmatpush.msra.mxu0 %v2763
    %2781 = vmatpush.msra.mxu0 %v2762
    %2782 = vmatpush.msra.mxu0 %v2761
    %2783 = vmatpush.msra.mxu0 %v2760
    %2784 = vmatpush.msra.mxu0 %v2759
    %2785 = vmatpush.msra.mxu0 %v2758
    %2786 = vmatpush.msra.mxu0 %v2757
    %2787 = vmatpush.msra.mxu0 %v2756
    %2788 = vmatmul.f32.gmra.mxu0 %v2673
    %v2789 = vpop.f32.mrf.mxu0
    %v2790 = vadd.f32 0.0, %v2789
    %2791 = vdwg.mxu0
    %v2792 = vmax.f32 %v2790, 0.0
    %v2793 = vld [vmem:[#allocation37] sm:$0xff]
    %v2795 = vsel %vm2713, %v2792, 0
    %2797 = vmatpush.msra.mxu0 0.0
    %2798 = vmatpush.msra.mxu0 0.0
    %2799 = vmatpush.msra.mxu0 0.0
    %2800 = vmatpush.msra.mxu0 0.0
    %2801 = vmatpush.msra.mxu0 0.0
    %2802 = vmatpush.msra.mxu0 0.0
    %2803 = vmatpush.msra.mxu0 0.0
    %2804 = vmatpush.msra.mxu0 0.0
    %2805 = vmatpush.msra.mxu0 0.0
    %2806 = vmatpush.msra.mxu0 0.0
    %2807 = vmatpush.msra.mxu0 0.0
    %2808 = vmatpush.msra.mxu0 0.0
    %2809 = vmatpush.msra.mxu0 0.0
    %2810 = vmatpush.msra.mxu0 0.0
    %2811 = vmatpush.msra.mxu0 0.0
    %2812 = vmatpush.msra.mxu0 %v2793
    %2813 = vmatmul.f32.gmra.mxu0 %v2795
    %v2814 = vpop.f32.mrf.mxu0
    %v2815 = vadd.f32 0.0, %v2814
    %2816 = vdwg.mxu0
    %v2817 = vmax.f32 %v2815, 0.0
    %v2818 = vld [vmem:[#allocation38] sm:$0xff]
    %v2819 = vld [vmem:[#allocation38 + $0x8] sm:$0xff]
    %v2820 = vld [vmem:[#allocation38 + $0x10] sm:$0xff]
    %v2821 = vld [vmem:[#allocation38 + $0x18] sm:$0xff]
    %v2822 = vld [vmem:[#allocation38 + $0x20] sm:$0xff]
    %v2823 = vld [vmem:[#allocation38 + $0x28] sm:$0xff]
    %v2824 = vld [vmem:[#allocation38 + $0x30] sm:$0xff]
    %v2825 = vld [vmem:[#allocation38 + $0x38] sm:$0xff]
    %v2827 = vsel %vm1283, %v2817, 0
    %2829 = vmatpush.msra.mxu0 0.0
    %2830 = vmatpush.msra.mxu0 0.0
    %2831 = vmatpush.msra.mxu0 0.0
    %2832 = vmatpush.msra.mxu0 0.0
    %2833 = vmatpush.msra.mxu0 0.0
    %2834 = vmatpush.msra.mxu0 0.0
    %2835 = vmatpush.msra.mxu0 0.0
    %2836 = vmatpush.msra.mxu0 0.0
    %2837 = vmatpush.msra.mxu0 %v2825
    %2838 = vmatpush.msra.mxu0 %v2824
    %2839 = vmatpush.msra.mxu0 %v2823
    %2840 = vmatpush.msra.mxu0 %v2822
    %2841 = vmatpush.msra.mxu0 %v2821
    %2842 = vmatpush.msra.mxu0 %v2820
    %2843 = vmatpush.msra.mxu0 %v2819
    %2844 = vmatpush.msra.mxu0 %v2818
    %2845 = vmatmul.f32.gmra.mxu0 %v2827
    %v2846 = vpop.f32.mrf.mxu0
    %v2847 = vadd.f32 0.0, %v2846
    %2848 = vdwg.mxu0
    %v2849 = vxor.u32 %v2847, 2147483648
    %v2850 = vmul.f32 %v2849, 1.442695
    %v2851 = vpow.pop %v2850
    %v2852 = vadd.f32 %v2851, 1.0
    %v2853 = vrcp.pop %v2852
    %v2854 = vmul.f32 %v2852, %v2853
    %v2855 = vsub.f32 1.0, %v2854
    %v2856 = vmul.f32 %v2853, %v2855
    %v2857 = vadd.f32 %v2853, %v2856
    %vm2858 = vweird.f32 %v2852
    %vm2859 = vweird.f32 %v2853
    %vm2860 = vmor %vm2858, %vm2859
    %v2861 = vsel %vm2860, %v2853, %v2857
    %v2862 = vand.u32 2147483647, %v2852
    %vm2863 = vcmp.eq.f32.partialorder %v2862, 8.507059e+37
    %v2864 = vand.u32 %v2852, 2147483648
    %v2865 = vor.u32 1.1754944e-38, %v2864
    %v2866 = vsel %vm2863, %v2865, %v2861
    %v2867 = vmul.f32 1.0, %v2866
    %v2868 = vadd.f32 %v2755, %v2867
    %v2870 = vsel %vm1955, %v2868, 0
    %2872 = vmatpush.msra.mxu0 0.0
    %2873 = vmatpush.msra.mxu0 0.0
    %2874 = vmatpush.msra.mxu0 0.0
    %2875 = vmatpush.msra.mxu0 0.0
    %2876 = vmatpush.msra.mxu0 0.0
    %2877 = vmatpush.msra.mxu0 0.0
    %2878 = vmatpush.msra.mxu0 0.0
    %2879 = vmatpush.msra.mxu0 0.0
    %2880 = vmatpush.msra.mxu0 0.0
    %2881 = vmatpush.msra.mxu0 0.0
    %2882 = vmatpush.msra.mxu0 0.0
    %2883 = vmatpush.msra.mxu0 0.0
    %2884 = vmatpush.msra.mxu0 0.0
    %2885 = vmatpush.msra.mxu0 0.0
    %2886 = vmatpush.msra.mxu0 0.0
    %2887 = vmatpush.msra.mxu0 %v2870
    %2888 = vmatmul.f32.gmra.mxu0 %v1944
    %v2889 = vpop.f32.mrf.mxu0
    %v2890 = vadd.f32 0.0, %v2889
    %2891 = vmatmul.f32.gmra.mxu0 %v1947
    %v2892 = vpop.f32.mrf.mxu0
    %v2893 = vadd.f32 0.0, %v2892
    %2894 = vmatmul.f32.gmra.mxu0 %v1950
    %v2895 = vpop.f32.mrf.mxu0
    %v2896 = vadd.f32 0.0, %v2895
    %2897 = vmatmul.f32.gmra.mxu0 %v1953
    %v2898 = vpop.f32.mrf.mxu0
    %v2899 = vadd.f32 0.0, %v2898
    %2900 = vdwg.mxu0
    %v2901 = vmul.f32 %v2651, %v2890
    %v2902 = vmul.f32 %v2652, %v2893
    %v2903 = vmul.f32 %v2653, %v2896
    %v2904 = vmul.f32 %v2654, %v2899
    %v2905 = vadd.f32 %v2901, %v2038
    %v2906 = vadd.f32 %v2902, %v2041
    %v2907 = vadd.f32 %v2903, %v2044
    %v2908 = vadd.f32 %v2904, %v2047
    %v2909 = vld [vmem:[#allocation56] sm:$0xff]
    %v2910 = vld [vmem:[#allocation56 + $0x8] sm:$0xff]
    %v2911 = vld [vmem:[#allocation56 + $0x10] sm:$0xff]
    %v2912 = vld [vmem:[#allocation56 + $0x18] sm:$0xff]
    %v2913 = vld [vmem:[#allocation56 + $0x20] sm:$0xff]
    %v2914 = vld [vmem:[#allocation56 + $0x28] sm:$0xff]
    %v2915 = vld [vmem:[#allocation56 + $0x30] sm:$0xff]
    %v2916 = vld [vmem:[#allocation56 + $0x38] sm:$0xff]
    %v2917 = vld [vmem:[#allocation56 + $0x40] sm:$0xff]
    %v2918 = vld [vmem:[#allocation56 + $0x48] sm:$0xff]
    %v2919 = vld [vmem:[#allocation56 + $0x50] sm:$0xff]
    %v2920 = vld [vmem:[#allocation56 + $0x58] sm:$0xff]
    %v2921 = vld [vmem:[#allocation56 + $0x60] sm:$0xff]
    %v2922 = vld [vmem:[#allocation56 + $0x68] sm:$0xff]
    %v2923 = vld [vmem:[#allocation56 + $0x70] sm:$0xff]
    %v2924 = vld [vmem:[#allocation56 + $0x78] sm:$0xff]
    %v2925 = vld [vmem:[#allocation56 + $0x80] sm:$0xff]
    %v2926 = vld [vmem:[#allocation56 + $0x88] sm:$0xff]
    %v2927 = vld [vmem:[#allocation56 + $0x90] sm:$0xff]
    %v2928 = vld [vmem:[#allocation56 + $0x98] sm:$0xff]
    %v2929 = vld [vmem:[#allocation56 + $0xa0] sm:$0xff]
    %v2930 = vld [vmem:[#allocation56 + $0xa8] sm:$0xff]
    %v2931 = vld [vmem:[#allocation56 + $0xb0] sm:$0xff]
    %v2932 = vld [vmem:[#allocation56 + $0xb8] sm:$0xff]
    %v2933 = vld [vmem:[#allocation56 + $0xc0] sm:$0xff]
    %v2934 = vld [vmem:[#allocation56 + $0xc8] sm:$0xff]
    %v2935 = vld [vmem:[#allocation56 + $0xd0] sm:$0xff]
    %v2936 = vld [vmem:[#allocation56 + $0xd8] sm:$0xff]
    %v2937 = vld [vmem:[#allocation56 + $0xe0] sm:$0xff]
    %v2938 = vld [vmem:[#allocation56 + $0xe8] sm:$0xff]
    %v2939 = vld [vmem:[#allocation56 + $0xf0] sm:$0xff]
    %v2940 = vld [vmem:[#allocation56 + $0xf8] sm:$0xff]
    %v2941 = vld [vmem:[#allocation58] sm:$0x3]
    %v2943 = vperm.slane %v2941, 0
    %v2944 = vperm.slane %v2941, 1
    %2947 = vmatpush.msra.mxu0 %v2939
    %2948 = vmatpush.msra.mxu0 %v2937
    %2949 = vmatpush.msra.mxu0 %v2935
    %2950 = vmatpush.msra.mxu0 %v2933
    %2951 = vmatpush.msra.mxu0 %v2931
    %2952 = vmatpush.msra.mxu0 %v2929
    %2953 = vmatpush.msra.mxu0 %v2927
    %2954 = vmatpush.msra.mxu0 %v2925
    %2955 = vmatpush.msra.mxu0 %v2923
    %2956 = vmatpush.msra.mxu0 %v2921
    %2957 = vmatpush.msra.mxu0 %v2919
    %2958 = vmatpush.msra.mxu0 %v2917
    %2959 = vmatpush.msra.mxu0 %v2915
    %2960 = vmatpush.msra.mxu0 %v2913
    %2961 = vmatpush.msra.mxu0 %v2911
    %2962 = vmatpush.msra.mxu0 %v2909
    %2963 = vmatmul.f32.gmra.mxu0 %v2905
    %v2964 = vpop.f32.mrf.mxu0
    %v2965 = vadd.f32 %v2943, %v2964
    %2966 = vmatmul.f32.gmra.mxu0 %v2906
    %v2967 = vpop.f32.mrf.mxu0
    %v2968 = vadd.f32 %v2943, %v2967
    %2969 = vmatmul.f32.gmra.mxu0 %v2907
    %v2970 = vpop.f32.mrf.mxu0
    %v2971 = vadd.f32 %v2943, %v2970
    %2972 = vmatmul.f32.gmra.mxu0 %v2908
    %v2973 = vpop.f32.mrf.mxu0
    %v2974 = vadd.f32 %v2943, %v2973
    %2975 = vdwg.mxu0
    %2976 = vmatpush.msra.mxu0 %v2940
    %2977 = vmatpush.msra.mxu0 %v2938
    %2978 = vmatpush.msra.mxu0 %v2936
    %2979 = vmatpush.msra.mxu0 %v2934
    %2980 = vmatpush.msra.mxu0 %v2932
    %2981 = vmatpush.msra.mxu0 %v2930
    %2982 = vmatpush.msra.mxu0 %v2928
    %2983 = vmatpush.msra.mxu0 %v2926
    %2984 = vmatpush.msra.mxu0 %v2924
    %2985 = vmatpush.msra.mxu0 %v2922
    %2986 = vmatpush.msra.mxu0 %v2920
    %2987 = vmatpush.msra.mxu0 %v2918
    %2988 = vmatpush.msra.mxu0 %v2916
    %2989 = vmatpush.msra.mxu0 %v2914
    %2990 = vmatpush.msra.mxu0 %v2912
    %2991 = vmatpush.msra.mxu0 %v2910
    %2992 = vmatmul.f32.gmra.mxu0 %v2905
    %v2993 = vpop.f32.mrf.mxu0
    %v2994 = vadd.f32 %v2944, %v2993
    %2995 = vmatmul.f32.gmra.mxu0 %v2906
    %v2996 = vpop.f32.mrf.mxu0
    %v2997 = vadd.f32 %v2944, %v2996
    %2998 = vmatmul.f32.gmra.mxu0 %v2907
    %v2999 = vpop.f32.mrf.mxu0
    %v3000 = vadd.f32 %v2944, %v2999
    %3001 = vmatmul.f32.gmra.mxu0 %v2908
    %v3002 = vpop.f32.mrf.mxu0
    %v3003 = vadd.f32 %v2944, %v3002
    %3004 = vdwg.mxu0
    %3005 = vmatpush.msra.mxu0 0.0
    %3006 = vmatpush.msra.mxu0 0.0
    %3007 = vmatpush.msra.mxu0 0.0
    %3008 = vmatpush.msra.mxu0 0.0
    %3009 = vmatpush.msra.mxu0 0.0
    %3010 = vmatpush.msra.mxu0 0.0
    %3011 = vmatpush.msra.mxu0 0.0
    %3012 = vmatpush.msra.mxu0 0.0
    %3013 = vmatpush.msra.mxu0 0.0
    %3014 = vmatpush.msra.mxu0 0.0
    %3015 = vmatpush.msra.mxu0 0.0
    %3016 = vmatpush.msra.mxu0 0.0
    %3017 = vmatpush.msra.mxu0 %v2908
    %3018 = vmatpush.msra.mxu0 %v2907
    %3019 = vmatpush.msra.mxu0 %v2906
    %3020 = vmatpush.msra.mxu0 %v2905
    %3021 = vmatmul.f32.gmra.mxu0 %v1026
    %v3022 = vpop.f32.mrf.mxu0
    %v3023 = vadd.f32 0.0, %v3022
    %3024 = vdwg.mxu0
    %v3025 = vmul.f32 %v2905, %v2905
    %v3026 = vmul.f32 %v2906, %v2906
    %v3027 = vmul.f32 %v2907, %v2907
    %v3028 = vmul.f32 %v2908, %v2908
    %3029 = vmatpush.msra.mxu0 0.0
    %3030 = vmatpush.msra.mxu0 0.0
    %3031 = vmatpush.msra.mxu0 0.0
    %3032 = vmatpush.msra.mxu0 0.0
    %3033 = vmatpush.msra.mxu0 0.0
    %3034 = vmatpush.msra.mxu0 0.0
    %3035 = vmatpush.msra.mxu0 0.0
    %3036 = vmatpush.msra.mxu0 0.0
    %3037 = vmatpush.msra.mxu0 0.0
    %3038 = vmatpush.msra.mxu0 0.0
    %3039 = vmatpush.msra.mxu0 0.0
    %3040 = vmatpush.msra.mxu0 0.0
    %3041 = vmatpush.msra.mxu0 %v3028
    %3042 = vmatpush.msra.mxu0 %v3027
    %3043 = vmatpush.msra.mxu0 %v3026
    %3044 = vmatpush.msra.mxu0 %v3025
    %3045 = vmatmul.f32.gmra.mxu0 %v1026
    %v3046 = vpop.f32.mrf.mxu0
    %v3047 = vadd.f32 0.0, %v3046
    %3048 = vdwg.mxu0
    %v3049 = vmul.f32 %v3023, 0.03125
    %v3050 = vmul.f32 %v3047, 0.03125
    %v3051 = vmul.f32 %v3049, %v3049
    %v3052 = vsub.f32 %v3050, %v3051
    %v3053 = vmax.f32 %v3052, 0.0
    %v3054 = vperm.slane %v3049, 0
    %v3055 = vsub.f32 %v2905, %v3054
    %v3056 = vsub.f32 %v2906, %v3054
    %v3057 = vsub.f32 %v2907, %v3054
    %v3058 = vsub.f32 %v2908, %v3054
    %v3059 = vadd.f32 %v3053, 1e-05
    %v3060 = vrsqrt.pop %v3059
    %v3061 = vmul.f32 %v3060, %v3059
    %v3062 = vmul.f32 %v3061, %v3060
    %v3063 = vmul.f32 0.5, %v3062
    %v3064 = vsub.f32 1.5, %v3063
    %v3065 = vmul.f32 %v3060, %v3064
    %vm3066 = vweird.f32 %v3059
    %vm3067 = vweird.f32 %v3060
    %vm3068 = vmor %vm3066, %vm3067
    %v3069 = vsel %vm3068, %v3060, %v3065
    %v3070 = vperm.slane %v3069, 0
    %v3071 = vmul.f32 %v3055, %v3070
    %v3072 = vmul.f32 %v3056, %v3070
    %v3073 = vmul.f32 %v3057, %v3070
    %v3074 = vmul.f32 %v3058, %v3070
    %v3075 = vld [vmem:[#allocation43] sm:$0x1]
    %v3077 = vperm.slane %v3075, 0
    %v3079 = vmul.f32 %v3071, %v3077
    %v3080 = vmul.f32 %v3072, %v3077
    %v3081 = vmul.f32 %v3073, %v3077
    %v3082 = vmul.f32 %v3074, %v3077
    %v3083 = vld [vmem:[#allocation44] sm:$0x1]
    %v3085 = vperm.slane %v3083, 0
    %v3087 = vadd.f32 %v3079, %v3085
    %v3088 = vadd.f32 %v3080, %v3085
    %v3089 = vadd.f32 %v3081, %v3085
    %v3090 = vadd.f32 %v3082, %v3085
    %v3091 = vmax.f32 %v3087, 0.0
    %v3092 = vmax.f32 %v3088, 0.0
    %v3093 = vmax.f32 %v3089, 0.0
    %v3094 = vmax.f32 %v3090, 0.0
    %3095 = vmatpush.msra.mxu0 0.0
    %3096 = vmatpush.msra.mxu0 0.0
    %3097 = vmatpush.msra.mxu0 0.0
    %3098 = vmatpush.msra.mxu0 0.0
    %3099 = vmatpush.msra.mxu0 0.0
    %3100 = vmatpush.msra.mxu0 0.0
    %3101 = vmatpush.msra.mxu0 0.0
    %3102 = vmatpush.msra.mxu0 0.0
    %3103 = vmatpush.msra.mxu0 0.0
    %3104 = vmatpush.msra.mxu0 0.0
    %3105 = vmatpush.msra.mxu0 0.0
    %3106 = vmatpush.msra.mxu0 0.0
    %3107 = vmatpush.msra.mxu0 %v3094
    %3108 = vmatpush.msra.mxu0 %v3093
    %3109 = vmatpush.msra.mxu0 %v3092
    %3110 = vmatpush.msra.mxu0 %v3091
    %3111 = vmatmul.f32.gmra.mxu0 %v793
    %v3112 = vpop.f32.mrf.mxu0
    %v3113 = vadd.f32 0.0, %v3112
    %3114 = vmatmul.f32.gmra.mxu0 %v796
    %v3115 = vpop.f32.mrf.mxu0
    %v3116 = vadd.f32 0.0, %v3115
    %3117 = vmatmul.f32.gmra.mxu0 %v799
    %v3118 = vpop.f32.mrf.mxu0
    %v3119 = vadd.f32 0.0, %v3118
    %3120 = vmatmul.f32.gmra.mxu0 %v802
    %v3121 = vpop.f32.mrf.mxu0
    %v3122 = vadd.f32 0.0, %v3121
    %3123 = vdwg.mxu0
    %3124 = vmatpush.msra.mxu0 0.0
    %3125 = vmatpush.msra.mxu0 0.0
    %3126 = vmatpush.msra.mxu0 0.0
    %3127 = vmatpush.msra.mxu0 0.0
    %3128 = vmatpush.msra.mxu0 0.0
    %3129 = vmatpush.msra.mxu0 0.0
    %3130 = vmatpush.msra.mxu0 0.0
    %3131 = vmatpush.msra.mxu0 0.0
    %3132 = vmatpush.msra.mxu0 0.0
    %3133 = vmatpush.msra.mxu0 0.0
    %3134 = vmatpush.msra.mxu0 0.0
    %3135 = vmatpush.msra.mxu0 0.0
    %3136 = vmatpush.msra.mxu0 %v3094
    %3137 = vmatpush.msra.mxu0 %v3093
    %3138 = vmatpush.msra.mxu0 %v3092
    %3139 = vmatpush.msra.mxu0 %v3091
    %3140 = vmatmul.f32.gmra.mxu0 %v834
    %v3141 = vpop.f32.mrf.mxu0
    %v3142 = vadd.f32 0.0, %v3141
    %3143 = vmatmul.f32.gmra.mxu0 %v837
    %v3144 = vpop.f32.mrf.mxu0
    %v3145 = vadd.f32 0.0, %v3144
    %3146 = vmatmul.f32.gmra.mxu0 %v840
    %v3147 = vpop.f32.mrf.mxu0
    %v3148 = vadd.f32 0.0, %v3147
    %3149 = vmatmul.f32.gmra.mxu0 %v843
    %v3150 = vpop.f32.mrf.mxu0
    %v3151 = vadd.f32 0.0, %v3150
    %3152 = vdwg.mxu0
    %v3153 = vld [vmem:[%s79] sm:$0xff]
    %v3154 = vld [vmem:[%s79 + $0x8] sm:$0xff]
    %v3155 = vld [vmem:[%s79 + $0x10] sm:$0xff]
    %v3156 = vld [vmem:[%s79 + $0x18] sm:$0xff]
    %v3157 = vld [vmem:[%s79 + $0x20] sm:$0xff]
    %v3158 = vld [vmem:[%s79 + $0x28] sm:$0xff]
    %v3159 = vld [vmem:[%s79 + $0x30] sm:$0xff]
    %v3160 = vld [vmem:[%s79 + $0x38] sm:$0xff]
    %v3161 = vld [vmem:[%s79 + $0x40] sm:$0xff]
    %v3162 = vld [vmem:[%s79 + $0x48] sm:$0xff]
    %v3163 = vld [vmem:[%s79 + $0x50] sm:$0xff]
    %v3164 = vld [vmem:[%s79 + $0x58] sm:$0xff]
    %v3165 = vld [vmem:[%s79 + $0x60] sm:$0xff]
    %v3166 = vld [vmem:[%s79 + $0x68] sm:$0xff]
    %v3167 = vld [vmem:[%s79 + $0x70] sm:$0xff]
    %v3168 = vld [vmem:[%s79 + $0x78] sm:$0xff]
    %v3169 = vld [vmem:[%s79 + $0x80] sm:$0xff]
    %v3170 = vld [vmem:[%s79 + $0x88] sm:$0xff]
    %v3171 = vld [vmem:[%s79 + $0x90] sm:$0xff]
    %v3172 = vld [vmem:[%s79 + $0x98] sm:$0xff]
    %v3173 = vld [vmem:[%s79 + $0xa0] sm:$0xff]
    %v3174 = vld [vmem:[%s79 + $0xa8] sm:$0xff]
    %v3175 = vld [vmem:[%s79 + $0xb0] sm:$0xff]
    %v3176 = vld [vmem:[%s79 + $0xb8] sm:$0xff]
    %v3177 = vld [vmem:[%s79 + $0xc0] sm:$0xff]
    %v3178 = vld [vmem:[%s79 + $0xc8] sm:$0xff]
    %v3179 = vld [vmem:[%s79 + $0xd0] sm:$0xff]
    %v3180 = vld [vmem:[%s79 + $0xd8] sm:$0xff]
    %v3181 = vld [vmem:[%s79 + $0xe0] sm:$0xff]
    %v3182 = vld [vmem:[%s79 + $0xe8] sm:$0xff]
    %v3183 = vld [vmem:[%s79 + $0xf0] sm:$0xff]
    %v3184 = vld [vmem:[%s79 + $0xf8] sm:$0xff]
    %s3185 = scalar_lea.vmem %s79, 256
    %v3186 = vld [vmem:[%s3185] sm:$0xff]
    %v3187 = vld [vmem:[%s3185 + $0x8] sm:$0xff]
    %v3188 = vld [vmem:[%s3185 + $0x10] sm:$0xff]
    %v3189 = vld [vmem:[%s3185 + $0x18] sm:$0xff]
    %v3190 = vld [vmem:[%s3185 + $0x20] sm:$0xff]
    %v3191 = vld [vmem:[%s3185 + $0x28] sm:$0xff]
    %v3192 = vld [vmem:[%s3185 + $0x30] sm:$0xff]
    %v3193 = vld [vmem:[%s3185 + $0x38] sm:$0xff]
    %v3194 = vld [vmem:[%s3185 + $0x40] sm:$0xff]
    %v3195 = vld [vmem:[%s3185 + $0x48] sm:$0xff]
    %v3196 = vld [vmem:[%s3185 + $0x50] sm:$0xff]
    %v3197 = vld [vmem:[%s3185 + $0x58] sm:$0xff]
    %v3198 = vld [vmem:[%s3185 + $0x60] sm:$0xff]
    %v3199 = vld [vmem:[%s3185 + $0x68] sm:$0xff]
    %v3200 = vld [vmem:[%s3185 + $0x70] sm:$0xff]
    %v3201 = vld [vmem:[%s3185 + $0x78] sm:$0xff]
    %v3202 = vld [vmem:[%s3185 + $0x80] sm:$0xff]
    %v3203 = vld [vmem:[%s3185 + $0x88] sm:$0xff]
    %v3204 = vld [vmem:[%s3185 + $0x90] sm:$0xff]
    %v3205 = vld [vmem:[%s3185 + $0x98] sm:$0xff]
    %v3206 = vld [vmem:[%s3185 + $0xa0] sm:$0xff]
    %v3207 = vld [vmem:[%s3185 + $0xa8] sm:$0xff]
    %v3208 = vld [vmem:[%s3185 + $0xb0] sm:$0xff]
    %v3209 = vld [vmem:[%s3185 + $0xb8] sm:$0xff]
    %v3210 = vld [vmem:[%s3185 + $0xc0] sm:$0xff]
    %v3211 = vld [vmem:[%s3185 + $0xc8] sm:$0xff]
    %v3212 = vld [vmem:[%s3185 + $0xd0] sm:$0xff]
    %v3213 = vld [vmem:[%s3185 + $0xd8] sm:$0xff]
    %v3214 = vld [vmem:[%s3185 + $0xe0] sm:$0xff]
    %v3215 = vld [vmem:[%s3185 + $0xe8] sm:$0xff]
    %v3216 = vld [vmem:[%s3185 + $0xf0] sm:$0xff]
    %v3217 = vld [vmem:[%s3185 + $0xf8] sm:$0xff]
    %3218 = vmatpush.msra.mxu0 %v3216
    %3219 = vmatpush.msra.mxu0 %v3214
    %3220 = vmatpush.msra.mxu0 %v3212
    %3221 = vmatpush.msra.mxu0 %v3210
    %3222 = vmatpush.msra.mxu0 %v3208
    %3223 = vmatpush.msra.mxu0 %v3206
    %3224 = vmatpush.msra.mxu0 %v3204
    %3225 = vmatpush.msra.mxu0 %v3202
    %3226 = vmatpush.msra.mxu0 %v3200
    %3227 = vmatpush.msra.mxu0 %v3198
    %3228 = vmatpush.msra.mxu0 %v3196
    %3229 = vmatpush.msra.mxu0 %v3194
    %3230 = vmatpush.msra.mxu0 %v3192
    %3231 = vmatpush.msra.mxu0 %v3190
    %3232 = vmatpush.msra.mxu0 %v3188
    %3233 = vmatpush.msra.mxu0 %v3186
    %3234 = vmatmul.f32.gmra.mxu0 %v3091
    %v3235 = vpop.f32.mrf.mxu0
    %v3236 = vadd.f32 0.0, %v3235
    %3237 = vmatmul.f32.gmra.mxu0 %v3092
    %v3238 = vpop.f32.mrf.mxu0
    %v3239 = vadd.f32 0.0, %v3238
    %3240 = vmatmul.f32.gmra.mxu0 %v3093
    %v3241 = vpop.f32.mrf.mxu0
    %v3242 = vadd.f32 0.0, %v3241
    %3243 = vmatmul.f32.gmra.mxu0 %v3094
    %v3244 = vpop.f32.mrf.mxu0
    %v3245 = vadd.f32 0.0, %v3244
    %3246 = vdwg.mxu0
    %3247 = vmatpush.msra.mxu0 %v3217
    %3248 = vmatpush.msra.mxu0 %v3215
    %3249 = vmatpush.msra.mxu0 %v3213
    %3250 = vmatpush.msra.mxu0 %v3211
    %3251 = vmatpush.msra.mxu0 %v3209
    %3252 = vmatpush.msra.mxu0 %v3207
    %3253 = vmatpush.msra.mxu0 %v3205
    %3254 = vmatpush.msra.mxu0 %v3203
    %3255 = vmatpush.msra.mxu0 %v3201
    %3256 = vmatpush.msra.mxu0 %v3199
    %3257 = vmatpush.msra.mxu0 %v3197
    %3258 = vmatpush.msra.mxu0 %v3195
    %3259 = vmatpush.msra.mxu0 %v3193
    %3260 = vmatpush.msra.mxu0 %v3191
    %3261 = vmatpush.msra.mxu0 %v3189
    %3262 = vmatpush.msra.mxu0 %v3187
    %3263 = vmatmul.f32.gmra.mxu0 %v3091
    %v3264 = vpop.f32.mrf.mxu0
    %v3265 = vadd.f32 0.0, %v3264
    %3266 = vmatmul.f32.gmra.mxu0 %v3092
    %v3267 = vpop.f32.mrf.mxu0
    %v3268 = vadd.f32 0.0, %v3267
    %3269 = vmatmul.f32.gmra.mxu0 %v3093
    %v3270 = vpop.f32.mrf.mxu0
    %v3271 = vadd.f32 0.0, %v3270
    %3272 = vmatmul.f32.gmra.mxu0 %v3094
    %v3273 = vpop.f32.mrf.mxu0
    %v3274 = vadd.f32 0.0, %v3273
    %3275 = vdwg.mxu0
    %3276 = vmatpush.msra.mxu0 %v3183
    %3277 = vmatpush.msra.mxu0 %v3181
    %3278 = vmatpush.msra.mxu0 %v3179
    %3279 = vmatpush.msra.mxu0 %v3177
    %3280 = vmatpush.msra.mxu0 %v3175
    %3281 = vmatpush.msra.mxu0 %v3173
    %3282 = vmatpush.msra.mxu0 %v3171
    %3283 = vmatpush.msra.mxu0 %v3169
    %3284 = vmatpush.msra.mxu0 %v3167
    %3285 = vmatpush.msra.mxu0 %v3165
    %3286 = vmatpush.msra.mxu0 %v3163
    %3287 = vmatpush.msra.mxu0 %v3161
    %3288 = vmatpush.msra.mxu0 %v3159
    %3289 = vmatpush.msra.mxu0 %v3157
    %3290 = vmatpush.msra.mxu0 %v3155
    %3291 = vmatpush.msra.mxu0 %v3153
    %3292 = vmatmul.f32.gmra.mxu0 %v3113
    %v3293 = vpop.f32.mrf.mxu0
    %v3294 = vadd.f32 %v3236, %v3293
    %3295 = vmatmul.f32.gmra.mxu0 %v3116
    %v3296 = vpop.f32.mrf.mxu0
    %v3297 = vadd.f32 %v3239, %v3296
    %3298 = vmatmul.f32.gmra.mxu0 %v3119
    %v3299 = vpop.f32.mrf.mxu0
    %v3300 = vadd.f32 %v3242, %v3299
    %3301 = vmatmul.f32.gmra.mxu0 %v3122
    %v3302 = vpop.f32.mrf.mxu0
    %v3303 = vadd.f32 %v3245, %v3302
    %3304 = vdwg.mxu0
    %3305 = vmatpush.msra.mxu0 %v3184
    %3306 = vmatpush.msra.mxu0 %v3182
    %3307 = vmatpush.msra.mxu0 %v3180
    %3308 = vmatpush.msra.mxu0 %v3178
    %3309 = vmatpush.msra.mxu0 %v3176
    %3310 = vmatpush.msra.mxu0 %v3174
    %3311 = vmatpush.msra.mxu0 %v3172
    %3312 = vmatpush.msra.mxu0 %v3170
    %3313 = vmatpush.msra.mxu0 %v3168
    %3314 = vmatpush.msra.mxu0 %v3166
    %3315 = vmatpush.msra.mxu0 %v3164
    %3316 = vmatpush.msra.mxu0 %v3162
    %3317 = vmatpush.msra.mxu0 %v3160
    %3318 = vmatpush.msra.mxu0 %v3158
    %3319 = vmatpush.msra.mxu0 %v3156
    %3320 = vmatpush.msra.mxu0 %v3154
    %3321 = vmatmul.f32.gmra.mxu0 %v3113
    %v3322 = vpop.f32.mrf.mxu0
    %v3323 = vadd.f32 %v3265, %v3322
    %3324 = vmatmul.f32.gmra.mxu0 %v3116
    %v3325 = vpop.f32.mrf.mxu0
    %v3326 = vadd.f32 %v3268, %v3325
    %3327 = vmatmul.f32.gmra.mxu0 %v3119
    %v3328 = vpop.f32.mrf.mxu0
    %v3329 = vadd.f32 %v3271, %v3328
    %3330 = vmatmul.f32.gmra.mxu0 %v3122
    %v3331 = vpop.f32.mrf.mxu0
    %v3332 = vadd.f32 %v3274, %v3331
    %3333 = vdwg.mxu0
    %s3334 = scalar_lea.vmem %s79, 512
    %v3335 = vld [vmem:[%s3334] sm:$0xff]
    %v3336 = vld [vmem:[%s3334 + $0x8] sm:$0xff]
    %v3337 = vld [vmem:[%s3334 + $0x10] sm:$0xff]
    %v3338 = vld [vmem:[%s3334 + $0x18] sm:$0xff]
    %v3339 = vld [vmem:[%s3334 + $0x20] sm:$0xff]
    %v3340 = vld [vmem:[%s3334 + $0x28] sm:$0xff]
    %v3341 = vld [vmem:[%s3334 + $0x30] sm:$0xff]
    %v3342 = vld [vmem:[%s3334 + $0x38] sm:$0xff]
    %v3343 = vld [vmem:[%s3334 + $0x40] sm:$0xff]
    %v3344 = vld [vmem:[%s3334 + $0x48] sm:$0xff]
    %v3345 = vld [vmem:[%s3334 + $0x50] sm:$0xff]
    %v3346 = vld [vmem:[%s3334 + $0x58] sm:$0xff]
    %v3347 = vld [vmem:[%s3334 + $0x60] sm:$0xff]
    %v3348 = vld [vmem:[%s3334 + $0x68] sm:$0xff]
    %v3349 = vld [vmem:[%s3334 + $0x70] sm:$0xff]
    %v3350 = vld [vmem:[%s3334 + $0x78] sm:$0xff]
    %v3351 = vld [vmem:[%s3334 + $0x80] sm:$0xff]
    %v3352 = vld [vmem:[%s3334 + $0x88] sm:$0xff]
    %v3353 = vld [vmem:[%s3334 + $0x90] sm:$0xff]
    %v3354 = vld [vmem:[%s3334 + $0x98] sm:$0xff]
    %v3355 = vld [vmem:[%s3334 + $0xa0] sm:$0xff]
    %v3356 = vld [vmem:[%s3334 + $0xa8] sm:$0xff]
    %v3357 = vld [vmem:[%s3334 + $0xb0] sm:$0xff]
    %v3358 = vld [vmem:[%s3334 + $0xb8] sm:$0xff]
    %v3359 = vld [vmem:[%s3334 + $0xc0] sm:$0xff]
    %v3360 = vld [vmem:[%s3334 + $0xc8] sm:$0xff]
    %v3361 = vld [vmem:[%s3334 + $0xd0] sm:$0xff]
    %v3362 = vld [vmem:[%s3334 + $0xd8] sm:$0xff]
    %v3363 = vld [vmem:[%s3334 + $0xe0] sm:$0xff]
    %v3364 = vld [vmem:[%s3334 + $0xe8] sm:$0xff]
    %v3365 = vld [vmem:[%s3334 + $0xf0] sm:$0xff]
    %v3366 = vld [vmem:[%s3334 + $0xf8] sm:$0xff]
    %3367 = vmatpush.msra.mxu0 %v3365
    %3368 = vmatpush.msra.mxu0 %v3363
    %3369 = vmatpush.msra.mxu0 %v3361
    %3370 = vmatpush.msra.mxu0 %v3359
    %3371 = vmatpush.msra.mxu0 %v3357
    %3372 = vmatpush.msra.mxu0 %v3355
    %3373 = vmatpush.msra.mxu0 %v3353
    %3374 = vmatpush.msra.mxu0 %v3351
    %3375 = vmatpush.msra.mxu0 %v3349
    %3376 = vmatpush.msra.mxu0 %v3347
    %3377 = vmatpush.msra.mxu0 %v3345
    %3378 = vmatpush.msra.mxu0 %v3343
    %3379 = vmatpush.msra.mxu0 %v3341
    %3380 = vmatpush.msra.mxu0 %v3339
    %3381 = vmatpush.msra.mxu0 %v3337
    %3382 = vmatpush.msra.mxu0 %v3335
    %3383 = vmatmul.f32.gmra.mxu0 %v3142
    %v3384 = vpop.f32.mrf.mxu0
    %v3385 = vadd.f32 0.0, %v3384
    %3386 = vmatmul.f32.gmra.mxu0 %v3145
    %v3387 = vpop.f32.mrf.mxu0
    %v3388 = vadd.f32 0.0, %v3387
    %3389 = vmatmul.f32.gmra.mxu0 %v3148
    %v3390 = vpop.f32.mrf.mxu0
    %v3391 = vadd.f32 0.0, %v3390
    %3392 = vmatmul.f32.gmra.mxu0 %v3151
    %v3393 = vpop.f32.mrf.mxu0
    %v3394 = vadd.f32 0.0, %v3393
    %3395 = vdwg.mxu0
    %3396 = vmatpush.msra.mxu0 %v3366
    %3397 = vmatpush.msra.mxu0 %v3364
    %3398 = vmatpush.msra.mxu0 %v3362
    %3399 = vmatpush.msra.mxu0 %v3360
    %3400 = vmatpush.msra.mxu0 %v3358
    %3401 = vmatpush.msra.mxu0 %v3356
    %3402 = vmatpush.msra.mxu0 %v3354
    %3403 = vmatpush.msra.mxu0 %v3352
    %3404 = vmatpush.msra.mxu0 %v3350
    %3405 = vmatpush.msra.mxu0 %v3348
    %3406 = vmatpush.msra.mxu0 %v3346
    %3407 = vmatpush.msra.mxu0 %v3344
    %3408 = vmatpush.msra.mxu0 %v3342
    %3409 = vmatpush.msra.mxu0 %v3340
    %3410 = vmatpush.msra.mxu0 %v3338
    %3411 = vmatpush.msra.mxu0 %v3336
    %3412 = vmatmul.f32.gmra.mxu0 %v3142
    %v3413 = vpop.f32.mrf.mxu0
    %v3414 = vadd.f32 0.0, %v3413
    %3415 = vmatmul.f32.gmra.mxu0 %v3145
    %v3416 = vpop.f32.mrf.mxu0
    %v3417 = vadd.f32 0.0, %v3416
    %3418 = vmatmul.f32.gmra.mxu0 %v3148
    %v3419 = vpop.f32.mrf.mxu0
    %v3420 = vadd.f32 0.0, %v3419
    %3421 = vmatmul.f32.gmra.mxu0 %v3151
    %v3422 = vpop.f32.mrf.mxu0
    %v3423 = vadd.f32 0.0, %v3422
    %3424 = vdwg.mxu0
    %v3425 = vadd.f32 %v3294, %v3385
    %v3426 = vadd.f32 %v3323, %v3414
    %v3427 = vadd.f32 %v3297, %v3388
    %v3428 = vadd.f32 %v3326, %v3417
    %v3429 = vadd.f32 %v3300, %v3391
    %v3430 = vadd.f32 %v3329, %v3420
    %v3431 = vadd.f32 %v3303, %v3394
    %v3432 = vadd.f32 %v3332, %v3423
    %v3433 = vld [vmem:[#allocation46] sm:$0x3]
    %v3435 = vperm.slane %v3433, 0
    %v3436 = vperm.slane %v3433, 1
    %v3439 = vadd.f32 %v3425, %v3435
    %v3440 = vadd.f32 %v3426, %v3436
    %v3441 = vadd.f32 %v3427, %v3435
    %v3442 = vadd.f32 %v3428, %v3436
    %v3443 = vadd.f32 %v3429, %v3435
    %v3444 = vadd.f32 %v3430, %v3436
    %v3445 = vadd.f32 %v3431, %v3435
    %v3446 = vadd.f32 %v3432, %v3436
    %3447 = vmatpush.msra.mxu0 0.0
    %3448 = vmatpush.msra.mxu0 0.0
    %3449 = vmatpush.msra.mxu0 0.0
    %3450 = vmatpush.msra.mxu0 0.0
    %3451 = vmatpush.msra.mxu0 0.0
    %3452 = vmatpush.msra.mxu0 0.0
    %3453 = vmatpush.msra.mxu0 0.0
    %3454 = vmatpush.msra.mxu0 0.0
    %3455 = vmatpush.msra.mxu0 0.0
    %3456 = vmatpush.msra.mxu0 0.0
    %3457 = vmatpush.msra.mxu0 0.0
    %3458 = vmatpush.msra.mxu0 0.0
    %3459 = vmatpush.msra.mxu0 %v3445
    %3460 = vmatpush.msra.mxu0 %v3443
    %3461 = vmatpush.msra.mxu0 %v3441
    %3462 = vmatpush.msra.mxu0 %v3439
    %3463 = vmatmul.f32.gmra.mxu0 %v1026
    %v3464 = vpop.f32.mrf.mxu0
    %v3465 = vadd.f32 0.0, %v3464
    %3466 = vdwg.mxu0
    %3467 = vmatpush.msra.mxu0 0.0
    %3468 = vmatpush.msra.mxu0 0.0
    %3469 = vmatpush.msra.mxu0 0.0
    %3470 = vmatpush.msra.mxu0 0.0
    %3471 = vmatpush.msra.mxu0 0.0
    %3472 = vmatpush.msra.mxu0 0.0
    %3473 = vmatpush.msra.mxu0 0.0
    %3474 = vmatpush.msra.mxu0 0.0
    %3475 = vmatpush.msra.mxu0 0.0
    %3476 = vmatpush.msra.mxu0 0.0
    %3477 = vmatpush.msra.mxu0 0.0
    %3478 = vmatpush.msra.mxu0 0.0
    %3479 = vmatpush.msra.mxu0 %v3446
    %3480 = vmatpush.msra.mxu0 %v3444
    %3481 = vmatpush.msra.mxu0 %v3442
    %3482 = vmatpush.msra.mxu0 %v3440
    %3483 = vmatmul.f32.gmra.mxu0 %v1026
    %v3484 = vpop.f32.mrf.mxu0
    %v3485 = vadd.f32 0.0, %v3484
    %3486 = vdwg.mxu0
    %v3487 = vmul.f32 %v3439, %v3439
    %v3488 = vmul.f32 %v3440, %v3440
    %v3489 = vmul.f32 %v3441, %v3441
    %v3490 = vmul.f32 %v3442, %v3442
    %v3491 = vmul.f32 %v3443, %v3443
    %v3492 = vmul.f32 %v3444, %v3444
    %v3493 = vmul.f32 %v3445, %v3445
    %v3494 = vmul.f32 %v3446, %v3446
    %3495 = vmatpush.msra.mxu0 0.0
    %3496 = vmatpush.msra.mxu0 0.0
    %3497 = vmatpush.msra.mxu0 0.0
    %3498 = vmatpush.msra.mxu0 0.0
    %3499 = vmatpush.msra.mxu0 0.0
    %3500 = vmatpush.msra.mxu0 0.0
    %3501 = vmatpush.msra.mxu0 0.0
    %3502 = vmatpush.msra.mxu0 0.0
    %3503 = vmatpush.msra.mxu0 0.0
    %3504 = vmatpush.msra.mxu0 0.0
    %3505 = vmatpush.msra.mxu0 0.0
    %3506 = vmatpush.msra.mxu0 0.0
    %3507 = vmatpush.msra.mxu0 %v3493
    %3508 = vmatpush.msra.mxu0 %v3491
    %3509 = vmatpush.msra.mxu0 %v3489
    %3510 = vmatpush.msra.mxu0 %v3487
    %3511 = vmatmul.f32.gmra.mxu0 %v1026
    %v3512 = vpop.f32.mrf.mxu0
    %v3513 = vadd.f32 0.0, %v3512
    %3514 = vdwg.mxu0
    %3515 = vmatpush.msra.mxu0 0.0
    %3516 = vmatpush.msra.mxu0 0.0
    %3517 = vmatpush.msra.mxu0 0.0
    %3518 = vmatpush.msra.mxu0 0.0
    %3519 = vmatpush.msra.mxu0 0.0
    %3520 = vmatpush.msra.mxu0 0.0
    %3521 = vmatpush.msra.mxu0 0.0
    %3522 = vmatpush.msra.mxu0 0.0
    %3523 = vmatpush.msra.mxu0 0.0
    %3524 = vmatpush.msra.mxu0 0.0
    %3525 = vmatpush.msra.mxu0 0.0
    %3526 = vmatpush.msra.mxu0 0.0
    %3527 = vmatpush.msra.mxu0 %v3494
    %3528 = vmatpush.msra.mxu0 %v3492
    %3529 = vmatpush.msra.mxu0 %v3490
    %3530 = vmatpush.msra.mxu0 %v3488
    %3531 = vmatmul.f32.gmra.mxu0 %v1026
    %v3532 = vpop.f32.mrf.mxu0
    %v3533 = vadd.f32 0.0, %v3532
    %3534 = vdwg.mxu0
    %v3535 = vmul.f32 %v3465, 0.03125
    %v3536 = vmul.f32 %v3485, 0.03125
    %v3537 = vmul.f32 %v3513, 0.03125
    %v3538 = vmul.f32 %v3533, 0.03125
    %v3539 = vmul.f32 %v3535, %v3535
    %v3540 = vmul.f32 %v3536, %v3536
    %v3541 = vsub.f32 %v3537, %v3539
    %v3542 = vsub.f32 %v3538, %v3540
    %v3543 = vmax.f32 %v3541, 0.0
    %v3544 = vmax.f32 %v3542, 0.0
    %v3545 = vperm.slane %v3535, 0
    %v3546 = vperm.slane %v3536, 0
    %v3547 = vsub.f32 %v3439, %v3545
    %v3548 = vsub.f32 %v3440, %v3546
    %v3549 = vsub.f32 %v3441, %v3545
    %v3550 = vsub.f32 %v3442, %v3546
    %v3551 = vsub.f32 %v3443, %v3545
    %v3552 = vsub.f32 %v3444, %v3546
    %v3553 = vsub.f32 %v3445, %v3545
    %v3554 = vsub.f32 %v3446, %v3546
    %v3555 = vadd.f32 %v3543, 1e-05
    %v3556 = vadd.f32 %v3544, 1e-05
    %v3557 = vrsqrt.pop %v3555
    %v3558 = vmul.f32 %v3557, %v3555
    %v3559 = vmul.f32 %v3558, %v3557
    %v3560 = vmul.f32 0.5, %v3559
    %v3561 = vsub.f32 1.5, %v3560
    %v3562 = vmul.f32 %v3557, %v3561
    %vm3563 = vweird.f32 %v3555
    %vm3564 = vweird.f32 %v3557
    %vm3565 = vmor %vm3563, %vm3564
    %v3566 = vsel %vm3565, %v3557, %v3562
    %v3567 = vrsqrt.pop %v3556
    %v3568 = vmul.f32 %v3567, %v3556
    %v3569 = vmul.f32 %v3568, %v3567
    %v3570 = vmul.f32 0.5, %v3569
    %v3571 = vsub.f32 1.5, %v3570
    %v3572 = vmul.f32 %v3567, %v3571
    %vm3573 = vweird.f32 %v3556
    %vm3574 = vweird.f32 %v3567
    %vm3575 = vmor %vm3573, %vm3574
    %v3576 = vsel %vm3575, %v3567, %v3572
    %v3577 = vperm.slane %v3566, 0
    %v3578 = vperm.slane %v3576, 0
    %v3579 = vmul.f32 %v3547, %v3577
    %v3580 = vmul.f32 %v3548, %v3578
    %v3581 = vmul.f32 %v3549, %v3577
    %v3582 = vmul.f32 %v3550, %v3578
    %v3583 = vmul.f32 %v3551, %v3577
    %v3584 = vmul.f32 %v3552, %v3578
    %v3585 = vmul.f32 %v3553, %v3577
    %v3586 = vmul.f32 %v3554, %v3578
    %v3587 = vld [vmem:[#allocation47] sm:$0x3]
    %v3589 = vperm.slane %v3587, 0
    %v3590 = vperm.slane %v3587, 1
    %v3593 = vmul.f32 %v3579, %v3589
    %v3594 = vmul.f32 %v3580, %v3590
    %v3595 = vmul.f32 %v3581, %v3589
    %v3596 = vmul.f32 %v3582, %v3590
    %v3597 = vmul.f32 %v3583, %v3589
    %v3598 = vmul.f32 %v3584, %v3590
    %v3599 = vmul.f32 %v3585, %v3589
    %v3600 = vmul.f32 %v3586, %v3590
    %v3601 = vld [vmem:[#allocation49] sm:$0x3]
    %v3603 = vperm.slane %v3601, 0
    %v3604 = vperm.slane %v3601, 1
    %v3607 = vadd.f32 %v3593, %v3603
    %v3608 = vadd.f32 %v3594, %v3604
    %v3609 = vadd.f32 %v3595, %v3603
    %v3610 = vadd.f32 %v3596, %v3604
    %v3611 = vadd.f32 %v3597, %v3603
    %v3612 = vadd.f32 %v3598, %v3604
    %v3613 = vadd.f32 %v3599, %v3603
    %v3614 = vadd.f32 %v3600, %v3604
    %v3615 = vmax.f32 %v3607, 0.0
    %v3616 = vmax.f32 %v3608, 0.0
    %v3617 = vmax.f32 %v3609, 0.0
    %v3618 = vmax.f32 %v3610, 0.0
    %v3619 = vmax.f32 %v3611, 0.0
    %v3620 = vmax.f32 %v3612, 0.0
    %v3621 = vmax.f32 %v3613, 0.0
    %v3622 = vmax.f32 %v3614, 0.0
    %3623 = vmatpush.msra.mxu0 0.0
    %3624 = vmatpush.msra.mxu0 0.0
    %3625 = vmatpush.msra.mxu0 0.0
    %3626 = vmatpush.msra.mxu0 0.0
    %3627 = vmatpush.msra.mxu0 0.0
    %3628 = vmatpush.msra.mxu0 0.0
    %3629 = vmatpush.msra.mxu0 0.0
    %3630 = vmatpush.msra.mxu0 0.0
    %3631 = vmatpush.msra.mxu0 0.0
    %3632 = vmatpush.msra.mxu0 0.0
    %3633 = vmatpush.msra.mxu0 0.0
    %3634 = vmatpush.msra.mxu0 0.0
    %3635 = vmatpush.msra.mxu0 %v3621
    %3636 = vmatpush.msra.mxu0 %v3619
    %3637 = vmatpush.msra.mxu0 %v3617
    %3638 = vmatpush.msra.mxu0 %v3615
    %3639 = vmatmul.f32.gmra.mxu0 %v793
    %v3640 = vpop.f32.mrf.mxu0
    %v3641 = vadd.f32 0.0, %v3640
    %3642 = vmatmul.f32.gmra.mxu0 %v796
    %v3643 = vpop.f32.mrf.mxu0
    %v3644 = vadd.f32 0.0, %v3643
    %3645 = vmatmul.f32.gmra.mxu0 %v799
    %v3646 = vpop.f32.mrf.mxu0
    %v3647 = vadd.f32 0.0, %v3646
    %3648 = vmatmul.f32.gmra.mxu0 %v802
    %v3649 = vpop.f32.mrf.mxu0
    %v3650 = vadd.f32 0.0, %v3649
    %3651 = vdwg.mxu0
    %3652 = vmatpush.msra.mxu0 0.0
    %3653 = vmatpush.msra.mxu0 0.0
    %3654 = vmatpush.msra.mxu0 0.0
    %3655 = vmatpush.msra.mxu0 0.0
    %3656 = vmatpush.msra.mxu0 0.0
    %3657 = vmatpush.msra.mxu0 0.0
    %3658 = vmatpush.msra.mxu0 0.0
    %3659 = vmatpush.msra.mxu0 0.0
    %3660 = vmatpush.msra.mxu0 0.0
    %3661 = vmatpush.msra.mxu0 0.0
    %3662 = vmatpush.msra.mxu0 0.0
    %3663 = vmatpush.msra.mxu0 0.0
    %3664 = vmatpush.msra.mxu0 %v3622
    %3665 = vmatpush.msra.mxu0 %v3620
    %3666 = vmatpush.msra.mxu0 %v3618
    %3667 = vmatpush.msra.mxu0 %v3616
    %3668 = vmatmul.f32.gmra.mxu0 %v793
    %v3669 = vpop.f32.mrf.mxu0
    %v3670 = vadd.f32 0.0, %v3669
    %3671 = vmatmul.f32.gmra.mxu0 %v796
    %v3672 = vpop.f32.mrf.mxu0
    %v3673 = vadd.f32 0.0, %v3672
    %3674 = vmatmul.f32.gmra.mxu0 %v799
    %v3675 = vpop.f32.mrf.mxu0
    %v3676 = vadd.f32 0.0, %v3675
    %3677 = vmatmul.f32.gmra.mxu0 %v802
    %v3678 = vpop.f32.mrf.mxu0
    %v3679 = vadd.f32 0.0, %v3678
    %3680 = vdwg.mxu0
    %3681 = vmatpush.msra.mxu0 0.0
    %3682 = vmatpush.msra.mxu0 0.0
    %3683 = vmatpush.msra.mxu0 0.0
    %3684 = vmatpush.msra.mxu0 0.0
    %3685 = vmatpush.msra.mxu0 0.0
    %3686 = vmatpush.msra.mxu0 0.0
    %3687 = vmatpush.msra.mxu0 0.0
    %3688 = vmatpush.msra.mxu0 0.0
    %3689 = vmatpush.msra.mxu0 0.0
    %3690 = vmatpush.msra.mxu0 0.0
    %3691 = vmatpush.msra.mxu0 0.0
    %3692 = vmatpush.msra.mxu0 0.0
    %3693 = vmatpush.msra.mxu0 %v3621
    %3694 = vmatpush.msra.mxu0 %v3619
    %3695 = vmatpush.msra.mxu0 %v3617
    %3696 = vmatpush.msra.mxu0 %v3615
    %3697 = vmatmul.f32.gmra.mxu0 %v834
    %v3698 = vpop.f32.mrf.mxu0
    %v3699 = vadd.f32 0.0, %v3698
    %3700 = vmatmul.f32.gmra.mxu0 %v837
    %v3701 = vpop.f32.mrf.mxu0
    %v3702 = vadd.f32 0.0, %v3701
    %3703 = vmatmul.f32.gmra.mxu0 %v840
    %v3704 = vpop.f32.mrf.mxu0
    %v3705 = vadd.f32 0.0, %v3704
    %3706 = vmatmul.f32.gmra.mxu0 %v843
    %v3707 = vpop.f32.mrf.mxu0
    %v3708 = vadd.f32 0.0, %v3707
    %3709 = vdwg.mxu0
    %3710 = vmatpush.msra.mxu0 0.0
    %3711 = vmatpush.msra.mxu0 0.0
    %3712 = vmatpush.msra.mxu0 0.0
    %3713 = vmatpush.msra.mxu0 0.0
    %3714 = vmatpush.msra.mxu0 0.0
    %3715 = vmatpush.msra.mxu0 0.0
    %3716 = vmatpush.msra.mxu0 0.0
    %3717 = vmatpush.msra.mxu0 0.0
    %3718 = vmatpush.msra.mxu0 0.0
    %3719 = vmatpush.msra.mxu0 0.0
    %3720 = vmatpush.msra.mxu0 0.0
    %3721 = vmatpush.msra.mxu0 0.0
    %3722 = vmatpush.msra.mxu0 %v3622
    %3723 = vmatpush.msra.mxu0 %v3620
    %3724 = vmatpush.msra.mxu0 %v3618
    %3725 = vmatpush.msra.mxu0 %v3616
    %3726 = vmatmul.f32.gmra.mxu0 %v834
    %v3727 = vpop.f32.mrf.mxu0
    %v3728 = vadd.f32 0.0, %v3727
    %3729 = vmatmul.f32.gmra.mxu0 %v837
    %v3730 = vpop.f32.mrf.mxu0
    %v3731 = vadd.f32 0.0, %v3730
    %3732 = vmatmul.f32.gmra.mxu0 %v840
    %v3733 = vpop.f32.mrf.mxu0
    %v3734 = vadd.f32 0.0, %v3733
    %3735 = vmatmul.f32.gmra.mxu0 %v843
    %v3736 = vpop.f32.mrf.mxu0
    %v3737 = vadd.f32 0.0, %v3736
    %3738 = vdwg.mxu0
    %v3739 = vld [vmem:[#allocation50] sm:$0xff]
    %v3740 = vld [vmem:[#allocation50 + $0x8] sm:$0xff]
    %v3741 = vld [vmem:[#allocation50 + $0x10] sm:$0xff]
    %v3742 = vld [vmem:[#allocation50 + $0x18] sm:$0xff]
    %v3743 = vld [vmem:[#allocation50 + $0x20] sm:$0xff]
    %v3744 = vld [vmem:[#allocation50 + $0x28] sm:$0xff]
    %v3745 = vld [vmem:[#allocation50 + $0x30] sm:$0xff]
    %v3746 = vld [vmem:[#allocation50 + $0x38] sm:$0xff]
    %v3747 = vld [vmem:[#allocation50 + $0x40] sm:$0xff]
    %v3748 = vld [vmem:[#allocation50 + $0x48] sm:$0xff]
    %v3749 = vld [vmem:[#allocation50 + $0x50] sm:$0xff]
    %v3750 = vld [vmem:[#allocation50 + $0x58] sm:$0xff]
    %v3751 = vld [vmem:[#allocation50 + $0x60] sm:$0xff]
    %v3752 = vld [vmem:[#allocation50 + $0x68] sm:$0xff]
    %v3753 = vld [vmem:[#allocation50 + $0x70] sm:$0xff]
    %v3754 = vld [vmem:[#allocation50 + $0x78] sm:$0xff]
    %v3755 = vld [vmem:[#allocation50 + $0x80] sm:$0xff]
    %v3756 = vld [vmem:[#allocation50 + $0x88] sm:$0xff]
    %v3757 = vld [vmem:[#allocation50 + $0x90] sm:$0xff]
    %v3758 = vld [vmem:[#allocation50 + $0x98] sm:$0xff]
    %v3759 = vld [vmem:[#allocation50 + $0xa0] sm:$0xff]
    %v3760 = vld [vmem:[#allocation50 + $0xa8] sm:$0xff]
    %v3761 = vld [vmem:[#allocation50 + $0xb0] sm:$0xff]
    %v3762 = vld [vmem:[#allocation50 + $0xb8] sm:$0xff]
    %v3763 = vld [vmem:[#allocation50 + $0xc0] sm:$0xff]
    %v3764 = vld [vmem:[#allocation50 + $0xc8] sm:$0xff]
    %v3765 = vld [vmem:[#allocation50 + $0xd0] sm:$0xff]
    %v3766 = vld [vmem:[#allocation50 + $0xd8] sm:$0xff]
    %v3767 = vld [vmem:[#allocation50 + $0xe0] sm:$0xff]
    %v3768 = vld [vmem:[#allocation50 + $0xe8] sm:$0xff]
    %v3769 = vld [vmem:[#allocation50 + $0xf0] sm:$0xff]
    %v3770 = vld [vmem:[#allocation50 + $0xf8] sm:$0xff]
    %v3771 = vld [vmem:[#allocation50 + $0x100] sm:$0xff]
    %v3772 = vld [vmem:[#allocation50 + $0x108] sm:$0xff]
    %v3773 = vld [vmem:[#allocation50 + $0x110] sm:$0xff]
    %v3774 = vld [vmem:[#allocation50 + $0x118] sm:$0xff]
    %v3775 = vld [vmem:[#allocation50 + $0x120] sm:$0xff]
    %v3776 = vld [vmem:[#allocation50 + $0x128] sm:$0xff]
    %v3777 = vld [vmem:[#allocation50 + $0x130] sm:$0xff]
    %v3778 = vld [vmem:[#allocation50 + $0x138] sm:$0xff]
    %v3779 = vld [vmem:[#allocation50 + $0x140] sm:$0xff]
    %v3780 = vld [vmem:[#allocation50 + $0x148] sm:$0xff]
    %v3781 = vld [vmem:[#allocation50 + $0x150] sm:$0xff]
    %v3782 = vld [vmem:[#allocation50 + $0x158] sm:$0xff]
    %v3783 = vld [vmem:[#allocation50 + $0x160] sm:$0xff]
    %v3784 = vld [vmem:[#allocation50 + $0x168] sm:$0xff]
    %v3785 = vld [vmem:[#allocation50 + $0x170] sm:$0xff]
    %v3786 = vld [vmem:[#allocation50 + $0x178] sm:$0xff]
    %v3787 = vld [vmem:[#allocation50 + $0x180] sm:$0xff]
    %v3788 = vld [vmem:[#allocation50 + $0x188] sm:$0xff]
    %v3789 = vld [vmem:[#allocation50 + $0x190] sm:$0xff]
    %v3790 = vld [vmem:[#allocation50 + $0x198] sm:$0xff]
    %v3791 = vld [vmem:[#allocation50 + $0x1a0] sm:$0xff]
    %v3792 = vld [vmem:[#allocation50 + $0x1a8] sm:$0xff]
    %v3793 = vld [vmem:[#allocation50 + $0x1b0] sm:$0xff]
    %v3794 = vld [vmem:[#allocation50 + $0x1b8] sm:$0xff]
    %v3795 = vld [vmem:[#allocation50 + $0x1c0] sm:$0xff]
    %v3796 = vld [vmem:[#allocation50 + $0x1c8] sm:$0xff]
    %v3797 = vld [vmem:[#allocation50 + $0x1d0] sm:$0xff]
    %v3798 = vld [vmem:[#allocation50 + $0x1d8] sm:$0xff]
    %v3799 = vld [vmem:[#allocation50 + $0x1e0] sm:$0xff]
    %v3800 = vld [vmem:[#allocation50 + $0x1e8] sm:$0xff]
    %v3801 = vld [vmem:[#allocation50 + $0x1f0] sm:$0xff]
    %v3802 = vld [vmem:[#allocation50 + $0x1f8] sm:$0xff]
    %s3803 = scalar_lea.vmem [#allocation50], 512
    %v3804 = vld [vmem:[%s3803] sm:$0xff]
    %v3805 = vld [vmem:[%s3803 + $0x8] sm:$0xff]
    %v3806 = vld [vmem:[%s3803 + $0x10] sm:$0xff]
    %v3807 = vld [vmem:[%s3803 + $0x18] sm:$0xff]
    %v3808 = vld [vmem:[%s3803 + $0x20] sm:$0xff]
    %v3809 = vld [vmem:[%s3803 + $0x28] sm:$0xff]
    %v3810 = vld [vmem:[%s3803 + $0x30] sm:$0xff]
    %v3811 = vld [vmem:[%s3803 + $0x38] sm:$0xff]
    %v3812 = vld [vmem:[%s3803 + $0x40] sm:$0xff]
    %v3813 = vld [vmem:[%s3803 + $0x48] sm:$0xff]
    %v3814 = vld [vmem:[%s3803 + $0x50] sm:$0xff]
    %v3815 = vld [vmem:[%s3803 + $0x58] sm:$0xff]
    %v3816 = vld [vmem:[%s3803 + $0x60] sm:$0xff]
    %v3817 = vld [vmem:[%s3803 + $0x68] sm:$0xff]
    %v3818 = vld [vmem:[%s3803 + $0x70] sm:$0xff]
    %v3819 = vld [vmem:[%s3803 + $0x78] sm:$0xff]
    %v3820 = vld [vmem:[%s3803 + $0x80] sm:$0xff]
    %v3821 = vld [vmem:[%s3803 + $0x88] sm:$0xff]
    %v3822 = vld [vmem:[%s3803 + $0x90] sm:$0xff]
    %v3823 = vld [vmem:[%s3803 + $0x98] sm:$0xff]
    %v3824 = vld [vmem:[%s3803 + $0xa0] sm:$0xff]
    %v3825 = vld [vmem:[%s3803 + $0xa8] sm:$0xff]
    %v3826 = vld [vmem:[%s3803 + $0xb0] sm:$0xff]
    %v3827 = vld [vmem:[%s3803 + $0xb8] sm:$0xff]
    %v3828 = vld [vmem:[%s3803 + $0xc0] sm:$0xff]
    %v3829 = vld [vmem:[%s3803 + $0xc8] sm:$0xff]
    %v3830 = vld [vmem:[%s3803 + $0xd0] sm:$0xff]
    %v3831 = vld [vmem:[%s3803 + $0xd8] sm:$0xff]
    %v3832 = vld [vmem:[%s3803 + $0xe0] sm:$0xff]
    %v3833 = vld [vmem:[%s3803 + $0xe8] sm:$0xff]
    %v3834 = vld [vmem:[%s3803 + $0xf0] sm:$0xff]
    %v3835 = vld [vmem:[%s3803 + $0xf8] sm:$0xff]
    %v3836 = vld [vmem:[%s3803 + $0x100] sm:$0xff]
    %v3837 = vld [vmem:[%s3803 + $0x108] sm:$0xff]
    %v3838 = vld [vmem:[%s3803 + $0x110] sm:$0xff]
    %v3839 = vld [vmem:[%s3803 + $0x118] sm:$0xff]
    %v3840 = vld [vmem:[%s3803 + $0x120] sm:$0xff]
    %v3841 = vld [vmem:[%s3803 + $0x128] sm:$0xff]
    %v3842 = vld [vmem:[%s3803 + $0x130] sm:$0xff]
    %v3843 = vld [vmem:[%s3803 + $0x138] sm:$0xff]
    %v3844 = vld [vmem:[%s3803 + $0x140] sm:$0xff]
    %v3845 = vld [vmem:[%s3803 + $0x148] sm:$0xff]
    %v3846 = vld [vmem:[%s3803 + $0x150] sm:$0xff]
    %v3847 = vld [vmem:[%s3803 + $0x158] sm:$0xff]
    %v3848 = vld [vmem:[%s3803 + $0x160] sm:$0xff]
    %v3849 = vld [vmem:[%s3803 + $0x168] sm:$0xff]
    %v3850 = vld [vmem:[%s3803 + $0x170] sm:$0xff]
    %v3851 = vld [vmem:[%s3803 + $0x178] sm:$0xff]
    %v3852 = vld [vmem:[%s3803 + $0x180] sm:$0xff]
    %v3853 = vld [vmem:[%s3803 + $0x188] sm:$0xff]
    %v3854 = vld [vmem:[%s3803 + $0x190] sm:$0xff]
    %v3855 = vld [vmem:[%s3803 + $0x198] sm:$0xff]
    %v3856 = vld [vmem:[%s3803 + $0x1a0] sm:$0xff]
    %v3857 = vld [vmem:[%s3803 + $0x1a8] sm:$0xff]
    %v3858 = vld [vmem:[%s3803 + $0x1b0] sm:$0xff]
    %v3859 = vld [vmem:[%s3803 + $0x1b8] sm:$0xff]
    %v3860 = vld [vmem:[%s3803 + $0x1c0] sm:$0xff]
    %v3861 = vld [vmem:[%s3803 + $0x1c8] sm:$0xff]
    %v3862 = vld [vmem:[%s3803 + $0x1d0] sm:$0xff]
    %v3863 = vld [vmem:[%s3803 + $0x1d8] sm:$0xff]
    %v3864 = vld [vmem:[%s3803 + $0x1e0] sm:$0xff]
    %v3865 = vld [vmem:[%s3803 + $0x1e8] sm:$0xff]
    %v3866 = vld [vmem:[%s3803 + $0x1f0] sm:$0xff]
    %v3867 = vld [vmem:[%s3803 + $0x1f8] sm:$0xff]
    %3868 = vmatpush.msra.mxu0 %v3834
    %3869 = vmatpush.msra.mxu0 %v3832
    %3870 = vmatpush.msra.mxu0 %v3830
    %3871 = vmatpush.msra.mxu0 %v3828
    %3872 = vmatpush.msra.mxu0 %v3826
    %3873 = vmatpush.msra.mxu0 %v3824
    %3874 = vmatpush.msra.mxu0 %v3822
    %3875 = vmatpush.msra.mxu0 %v3820
    %3876 = vmatpush.msra.mxu0 %v3818
    %3877 = vmatpush.msra.mxu0 %v3816
    %3878 = vmatpush.msra.mxu0 %v3814
    %3879 = vmatpush.msra.mxu0 %v3812
    %3880 = vmatpush.msra.mxu0 %v3810
    %3881 = vmatpush.msra.mxu0 %v3808
    %3882 = vmatpush.msra.mxu0 %v3806
    %3883 = vmatpush.msra.mxu0 %v3804
    %3884 = vmatmul.f32.gmra.mxu0 %v3615
    %v3885 = vpop.f32.mrf.mxu0
    %v3886 = vadd.f32 0.0, %v3885
    %3887 = vmatmul.f32.gmra.mxu0 %v3617
    %v3888 = vpop.f32.mrf.mxu0
    %v3889 = vadd.f32 0.0, %v3888
    %3890 = vmatmul.f32.gmra.mxu0 %v3619
    %v3891 = vpop.f32.mrf.mxu0
    %v3892 = vadd.f32 0.0, %v3891
    %3893 = vmatmul.f32.gmra.mxu0 %v3621
    %v3894 = vpop.f32.mrf.mxu0
    %v3895 = vadd.f32 0.0, %v3894
    %3896 = vdwg.mxu0
    %3897 = vmatpush.msra.mxu0 %v3866
    %3898 = vmatpush.msra.mxu0 %v3864
    %3899 = vmatpush.msra.mxu0 %v3862
    %3900 = vmatpush.msra.mxu0 %v3860
    %3901 = vmatpush.msra.mxu0 %v3858
    %3902 = vmatpush.msra.mxu0 %v3856
    %3903 = vmatpush.msra.mxu0 %v3854
    %3904 = vmatpush.msra.mxu0 %v3852
    %3905 = vmatpush.msra.mxu0 %v3850
    %3906 = vmatpush.msra.mxu0 %v3848
    %3907 = vmatpush.msra.mxu0 %v3846
    %3908 = vmatpush.msra.mxu0 %v3844
    %3909 = vmatpush.msra.mxu0 %v3842
    %3910 = vmatpush.msra.mxu0 %v3840
    %3911 = vmatpush.msra.mxu0 %v3838
    %3912 = vmatpush.msra.mxu0 %v3836
    %3913 = vmatmul.f32.gmra.mxu0 %v3616
    %v3914 = vpop.f32.mrf.mxu0
    %v3915 = vadd.f32 %v3886, %v3914
    %3916 = vmatmul.f32.gmra.mxu0 %v3618
    %v3917 = vpop.f32.mrf.mxu0
    %v3918 = vadd.f32 %v3889, %v3917
    %3919 = vmatmul.f32.gmra.mxu0 %v3620
    %v3920 = vpop.f32.mrf.mxu0
    %v3921 = vadd.f32 %v3892, %v3920
    %3922 = vmatmul.f32.gmra.mxu0 %v3622
    %v3923 = vpop.f32.mrf.mxu0
    %v3924 = vadd.f32 %v3895, %v3923
    %3925 = vdwg.mxu0
    %3926 = vmatpush.msra.mxu0 %v3835
    %3927 = vmatpush.msra.mxu0 %v3833
    %3928 = vmatpush.msra.mxu0 %v3831
    %3929 = vmatpush.msra.mxu0 %v3829
    %3930 = vmatpush.msra.mxu0 %v3827
    %3931 = vmatpush.msra.mxu0 %v3825
    %3932 = vmatpush.msra.mxu0 %v3823
    %3933 = vmatpush.msra.mxu0 %v3821
    %3934 = vmatpush.msra.mxu0 %v3819
    %3935 = vmatpush.msra.mxu0 %v3817
    %3936 = vmatpush.msra.mxu0 %v3815
    %3937 = vmatpush.msra.mxu0 %v3813
    %3938 = vmatpush.msra.mxu0 %v3811
    %3939 = vmatpush.msra.mxu0 %v3809
    %3940 = vmatpush.msra.mxu0 %v3807
    %3941 = vmatpush.msra.mxu0 %v3805
    %3942 = vmatmul.f32.gmra.mxu0 %v3615
    %v3943 = vpop.f32.mrf.mxu0
    %v3944 = vadd.f32 0.0, %v3943
    %3945 = vmatmul.f32.gmra.mxu0 %v3617
    %v3946 = vpop.f32.mrf.mxu0
    %v3947 = vadd.f32 0.0, %v3946
    %3948 = vmatmul.f32.gmra.mxu0 %v3619
    %v3949 = vpop.f32.mrf.mxu0
    %v3950 = vadd.f32 0.0, %v3949
    %3951 = vmatmul.f32.gmra.mxu0 %v3621
    %v3952 = vpop.f32.mrf.mxu0
    %v3953 = vadd.f32 0.0, %v3952
    %3954 = vdwg.mxu0
    %3955 = vmatpush.msra.mxu0 %v3867
    %3956 = vmatpush.msra.mxu0 %v3865
    %3957 = vmatpush.msra.mxu0 %v3863
    %3958 = vmatpush.msra.mxu0 %v3861
    %3959 = vmatpush.msra.mxu0 %v3859
    %3960 = vmatpush.msra.mxu0 %v3857
    %3961 = vmatpush.msra.mxu0 %v3855
    %3962 = vmatpush.msra.mxu0 %v3853
    %3963 = vmatpush.msra.mxu0 %v3851
    %3964 = vmatpush.msra.mxu0 %v3849
    %3965 = vmatpush.msra.mxu0 %v3847
    %3966 = vmatpush.msra.mxu0 %v3845
    %3967 = vmatpush.msra.mxu0 %v3843
    %3968 = vmatpush.msra.mxu0 %v3841
    %3969 = vmatpush.msra.mxu0 %v3839
    %3970 = vmatpush.msra.mxu0 %v3837
    %3971 = vmatmul.f32.gmra.mxu0 %v3616
    %v3972 = vpop.f32.mrf.mxu0
    %v3973 = vadd.f32 %v3944, %v3972
    %3974 = vmatmul.f32.gmra.mxu0 %v3618
    %v3975 = vpop.f32.mrf.mxu0
    %v3976 = vadd.f32 %v3947, %v3975
    %3977 = vmatmul.f32.gmra.mxu0 %v3620
    %v3978 = vpop.f32.mrf.mxu0
    %v3979 = vadd.f32 %v3950, %v3978
    %3980 = vmatmul.f32.gmra.mxu0 %v3622
    %v3981 = vpop.f32.mrf.mxu0
    %v3982 = vadd.f32 %v3953, %v3981
    %3983 = vdwg.mxu0
    %3984 = vmatpush.msra.mxu0 %v3769
    %3985 = vmatpush.msra.mxu0 %v3767
    %3986 = vmatpush.msra.mxu0 %v3765
    %3987 = vmatpush.msra.mxu0 %v3763
    %3988 = vmatpush.msra.mxu0 %v3761
    %3989 = vmatpush.msra.mxu0 %v3759
    %3990 = vmatpush.msra.mxu0 %v3757
    %3991 = vmatpush.msra.mxu0 %v3755
    %3992 = vmatpush.msra.mxu0 %v3753
    %3993 = vmatpush.msra.mxu0 %v3751
    %3994 = vmatpush.msra.mxu0 %v3749
    %3995 = vmatpush.msra.mxu0 %v3747
    %3996 = vmatpush.msra.mxu0 %v3745
    %3997 = vmatpush.msra.mxu0 %v3743
    %3998 = vmatpush.msra.mxu0 %v3741
    %3999 = vmatpush.msra.mxu0 %v3739
    %4000 = vmatmul.f32.gmra.mxu0 %v3641
    %v4001 = vpop.f32.mrf.mxu0
    %v4002 = vadd.f32 %v3915, %v4001
    %4003 = vmatmul.f32.gmra.mxu0 %v3644
    %v4004 = vpop.f32.mrf.mxu0
    %v4005 = vadd.f32 %v3918, %v4004
    %4006 = vmatmul.f32.gmra.mxu0 %v3647
    %v4007 = vpop.f32.mrf.mxu0
    %v4008 = vadd.f32 %v3921, %v4007
    %4009 = vmatmul.f32.gmra.mxu0 %v3650
    %v4010 = vpop.f32.mrf.mxu0
    %v4011 = vadd.f32 %v3924, %v4010
    %4012 = vdwg.mxu0
    %4013 = vmatpush.msra.mxu0 %v3801
    %4014 = vmatpush.msra.mxu0 %v3799
    %4015 = vmatpush.msra.mxu0 %v3797
    %4016 = vmatpush.msra.mxu0 %v3795
    %4017 = vmatpush.msra.mxu0 %v3793
    %4018 = vmatpush.msra.mxu0 %v3791
    %4019 = vmatpush.msra.mxu0 %v3789
    %4020 = vmatpush.msra.mxu0 %v3787
    %4021 = vmatpush.msra.mxu0 %v3785
    %4022 = vmatpush.msra.mxu0 %v3783
    %4023 = vmatpush.msra.mxu0 %v3781
    %4024 = vmatpush.msra.mxu0 %v3779
    %4025 = vmatpush.msra.mxu0 %v3777
    %4026 = vmatpush.msra.mxu0 %v3775
    %4027 = vmatpush.msra.mxu0 %v3773
    %4028 = vmatpush.msra.mxu0 %v3771
    %4029 = vmatmul.f32.gmra.mxu0 %v3670
    %v4030 = vpop.f32.mrf.mxu0
    %v4031 = vadd.f32 %v4002, %v4030
    %4032 = vmatmul.f32.gmra.mxu0 %v3673
    %v4033 = vpop.f32.mrf.mxu0
    %v4034 = vadd.f32 %v4005, %v4033
    %4035 = vmatmul.f32.gmra.mxu0 %v3676
    %v4036 = vpop.f32.mrf.mxu0
    %v4037 = vadd.f32 %v4008, %v4036
    %4038 = vmatmul.f32.gmra.mxu0 %v3679
    %v4039 = vpop.f32.mrf.mxu0
    %v4040 = vadd.f32 %v4011, %v4039
    %4041 = vdwg.mxu0
    %4042 = vmatpush.msra.mxu0 %v3770
    %4043 = vmatpush.msra.mxu0 %v3768
    %4044 = vmatpush.msra.mxu0 %v3766
    %4045 = vmatpush.msra.mxu0 %v3764
    %4046 = vmatpush.msra.mxu0 %v3762
    %4047 = vmatpush.msra.mxu0 %v3760
    %4048 = vmatpush.msra.mxu0 %v3758
    %4049 = vmatpush.msra.mxu0 %v3756
    %4050 = vmatpush.msra.mxu0 %v3754
    %4051 = vmatpush.msra.mxu0 %v3752
    %4052 = vmatpush.msra.mxu0 %v3750
    %4053 = vmatpush.msra.mxu0 %v3748
    %4054 = vmatpush.msra.mxu0 %v3746
    %4055 = vmatpush.msra.mxu0 %v3744
    %4056 = vmatpush.msra.mxu0 %v3742
    %4057 = vmatpush.msra.mxu0 %v3740
    %4058 = vmatmul.f32.gmra.mxu0 %v3641
    %v4059 = vpop.f32.mrf.mxu0
    %v4060 = vadd.f32 %v3973, %v4059
    %4061 = vmatmul.f32.gmra.mxu0 %v3644
    %v4062 = vpop.f32.mrf.mxu0
    %v4063 = vadd.f32 %v3976, %v4062
    %4064 = vmatmul.f32.gmra.mxu0 %v3647
    %v4065 = vpop.f32.mrf.mxu0
    %v4066 = vadd.f32 %v3979, %v4065
    %4067 = vmatmul.f32.gmra.mxu0 %v3650
    %v4068 = vpop.f32.mrf.mxu0
    %v4069 = vadd.f32 %v3982, %v4068
    %4070 = vdwg.mxu0
    %4071 = vmatpush.msra.mxu0 %v3802
    %4072 = vmatpush.msra.mxu0 %v3800
    %4073 = vmatpush.msra.mxu0 %v3798
    %4074 = vmatpush.msra.mxu0 %v3796
    %4075 = vmatpush.msra.mxu0 %v3794
    %4076 = vmatpush.msra.mxu0 %v3792
    %4077 = vmatpush.msra.mxu0 %v3790
    %4078 = vmatpush.msra.mxu0 %v3788
    %4079 = vmatpush.msra.mxu0 %v3786
    %4080 = vmatpush.msra.mxu0 %v3784
    %4081 = vmatpush.msra.mxu0 %v3782
    %4082 = vmatpush.msra.mxu0 %v3780
    %4083 = vmatpush.msra.mxu0 %v3778
    %4084 = vmatpush.msra.mxu0 %v3776
    %4085 = vmatpush.msra.mxu0 %v3774
    %4086 = vmatpush.msra.mxu0 %v3772
    %4087 = vmatmul.f32.gmra.mxu0 %v3670
    %v4088 = vpop.f32.mrf.mxu0
    %v4089 = vadd.f32 %v4060, %v4088
    %4090 = vmatmul.f32.gmra.mxu0 %v3673
    %v4091 = vpop.f32.mrf.mxu0
    %v4092 = vadd.f32 %v4063, %v4091
    %4093 = vmatmul.f32.gmra.mxu0 %v3676
    %v4094 = vpop.f32.mrf.mxu0
    %v4095 = vadd.f32 %v4066, %v4094
    %4096 = vmatmul.f32.gmra.mxu0 %v3679
    %v4097 = vpop.f32.mrf.mxu0
    %v4098 = vadd.f32 %v4069, %v4097
    %4099 = vdwg.mxu0
    %s4100 = scalar_lea.vmem [#allocation50], 1024
    %v4101 = vld [vmem:[%s4100] sm:$0xff]
    %v4102 = vld [vmem:[%s4100 + $0x8] sm:$0xff]
    %v4103 = vld [vmem:[%s4100 + $0x10] sm:$0xff]
    %v4104 = vld [vmem:[%s4100 + $0x18] sm:$0xff]
    %v4105 = vld [vmem:[%s4100 + $0x20] sm:$0xff]
    %v4106 = vld [vmem:[%s4100 + $0x28] sm:$0xff]
    %v4107 = vld [vmem:[%s4100 + $0x30] sm:$0xff]
    %v4108 = vld [vmem:[%s4100 + $0x38] sm:$0xff]
    %v4109 = vld [vmem:[%s4100 + $0x40] sm:$0xff]
    %v4110 = vld [vmem:[%s4100 + $0x48] sm:$0xff]
    %v4111 = vld [vmem:[%s4100 + $0x50] sm:$0xff]
    %v4112 = vld [vmem:[%s4100 + $0x58] sm:$0xff]
    %v4113 = vld [vmem:[%s4100 + $0x60] sm:$0xff]
    %v4114 = vld [vmem:[%s4100 + $0x68] sm:$0xff]
    %v4115 = vld [vmem:[%s4100 + $0x70] sm:$0xff]
    %v4116 = vld [vmem:[%s4100 + $0x78] sm:$0xff]
    %v4117 = vld [vmem:[%s4100 + $0x80] sm:$0xff]
    %v4118 = vld [vmem:[%s4100 + $0x88] sm:$0xff]
    %v4119 = vld [vmem:[%s4100 + $0x90] sm:$0xff]
    %v4120 = vld [vmem:[%s4100 + $0x98] sm:$0xff]
    %v4121 = vld [vmem:[%s4100 + $0xa0] sm:$0xff]
    %v4122 = vld [vmem:[%s4100 + $0xa8] sm:$0xff]
    %v4123 = vld [vmem:[%s4100 + $0xb0] sm:$0xff]
    %v4124 = vld [vmem:[%s4100 + $0xb8] sm:$0xff]
    %v4125 = vld [vmem:[%s4100 + $0xc0] sm:$0xff]
    %v4126 = vld [vmem:[%s4100 + $0xc8] sm:$0xff]
    %v4127 = vld [vmem:[%s4100 + $0xd0] sm:$0xff]
    %v4128 = vld [vmem:[%s4100 + $0xd8] sm:$0xff]
    %v4129 = vld [vmem:[%s4100 + $0xe0] sm:$0xff]
    %v4130 = vld [vmem:[%s4100 + $0xe8] sm:$0xff]
    %v4131 = vld [vmem:[%s4100 + $0xf0] sm:$0xff]
    %v4132 = vld [vmem:[%s4100 + $0xf8] sm:$0xff]
    %v4133 = vld [vmem:[%s4100 + $0x100] sm:$0xff]
    %v4134 = vld [vmem:[%s4100 + $0x108] sm:$0xff]
    %v4135 = vld [vmem:[%s4100 + $0x110] sm:$0xff]
    %v4136 = vld [vmem:[%s4100 + $0x118] sm:$0xff]
    %v4137 = vld [vmem:[%s4100 + $0x120] sm:$0xff]
    %v4138 = vld [vmem:[%s4100 + $0x128] sm:$0xff]
    %v4139 = vld [vmem:[%s4100 + $0x130] sm:$0xff]
    %v4140 = vld [vmem:[%s4100 + $0x138] sm:$0xff]
    %v4141 = vld [vmem:[%s4100 + $0x140] sm:$0xff]
    %v4142 = vld [vmem:[%s4100 + $0x148] sm:$0xff]
    %v4143 = vld [vmem:[%s4100 + $0x150] sm:$0xff]
    %v4144 = vld [vmem:[%s4100 + $0x158] sm:$0xff]
    %v4145 = vld [vmem:[%s4100 + $0x160] sm:$0xff]
    %v4146 = vld [vmem:[%s4100 + $0x168] sm:$0xff]
    %v4147 = vld [vmem:[%s4100 + $0x170] sm:$0xff]
    %v4148 = vld [vmem:[%s4100 + $0x178] sm:$0xff]
    %v4149 = vld [vmem:[%s4100 + $0x180] sm:$0xff]
    %v4150 = vld [vmem:[%s4100 + $0x188] sm:$0xff]
    %v4151 = vld [vmem:[%s4100 + $0x190] sm:$0xff]
    %v4152 = vld [vmem:[%s4100 + $0x198] sm:$0xff]
    %v4153 = vld [vmem:[%s4100 + $0x1a0] sm:$0xff]
    %v4154 = vld [vmem:[%s4100 + $0x1a8] sm:$0xff]
    %v4155 = vld [vmem:[%s4100 + $0x1b0] sm:$0xff]
    %v4156 = vld [vmem:[%s4100 + $0x1b8] sm:$0xff]
    %v4157 = vld [vmem:[%s4100 + $0x1c0] sm:$0xff]
    %v4158 = vld [vmem:[%s4100 + $0x1c8] sm:$0xff]
    %v4159 = vld [vmem:[%s4100 + $0x1d0] sm:$0xff]
    %v4160 = vld [vmem:[%s4100 + $0x1d8] sm:$0xff]
    %v4161 = vld [vmem:[%s4100 + $0x1e0] sm:$0xff]
    %v4162 = vld [vmem:[%s4100 + $0x1e8] sm:$0xff]
    %v4163 = vld [vmem:[%s4100 + $0x1f0] sm:$0xff]
    %v4164 = vld [vmem:[%s4100 + $0x1f8] sm:$0xff]
    %4165 = vmatpush.msra.mxu0 %v4131
    %4166 = vmatpush.msra.mxu0 %v4129
    %4167 = vmatpush.msra.mxu0 %v4127
    %4168 = vmatpush.msra.mxu0 %v4125
    %4169 = vmatpush.msra.mxu0 %v4123
    %4170 = vmatpush.msra.mxu0 %v4121
    %4171 = vmatpush.msra.mxu0 %v4119
    %4172 = vmatpush.msra.mxu0 %v4117
    %4173 = vmatpush.msra.mxu0 %v4115
    %4174 = vmatpush.msra.mxu0 %v4113
    %4175 = vmatpush.msra.mxu0 %v4111
    %4176 = vmatpush.msra.mxu0 %v4109
    %4177 = vmatpush.msra.mxu0 %v4107
    %4178 = vmatpush.msra.mxu0 %v4105
    %4179 = vmatpush.msra.mxu0 %v4103
    %4180 = vmatpush.msra.mxu0 %v4101
    %4181 = vmatmul.f32.gmra.mxu0 %v3699
    %v4182 = vpop.f32.mrf.mxu0
    %v4183 = vadd.f32 0.0, %v4182
    %4184 = vmatmul.f32.gmra.mxu0 %v3702
    %v4185 = vpop.f32.mrf.mxu0
    %v4186 = vadd.f32 0.0, %v4185
    %4187 = vmatmul.f32.gmra.mxu0 %v3705
    %v4188 = vpop.f32.mrf.mxu0
    %v4189 = vadd.f32 0.0, %v4188
    %4190 = vmatmul.f32.gmra.mxu0 %v3708
    %v4191 = vpop.f32.mrf.mxu0
    %v4192 = vadd.f32 0.0, %v4191
    %4193 = vdwg.mxu0
    %4194 = vmatpush.msra.mxu0 %v4163
    %4195 = vmatpush.msra.mxu0 %v4161
    %4196 = vmatpush.msra.mxu0 %v4159
    %4197 = vmatpush.msra.mxu0 %v4157
    %4198 = vmatpush.msra.mxu0 %v4155
    %4199 = vmatpush.msra.mxu0 %v4153
    %4200 = vmatpush.msra.mxu0 %v4151
    %4201 = vmatpush.msra.mxu0 %v4149
    %4202 = vmatpush.msra.mxu0 %v4147
    %4203 = vmatpush.msra.mxu0 %v4145
    %4204 = vmatpush.msra.mxu0 %v4143
    %4205 = vmatpush.msra.mxu0 %v4141
    %4206 = vmatpush.msra.mxu0 %v4139
    %4207 = vmatpush.msra.mxu0 %v4137
    %4208 = vmatpush.msra.mxu0 %v4135
    %4209 = vmatpush.msra.mxu0 %v4133
    %4210 = vmatmul.f32.gmra.mxu0 %v3728
    %v4211 = vpop.f32.mrf.mxu0
    %v4212 = vadd.f32 %v4183, %v4211
    %4213 = vmatmul.f32.gmra.mxu0 %v3731
    %v4214 = vpop.f32.mrf.mxu0
    %v4215 = vadd.f32 %v4186, %v4214
    %4216 = vmatmul.f32.gmra.mxu0 %v3734
    %v4217 = vpop.f32.mrf.mxu0
    %v4218 = vadd.f32 %v4189, %v4217
    %4219 = vmatmul.f32.gmra.mxu0 %v3737
    %v4220 = vpop.f32.mrf.mxu0
    %v4221 = vadd.f32 %v4192, %v4220
    %4222 = vdwg.mxu0
    %4223 = vmatpush.msra.mxu0 %v4132
    %4224 = vmatpush.msra.mxu0 %v4130
    %4225 = vmatpush.msra.mxu0 %v4128
    %4226 = vmatpush.msra.mxu0 %v4126
    %4227 = vmatpush.msra.mxu0 %v4124
    %4228 = vmatpush.msra.mxu0 %v4122
    %4229 = vmatpush.msra.mxu0 %v4120
    %4230 = vmatpush.msra.mxu0 %v4118
    %4231 = vmatpush.msra.mxu0 %v4116
    %4232 = vmatpush.msra.mxu0 %v4114
    %4233 = vmatpush.msra.mxu0 %v4112
    %4234 = vmatpush.msra.mxu0 %v4110
    %4235 = vmatpush.msra.mxu0 %v4108
    %4236 = vmatpush.msra.mxu0 %v4106
    %4237 = vmatpush.msra.mxu0 %v4104
    %4238 = vmatpush.msra.mxu0 %v4102
    %4239 = vmatmul.f32.gmra.mxu0 %v3699
    %v4240 = vpop.f32.mrf.mxu0
    %v4241 = vadd.f32 0.0, %v4240
    %4242 = vmatmul.f32.gmra.mxu0 %v3702
    %v4243 = vpop.f32.mrf.mxu0
    %v4244 = vadd.f32 0.0, %v4243
    %4245 = vmatmul.f32.gmra.mxu0 %v3705
    %v4246 = vpop.f32.mrf.mxu0
    %v4247 = vadd.f32 0.0, %v4246
    %4248 = vmatmul.f32.gmra.mxu0 %v3708
    %v4249 = vpop.f32.mrf.mxu0
    %v4250 = vadd.f32 0.0, %v4249
    %4251 = vdwg.mxu0
    %4252 = vmatpush.msra.mxu0 %v4164
    %4253 = vmatpush.msra.mxu0 %v4162
    %4254 = vmatpush.msra.mxu0 %v4160
    %4255 = vmatpush.msra.mxu0 %v4158
    %4256 = vmatpush.msra.mxu0 %v4156
    %4257 = vmatpush.msra.mxu0 %v4154
    %4258 = vmatpush.msra.mxu0 %v4152
    %4259 = vmatpush.msra.mxu0 %v4150
    %4260 = vmatpush.msra.mxu0 %v4148
    %4261 = vmatpush.msra.mxu0 %v4146
    %4262 = vmatpush.msra.mxu0 %v4144
    %4263 = vmatpush.msra.mxu0 %v4142
    %4264 = vmatpush.msra.mxu0 %v4140
    %4265 = vmatpush.msra.mxu0 %v4138
    %4266 = vmatpush.msra.mxu0 %v4136
    %4267 = vmatpush.msra.mxu0 %v4134
    %4268 = vmatmul.f32.gmra.mxu0 %v3728
    %v4269 = vpop.f32.mrf.mxu0
    %v4270 = vadd.f32 %v4241, %v4269
    %4271 = vmatmul.f32.gmra.mxu0 %v3731
    %v4272 = vpop.f32.mrf.mxu0
    %v4273 = vadd.f32 %v4244, %v4272
    %4274 = vmatmul.f32.gmra.mxu0 %v3734
    %v4275 = vpop.f32.mrf.mxu0
    %v4276 = vadd.f32 %v4247, %v4275
    %4277 = vmatmul.f32.gmra.mxu0 %v3737
    %v4278 = vpop.f32.mrf.mxu0
    %v4279 = vadd.f32 %v4250, %v4278
    %4280 = vdwg.mxu0
    %v4281 = vadd.f32 %v4031, %v4212
    %v4282 = vadd.f32 %v4089, %v4270
    %v4283 = vadd.f32 %v4034, %v4215
    %v4284 = vadd.f32 %v4092, %v4273
    %v4285 = vadd.f32 %v4037, %v4218
    %v4286 = vadd.f32 %v4095, %v4276
    %v4287 = vadd.f32 %v4040, %v4221
    %v4288 = vadd.f32 %v4098, %v4279
    %v4289 = vld [vmem:[#allocation52] sm:$0x3]
    %v4291 = vperm.slane %v4289, 0
    %v4292 = vperm.slane %v4289, 1
    %v4295 = vadd.f32 %v4281, %v4291
    %v4296 = vadd.f32 %v4282, %v4292
    %v4297 = vadd.f32 %v4283, %v4291
    %v4298 = vadd.f32 %v4284, %v4292
    %v4299 = vadd.f32 %v4285, %v4291
    %v4300 = vadd.f32 %v4286, %v4292
    %v4301 = vadd.f32 %v4287, %v4291
    %v4302 = vadd.f32 %v4288, %v4292
    %4303 = vmatpush.msra.mxu0 0.0
    %4304 = vmatpush.msra.mxu0 0.0
    %4305 = vmatpush.msra.mxu0 0.0
    %4306 = vmatpush.msra.mxu0 0.0
    %4307 = vmatpush.msra.mxu0 0.0
    %4308 = vmatpush.msra.mxu0 0.0
    %4309 = vmatpush.msra.mxu0 0.0
    %4310 = vmatpush.msra.mxu0 0.0
    %4311 = vmatpush.msra.mxu0 0.0
    %4312 = vmatpush.msra.mxu0 0.0
    %4313 = vmatpush.msra.mxu0 0.0
    %4314 = vmatpush.msra.mxu0 0.0
    %4315 = vmatpush.msra.mxu0 %v4301
    %4316 = vmatpush.msra.mxu0 %v4299
    %4317 = vmatpush.msra.mxu0 %v4297
    %4318 = vmatpush.msra.mxu0 %v4295
    %4319 = vmatmul.f32.gmra.mxu0 %v1738
    %v4320 = vpop.f32.mrf.mxu0
    %v4321 = vadd.f32 0.0, %v4320
    %4322 = vdwg.mxu0
    %4323 = vmatpush.msra.mxu0 0.0
    %4324 = vmatpush.msra.mxu0 0.0
    %4325 = vmatpush.msra.mxu0 0.0
    %4326 = vmatpush.msra.mxu0 0.0
    %4327 = vmatpush.msra.mxu0 0.0
    %4328 = vmatpush.msra.mxu0 0.0
    %4329 = vmatpush.msra.mxu0 0.0
    %4330 = vmatpush.msra.mxu0 0.0
    %4331 = vmatpush.msra.mxu0 0.0
    %4332 = vmatpush.msra.mxu0 0.0
    %4333 = vmatpush.msra.mxu0 0.0
    %4334 = vmatpush.msra.mxu0 0.0
    %4335 = vmatpush.msra.mxu0 %v4302
    %4336 = vmatpush.msra.mxu0 %v4300
    %4337 = vmatpush.msra.mxu0 %v4298
    %4338 = vmatpush.msra.mxu0 %v4296
    %4339 = vmatmul.f32.gmra.mxu0 %v1738
    %v4340 = vpop.f32.mrf.mxu0
    %v4341 = vadd.f32 0.0, %v4340
    %4342 = vdwg.mxu0
    %v4343 = vld [vmem:[%s91] sm:$0xff]
    %v4344 = vld [vmem:[%s91 + $0x8] sm:$0xff]
    %v4345 = vld [vmem:[%s91 + $0x10] sm:$0xff]
    %v4346 = vld [vmem:[%s91 + $0x18] sm:$0xff]
    %v4347 = vld [vmem:[%s91 + $0x20] sm:$0xff]
    %v4348 = vld [vmem:[%s91 + $0x28] sm:$0xff]
    %v4349 = vld [vmem:[%s91 + $0x30] sm:$0xff]
    %v4350 = vld [vmem:[%s91 + $0x38] sm:$0xff]
    %v4351 = vld [vmem:[%s91 + $0x40] sm:$0xff]
    %v4352 = vld [vmem:[%s91 + $0x48] sm:$0xff]
    %v4353 = vld [vmem:[%s91 + $0x50] sm:$0xff]
    %v4354 = vld [vmem:[%s91 + $0x58] sm:$0xff]
    %v4355 = vld [vmem:[%s91 + $0x60] sm:$0xff]
    %v4356 = vld [vmem:[%s91 + $0x68] sm:$0xff]
    %v4357 = vld [vmem:[%s91 + $0x70] sm:$0xff]
    %v4358 = vld [vmem:[%s91 + $0x78] sm:$0xff]
    %v4359 = vld [vmem:[%s91 + $0x80] sm:$0xff]
    %v4360 = vld [vmem:[%s91 + $0x88] sm:$0xff]
    %v4361 = vld [vmem:[%s91 + $0x90] sm:$0xff]
    %v4362 = vld [vmem:[%s91 + $0x98] sm:$0xff]
    %v4363 = vld [vmem:[%s91 + $0xa0] sm:$0xff]
    %v4364 = vld [vmem:[%s91 + $0xa8] sm:$0xff]
    %v4365 = vld [vmem:[%s91 + $0xb0] sm:$0xff]
    %v4366 = vld [vmem:[%s91 + $0xb8] sm:$0xff]
    %v4367 = vld [vmem:[%s91 + $0xc0] sm:$0xff]
    %v4368 = vld [vmem:[%s91 + $0xc8] sm:$0xff]
    %v4369 = vld [vmem:[%s91 + $0xd0] sm:$0xff]
    %v4370 = vld [vmem:[%s91 + $0xd8] sm:$0xff]
    %v4371 = vld [vmem:[%s91 + $0xe0] sm:$0xff]
    %v4372 = vld [vmem:[%s91 + $0xe8] sm:$0xff]
    %v4373 = vld [vmem:[%s91 + $0xf0] sm:$0xff]
    %v4374 = vld [vmem:[%s91 + $0xf8] sm:$0xff]
    %4375 = vmatpush.msra.mxu0 %v4358
    %4376 = vmatpush.msra.mxu0 %v4357
    %4377 = vmatpush.msra.mxu0 %v4356
    %4378 = vmatpush.msra.mxu0 %v4355
    %4379 = vmatpush.msra.mxu0 %v4354
    %4380 = vmatpush.msra.mxu0 %v4353
    %4381 = vmatpush.msra.mxu0 %v4352
    %4382 = vmatpush.msra.mxu0 %v4351
    %4383 = vmatpush.msra.mxu0 %v4350
    %4384 = vmatpush.msra.mxu0 %v4349
    %4385 = vmatpush.msra.mxu0 %v4348
    %4386 = vmatpush.msra.mxu0 %v4347
    %4387 = vmatpush.msra.mxu0 %v4346
    %4388 = vmatpush.msra.mxu0 %v4345
    %4389 = vmatpush.msra.mxu0 %v4344
    %4390 = vmatpush.msra.mxu0 %v4343
    %4391 = vmatmul.f32.gmra.mxu0 %v4321
    %v4392 = vpop.f32.mrf.mxu0
    %v4393 = vadd.f32 0.0, %v4392
    %4394 = vdwg.mxu0
    %4395 = vmatpush.msra.mxu0 %v4374
    %4396 = vmatpush.msra.mxu0 %v4373
    %4397 = vmatpush.msra.mxu0 %v4372
    %4398 = vmatpush.msra.mxu0 %v4371
    %4399 = vmatpush.msra.mxu0 %v4370
    %4400 = vmatpush.msra.mxu0 %v4369
    %4401 = vmatpush.msra.mxu0 %v4368
    %4402 = vmatpush.msra.mxu0 %v4367
    %4403 = vmatpush.msra.mxu0 %v4366
    %4404 = vmatpush.msra.mxu0 %v4365
    %4405 = vmatpush.msra.mxu0 %v4364
    %4406 = vmatpush.msra.mxu0 %v4363
    %4407 = vmatpush.msra.mxu0 %v4362
    %4408 = vmatpush.msra.mxu0 %v4361
    %4409 = vmatpush.msra.mxu0 %v4360
    %4410 = vmatpush.msra.mxu0 %v4359
    %4411 = vmatmul.f32.gmra.mxu0 %v4341
    %v4412 = vpop.f32.mrf.mxu0
    %v4413 = vadd.f32 %v4393, %v4412
    %4414 = vdwg.mxu0
    %v4415 = vmax.f32 %v4413, 0.0
    %v4416 = vld [vmem:[#allocation53] sm:$0xff]
    %v4417 = vld [vmem:[#allocation53 + $0x8] sm:$0xff]
    %v4418 = vld [vmem:[#allocation53 + $0x10] sm:$0xff]
    %v4419 = vld [vmem:[#allocation53 + $0x18] sm:$0xff]
    %vm4420 = vcmask 130048
    %v4422 = vsel %vm4420, %v4415, 0
    %4424 = vmatpush.msra.mxu0 0.0
    %4425 = vmatpush.msra.mxu0 0.0
    %4426 = vmatpush.msra.mxu0 0.0
    %4427 = vmatpush.msra.mxu0 0.0
    %4428 = vmatpush.msra.mxu0 0.0
    %4429 = vmatpush.msra.mxu0 0.0
    %4430 = vmatpush.msra.mxu0 0.0
    %4431 = vmatpush.msra.mxu0 0.0
    %4432 = vmatpush.msra.mxu0 0.0
    %4433 = vmatpush.msra.mxu0 0.0
    %4434 = vmatpush.msra.mxu0 0.0
    %4435 = vmatpush.msra.mxu0 0.0
    %4436 = vmatpush.msra.mxu0 0.0
    %4437 = vmatpush.msra.mxu0 0.0
    %4438 = vmatpush.msra.mxu0 %v4418
    %4439 = vmatpush.msra.mxu0 %v4416
    %4440 = vmatmul.f32.gmra.mxu0 %v4422
    %v4441 = vpop.f32.mrf.mxu0
    %v4442 = vadd.f32 0.0, %v4441
    %4443 = vdwg.mxu0
    %4444 = vmatpush.msra.mxu0 0.0
    %4445 = vmatpush.msra.mxu0 0.0
    %4446 = vmatpush.msra.mxu0 0.0
    %4447 = vmatpush.msra.mxu0 0.0
    %4448 = vmatpush.msra.mxu0 0.0
    %4449 = vmatpush.msra.mxu0 0.0
    %4450 = vmatpush.msra.mxu0 0.0
    %4451 = vmatpush.msra.mxu0 0.0
    %4452 = vmatpush.msra.mxu0 0.0
    %4453 = vmatpush.msra.mxu0 0.0
    %4454 = vmatpush.msra.mxu0 0.0
    %4455 = vmatpush.msra.mxu0 0.0
    %4456 = vmatpush.msra.mxu0 0.0
    %4457 = vmatpush.msra.mxu0 0.0
    %4458 = vmatpush.msra.mxu0 %v4419
    %4459 = vmatpush.msra.mxu0 %v4417
    %4460 = vmatmul.f32.gmra.mxu0 %v4422
    %v4461 = vpop.f32.mrf.mxu0
    %v4462 = vadd.f32 0.0, %v4461
    %4463 = vdwg.mxu0
    %v4464 = vxor.u32 %v4442, 2147483648
    %v4465 = vxor.u32 %v4462, 2147483648
    %v4466 = vmul.f32 %v4464, 1.442695
    %v4467 = vpow.pop %v4466
    %v4468 = vmul.f32 %v4465, 1.442695
    %v4469 = vpow.pop %v4468
    %v4470 = vadd.f32 %v4467, 1.0
    %v4471 = vadd.f32 %v4469, 1.0
    %v4472 = vrcp.pop %v4470
    %v4473 = vmul.f32 %v4470, %v4472
    %v4474 = vsub.f32 1.0, %v4473
    %v4475 = vmul.f32 %v4472, %v4474
    %v4476 = vadd.f32 %v4472, %v4475
    %vm4477 = vweird.f32 %v4470
    %vm4478 = vweird.f32 %v4472
    %vm4479 = vmor %vm4477, %vm4478
    %v4480 = vsel %vm4479, %v4472, %v4476
    %v4481 = vand.u32 2147483647, %v4470
    %vm4482 = vcmp.eq.f32.partialorder %v4481, 8.507059e+37
    %v4483 = vand.u32 %v4470, 2147483648
    %v4484 = vor.u32 1.1754944e-38, %v4483
    %v4485 = vsel %vm4482, %v4484, %v4480
    %v4486 = vmul.f32 1.0, %v4485
    %v4487 = vrcp.pop %v4471
    %v4488 = vmul.f32 %v4471, %v4487
    %v4489 = vsub.f32 1.0, %v4488
    %v4490 = vmul.f32 %v4487, %v4489
    %v4491 = vadd.f32 %v4487, %v4490
    %vm4492 = vweird.f32 %v4471
    %vm4493 = vweird.f32 %v4487
    %vm4494 = vmor %vm4492, %vm4493
    %v4495 = vsel %vm4494, %v4487, %v4491
    %v4496 = vand.u32 2147483647, %v4471
    %vm4497 = vcmp.eq.f32.partialorder %v4496, 8.507059e+37
    %v4498 = vand.u32 %v4471, 2147483648
    %v4499 = vor.u32 1.1754944e-38, %v4498
    %v4500 = vsel %vm4497, %v4499, %v4495
    %v4501 = vmul.f32 1.0, %v4500
    %v4502 = vld [vmem:[%s95] sm:$0xff]
    %v4503 = vld [vmem:[%s95 + $0x8] sm:$0xff]
    %v4504 = vld [vmem:[%s95 + $0x10] sm:$0xff]
    %v4505 = vld [vmem:[%s95 + $0x18] sm:$0xff]
    %v4506 = vld [vmem:[%s95 + $0x20] sm:$0xff]
    %v4507 = vld [vmem:[%s95 + $0x28] sm:$0xff]
    %v4508 = vld [vmem:[%s95 + $0x30] sm:$0xff]
    %v4509 = vld [vmem:[%s95 + $0x38] sm:$0xff]
    %v4510 = vld [vmem:[%s95 + $0x40] sm:$0xff]
    %v4511 = vld [vmem:[%s95 + $0x48] sm:$0xff]
    %v4512 = vld [vmem:[%s95 + $0x50] sm:$0xff]
    %v4513 = vld [vmem:[%s95 + $0x58] sm:$0xff]
    %v4514 = vld [vmem:[%s95 + $0x60] sm:$0xff]
    %v4515 = vld [vmem:[%s95 + $0x68] sm:$0xff]
    %v4516 = vld [vmem:[%s95 + $0x70] sm:$0xff]
    %v4517 = vld [vmem:[%s95 + $0x78] sm:$0xff]
    %v4518 = vld [vmem:[%s95 + $0x80] sm:$0xff]
    %v4519 = vld [vmem:[%s95 + $0x88] sm:$0xff]
    %v4520 = vld [vmem:[%s95 + $0x90] sm:$0xff]
    %v4521 = vld [vmem:[%s95 + $0x98] sm:$0xff]
    %v4522 = vld [vmem:[%s95 + $0xa0] sm:$0xff]
    %v4523 = vld [vmem:[%s95 + $0xa8] sm:$0xff]
    %v4524 = vld [vmem:[%s95 + $0xb0] sm:$0xff]
    %v4525 = vld [vmem:[%s95 + $0xb8] sm:$0xff]
    %v4526 = vld [vmem:[%s95 + $0xc0] sm:$0xff]
    %v4527 = vld [vmem:[%s95 + $0xc8] sm:$0xff]
    %v4528 = vld [vmem:[%s95 + $0xd0] sm:$0xff]
    %v4529 = vld [vmem:[%s95 + $0xd8] sm:$0xff]
    %v4530 = vld [vmem:[%s95 + $0xe0] sm:$0xff]
    %v4531 = vld [vmem:[%s95 + $0xe8] sm:$0xff]
    %v4532 = vld [vmem:[%s95 + $0xf0] sm:$0xff]
    %v4533 = vld [vmem:[%s95 + $0xf8] sm:$0xff]
    %4534 = vmatpush.msra.mxu0 %v4517
    %4535 = vmatpush.msra.mxu0 %v4516
    %4536 = vmatpush.msra.mxu0 %v4515
    %4537 = vmatpush.msra.mxu0 %v4514
    %4538 = vmatpush.msra.mxu0 %v4513
    %4539 = vmatpush.msra.mxu0 %v4512
    %4540 = vmatpush.msra.mxu0 %v4511
    %4541 = vmatpush.msra.mxu0 %v4510
    %4542 = vmatpush.msra.mxu0 %v4509
    %4543 = vmatpush.msra.mxu0 %v4508
    %4544 = vmatpush.msra.mxu0 %v4507
    %4545 = vmatpush.msra.mxu0 %v4506
    %4546 = vmatpush.msra.mxu0 %v4505
    %4547 = vmatpush.msra.mxu0 %v4504
    %4548 = vmatpush.msra.mxu0 %v4503
    %4549 = vmatpush.msra.mxu0 %v4502
    %4550 = vmatmul.f32.gmra.mxu0 %v4321
    %v4551 = vpop.f32.mrf.mxu0
    %v4552 = vadd.f32 0.0, %v4551
    %4553 = vdwg.mxu0
    %4554 = vmatpush.msra.mxu0 %v4533
    %4555 = vmatpush.msra.mxu0 %v4532
    %4556 = vmatpush.msra.mxu0 %v4531
    %4557 = vmatpush.msra.mxu0 %v4530
    %4558 = vmatpush.msra.mxu0 %v4529
    %4559 = vmatpush.msra.mxu0 %v4528
    %4560 = vmatpush.msra.mxu0 %v4527
    %4561 = vmatpush.msra.mxu0 %v4526
    %4562 = vmatpush.msra.mxu0 %v4525
    %4563 = vmatpush.msra.mxu0 %v4524
    %4564 = vmatpush.msra.mxu0 %v4523
    %4565 = vmatpush.msra.mxu0 %v4522
    %4566 = vmatpush.msra.mxu0 %v4521
    %4567 = vmatpush.msra.mxu0 %v4520
    %4568 = vmatpush.msra.mxu0 %v4519
    %4569 = vmatpush.msra.mxu0 %v4518
    %4570 = vmatmul.f32.gmra.mxu0 %v4341
    %v4571 = vpop.f32.mrf.mxu0
    %v4572 = vadd.f32 %v4552, %v4571
    %4573 = vdwg.mxu0
    %v4574 = vmax.f32 %v4572, 0.0
    %v4575 = vld [vmem:[%s97] sm:$0xff]
    %v4576 = vld [vmem:[%s97 + $0x8] sm:$0xff]
    %v4578 = vsel %vm4420, %v4574, 0
    %4580 = vmatpush.msra.mxu0 0.0
    %4581 = vmatpush.msra.mxu0 0.0
    %4582 = vmatpush.msra.mxu0 0.0
    %4583 = vmatpush.msra.mxu0 0.0
    %4584 = vmatpush.msra.mxu0 0.0
    %4585 = vmatpush.msra.mxu0 0.0
    %4586 = vmatpush.msra.mxu0 0.0
    %4587 = vmatpush.msra.mxu0 0.0
    %4588 = vmatpush.msra.mxu0 0.0
    %4589 = vmatpush.msra.mxu0 0.0
    %4590 = vmatpush.msra.mxu0 0.0
    %4591 = vmatpush.msra.mxu0 0.0
    %4592 = vmatpush.msra.mxu0 0.0
    %4593 = vmatpush.msra.mxu0 0.0
    %4594 = vmatpush.msra.mxu0 %v4576
    %4595 = vmatpush.msra.mxu0 %v4575
    %4596 = vmatmul.f32.gmra.mxu0 %v4578
    %v4597 = vpop.f32.mrf.mxu0
    %v4598 = vadd.f32 0.0, %v4597
    %4599 = vdwg.mxu0
    %v4600 = vmax.f32 %v4598, 0.0
    %v4601 = vld [vmem:[#allocation55] sm:$0xff]
    %v4602 = vld [vmem:[#allocation55 + $0x8] sm:$0xff]
    %v4603 = vld [vmem:[#allocation55 + $0x10] sm:$0xff]
    %v4604 = vld [vmem:[#allocation55 + $0x18] sm:$0xff]
    %v4605 = vld [vmem:[#allocation55 + $0x20] sm:$0xff]
    %v4606 = vld [vmem:[#allocation55 + $0x28] sm:$0xff]
    %v4607 = vld [vmem:[#allocation55 + $0x30] sm:$0xff]
    %v4608 = vld [vmem:[#allocation55 + $0x38] sm:$0xff]
    %v4609 = vld [vmem:[#allocation55 + $0x40] sm:$0xff]
    %v4610 = vld [vmem:[#allocation55 + $0x48] sm:$0xff]
    %v4611 = vld [vmem:[#allocation55 + $0x50] sm:$0xff]
    %v4612 = vld [vmem:[#allocation55 + $0x58] sm:$0xff]
    %v4613 = vld [vmem:[#allocation55 + $0x60] sm:$0xff]
    %v4614 = vld [vmem:[#allocation55 + $0x68] sm:$0xff]
    %v4615 = vld [vmem:[#allocation55 + $0x70] sm:$0xff]
    %v4616 = vld [vmem:[#allocation55 + $0x78] sm:$0xff]
    %v4617 = vld [vmem:[#allocation55 + $0x80] sm:$0xff]
    %v4618 = vld [vmem:[#allocation55 + $0x88] sm:$0xff]
    %v4619 = vld [vmem:[#allocation55 + $0x90] sm:$0xff]
    %v4620 = vld [vmem:[#allocation55 + $0x98] sm:$0xff]
    %v4621 = vld [vmem:[#allocation55 + $0xa0] sm:$0xff]
    %v4622 = vld [vmem:[#allocation55 + $0xa8] sm:$0xff]
    %v4623 = vld [vmem:[#allocation55 + $0xb0] sm:$0xff]
    %v4624 = vld [vmem:[#allocation55 + $0xb8] sm:$0xff]
    %v4625 = vld [vmem:[#allocation55 + $0xc0] sm:$0xff]
    %v4626 = vld [vmem:[#allocation55 + $0xc8] sm:$0xff]
    %v4627 = vld [vmem:[#allocation55 + $0xd0] sm:$0xff]
    %v4628 = vld [vmem:[#allocation55 + $0xd8] sm:$0xff]
    %v4629 = vld [vmem:[#allocation55 + $0xe0] sm:$0xff]
    %v4630 = vld [vmem:[#allocation55 + $0xe8] sm:$0xff]
    %v4631 = vld [vmem:[#allocation55 + $0xf0] sm:$0xff]
    %v4632 = vld [vmem:[#allocation55 + $0xf8] sm:$0xff]
    %4633 = vmatpush.msra.mxu0 %v4631
    %4634 = vmatpush.msra.mxu0 %v4629
    %4635 = vmatpush.msra.mxu0 %v4627
    %4636 = vmatpush.msra.mxu0 %v4625
    %4637 = vmatpush.msra.mxu0 %v4623
    %4638 = vmatpush.msra.mxu0 %v4621
    %4639 = vmatpush.msra.mxu0 %v4619
    %4640 = vmatpush.msra.mxu0 %v4617
    %4641 = vmatpush.msra.mxu0 %v4615
    %4642 = vmatpush.msra.mxu0 %v4613
    %4643 = vmatpush.msra.mxu0 %v4611
    %4644 = vmatpush.msra.mxu0 %v4609
    %4645 = vmatpush.msra.mxu0 %v4607
    %4646 = vmatpush.msra.mxu0 %v4605
    %4647 = vmatpush.msra.mxu0 %v4603
    %4648 = vmatpush.msra.mxu0 %v4601
    %4649 = vmatmul.f32.gmra.mxu0 %v4600
    %v4650 = vpop.f32.mrf.mxu0
    %v4651 = vadd.f32 0.0, %v4650
    %4652 = vdwg.mxu0
    %4653 = vmatpush.msra.mxu0 %v4632
    %4654 = vmatpush.msra.mxu0 %v4630
    %4655 = vmatpush.msra.mxu0 %v4628
    %4656 = vmatpush.msra.mxu0 %v4626
    %4657 = vmatpush.msra.mxu0 %v4624
    %4658 = vmatpush.msra.mxu0 %v4622
    %4659 = vmatpush.msra.mxu0 %v4620
    %4660 = vmatpush.msra.mxu0 %v4618
    %4661 = vmatpush.msra.mxu0 %v4616
    %4662 = vmatpush.msra.mxu0 %v4614
    %4663 = vmatpush.msra.mxu0 %v4612
    %4664 = vmatpush.msra.mxu0 %v4610
    %4665 = vmatpush.msra.mxu0 %v4608
    %4666 = vmatpush.msra.mxu0 %v4606
    %4667 = vmatpush.msra.mxu0 %v4604
    %4668 = vmatpush.msra.mxu0 %v4602
    %4669 = vmatmul.f32.gmra.mxu0 %v4600
    %v4670 = vpop.f32.mrf.mxu0
    %v4671 = vadd.f32 0.0, %v4670
    %4672 = vdwg.mxu0
    %v4673 = vxor.u32 %v4651, 2147483648
    %v4674 = vxor.u32 %v4671, 2147483648
    %v4675 = vmul.f32 %v4673, 1.442695
    %v4676 = vpow.pop %v4675
    %v4677 = vmul.f32 %v4674, 1.442695
    %v4678 = vpow.pop %v4677
    %v4679 = vadd.f32 %v4676, 1.0
    %v4680 = vadd.f32 %v4678, 1.0
    %v4681 = vrcp.pop %v4679
    %v4682 = vmul.f32 %v4679, %v4681
    %v4683 = vsub.f32 1.0, %v4682
    %v4684 = vmul.f32 %v4681, %v4683
    %v4685 = vadd.f32 %v4681, %v4684
    %vm4686 = vweird.f32 %v4679
    %vm4687 = vweird.f32 %v4681
    %vm4688 = vmor %vm4686, %vm4687
    %v4689 = vsel %vm4688, %v4681, %v4685
    %v4690 = vand.u32 2147483647, %v4679
    %vm4691 = vcmp.eq.f32.partialorder %v4690, 8.507059e+37
    %v4692 = vand.u32 %v4679, 2147483648
    %v4693 = vor.u32 1.1754944e-38, %v4692
    %v4694 = vsel %vm4691, %v4693, %v4689
    %v4695 = vmul.f32 1.0, %v4694
    %v4696 = vrcp.pop %v4680
    %v4697 = vmul.f32 %v4680, %v4696
    %v4698 = vsub.f32 1.0, %v4697
    %v4699 = vmul.f32 %v4696, %v4698
    %v4700 = vadd.f32 %v4696, %v4699
    %vm4701 = vweird.f32 %v4680
    %vm4702 = vweird.f32 %v4696
    %vm4703 = vmor %vm4701, %vm4702
    %v4704 = vsel %vm4703, %v4696, %v4700
    %v4705 = vand.u32 2147483647, %v4680
    %vm4706 = vcmp.eq.f32.partialorder %v4705, 8.507059e+37
    %v4707 = vand.u32 %v4680, 2147483648
    %v4708 = vor.u32 1.1754944e-38, %v4707
    %v4709 = vsel %vm4706, %v4708, %v4704
    %v4710 = vmul.f32 1.0, %v4709
    %v4711 = vadd.f32 %v4486, %v4695
    %v4712 = vadd.f32 %v4501, %v4710
    %v4714 = vsel %vm1955, %v4711, 0
    %v4717 = vsel %vm1955, %v4712, 0
    %4719 = vmatpush.msra.mxu0 0.0
    %4720 = vmatpush.msra.mxu0 0.0
    %4721 = vmatpush.msra.mxu0 0.0
    %4722 = vmatpush.msra.mxu0 0.0
    %4723 = vmatpush.msra.mxu0 0.0
    %4724 = vmatpush.msra.mxu0 0.0
    %4725 = vmatpush.msra.mxu0 0.0
    %4726 = vmatpush.msra.mxu0 0.0
    %4727 = vmatpush.msra.mxu0 0.0
    %4728 = vmatpush.msra.mxu0 0.0
    %4729 = vmatpush.msra.mxu0 0.0
    %4730 = vmatpush.msra.mxu0 0.0
    %4731 = vmatpush.msra.mxu0 0.0
    %4732 = vmatpush.msra.mxu0 0.0
    %4733 = vmatpush.msra.mxu0 0.0
    %4734 = vmatpush.msra.mxu0 %v4714
    %4735 = vmatmul.f32.gmra.mxu0 %v1944
    %v4736 = vpop.f32.mrf.mxu0
    %v4737 = vadd.f32 0.0, %v4736
    %4738 = vmatmul.f32.gmra.mxu0 %v1947
    %v4739 = vpop.f32.mrf.mxu0
    %v4740 = vadd.f32 0.0, %v4739
    %4741 = vmatmul.f32.gmra.mxu0 %v1950
    %v4742 = vpop.f32.mrf.mxu0
    %v4743 = vadd.f32 0.0, %v4742
    %4744 = vmatmul.f32.gmra.mxu0 %v1953
    %v4745 = vpop.f32.mrf.mxu0
    %v4746 = vadd.f32 0.0, %v4745
    %4747 = vdwg.mxu0
    %4748 = vmatpush.msra.mxu0 0.0
    %4749 = vmatpush.msra.mxu0 0.0
    %4750 = vmatpush.msra.mxu0 0.0
    %4751 = vmatpush.msra.mxu0 0.0
    %4752 = vmatpush.msra.mxu0 0.0
    %4753 = vmatpush.msra.mxu0 0.0
    %4754 = vmatpush.msra.mxu0 0.0
    %4755 = vmatpush.msra.mxu0 0.0
    %4756 = vmatpush.msra.mxu0 0.0
    %4757 = vmatpush.msra.mxu0 0.0
    %4758 = vmatpush.msra.mxu0 0.0
    %4759 = vmatpush.msra.mxu0 0.0
    %4760 = vmatpush.msra.mxu0 0.0
    %4761 = vmatpush.msra.mxu0 0.0
    %4762 = vmatpush.msra.mxu0 0.0
    %4763 = vmatpush.msra.mxu0 %v4717
    %4764 = vmatmul.f32.gmra.mxu0 %v1944
    %v4765 = vpop.f32.mrf.mxu0
    %v4766 = vadd.f32 0.0, %v4765
    %4767 = vmatmul.f32.gmra.mxu0 %v1947
    %v4768 = vpop.f32.mrf.mxu0
    %v4769 = vadd.f32 0.0, %v4768
    %4770 = vmatmul.f32.gmra.mxu0 %v1950
    %v4771 = vpop.f32.mrf.mxu0
    %v4772 = vadd.f32 0.0, %v4771
    %4773 = vmatmul.f32.gmra.mxu0 %v1953
    %v4774 = vpop.f32.mrf.mxu0
    %v4775 = vadd.f32 0.0, %v4774
    %4776 = vdwg.mxu0
    %v4777 = vmul.f32 %v4295, %v4737
    %v4778 = vmul.f32 %v4296, %v4766
    %v4779 = vmul.f32 %v4297, %v4740
    %v4780 = vmul.f32 %v4298, %v4769
    %v4781 = vmul.f32 %v4299, %v4743
    %v4782 = vmul.f32 %v4300, %v4772
    %v4783 = vmul.f32 %v4301, %v4746
    %v4784 = vmul.f32 %v4302, %v4775
    %v4785 = vadd.f32 %v4777, %v2965
    %v4786 = vadd.f32 %v4778, %v2994
    %v4787 = vadd.f32 %v4779, %v2968
    %v4788 = vadd.f32 %v4780, %v2997
    %v4789 = vadd.f32 %v4781, %v2971
    %v4790 = vadd.f32 %v4782, %v3000
    %v4791 = vadd.f32 %v4783, %v2974
    %v4792 = vadd.f32 %v4784, %v3003
    %4793 = vmatpush.msra.mxu0 0.0
    %4794 = vmatpush.msra.mxu0 0.0
    %4795 = vmatpush.msra.mxu0 0.0
    %4796 = vmatpush.msra.mxu0 0.0
    %4797 = vmatpush.msra.mxu0 0.0
    %4798 = vmatpush.msra.mxu0 0.0
    %4799 = vmatpush.msra.mxu0 0.0
    %4800 = vmatpush.msra.mxu0 0.0
    %4801 = vmatpush.msra.mxu0 0.0
    %4802 = vmatpush.msra.mxu0 0.0
    %4803 = vmatpush.msra.mxu0 0.0
    %4804 = vmatpush.msra.mxu0 0.0
    %4805 = vmatpush.msra.mxu0 %v4791
    %4806 = vmatpush.msra.mxu0 %v4789
    %4807 = vmatpush.msra.mxu0 %v4787
    %4808 = vmatpush.msra.mxu0 %v4785
    %4809 = vmatmul.f32.gmra.mxu0 %v1738
    %v4810 = vpop.f32.mrf.mxu0
    %v4811 = vadd.f32 0.0, %v4810
    %4812 = vdwg.mxu0
    %4813 = vmatpush.msra.mxu0 0.0
    %4814 = vmatpush.msra.mxu0 0.0
    %4815 = vmatpush.msra.mxu0 0.0
    %4816 = vmatpush.msra.mxu0 0.0
    %4817 = vmatpush.msra.mxu0 0.0
    %4818 = vmatpush.msra.mxu0 0.0
    %4819 = vmatpush.msra.mxu0 0.0
    %4820 = vmatpush.msra.mxu0 0.0
    %4821 = vmatpush.msra.mxu0 0.0
    %4822 = vmatpush.msra.mxu0 0.0
    %4823 = vmatpush.msra.mxu0 0.0
    %4824 = vmatpush.msra.mxu0 0.0
    %4825 = vmatpush.msra.mxu0 %v4792
    %4826 = vmatpush.msra.mxu0 %v4790
    %4827 = vmatpush.msra.mxu0 %v4788
    %4828 = vmatpush.msra.mxu0 %v4786
    %4829 = vmatmul.f32.gmra.mxu0 %v1738
    %v4830 = vpop.f32.mrf.mxu0
    %v4831 = vadd.f32 0.0, %v4830
    %4832 = vdwg.mxu0
    %v4833 = vld [vmem:[#allocation59] sm:$0xff]
    %v4834 = vld [vmem:[#allocation59 + $0x8] sm:$0xff]
    %v4835 = vld [vmem:[#allocation59 + $0x10] sm:$0xff]
    %v4836 = vld [vmem:[#allocation59 + $0x18] sm:$0xff]
    %v4837 = vld [vmem:[#allocation59 + $0x20] sm:$0xff]
    %v4838 = vld [vmem:[#allocation59 + $0x28] sm:$0xff]
    %v4839 = vld [vmem:[#allocation59 + $0x30] sm:$0xff]
    %v4840 = vld [vmem:[#allocation59 + $0x38] sm:$0xff]
    %v4841 = vld [vmem:[#allocation59 + $0x40] sm:$0xff]
    %v4842 = vld [vmem:[#allocation59 + $0x48] sm:$0xff]
    %v4843 = vld [vmem:[#allocation59 + $0x50] sm:$0xff]
    %v4844 = vld [vmem:[#allocation59 + $0x58] sm:$0xff]
    %v4845 = vld [vmem:[#allocation59 + $0x60] sm:$0xff]
    %v4846 = vld [vmem:[#allocation59 + $0x68] sm:$0xff]
    %v4847 = vld [vmem:[#allocation59 + $0x70] sm:$0xff]
    %v4848 = vld [vmem:[#allocation59 + $0x78] sm:$0xff]
    %v4849 = vld [vmem:[#allocation59 + $0x80] sm:$0xff]
    %v4850 = vld [vmem:[#allocation59 + $0x88] sm:$0xff]
    %v4851 = vld [vmem:[#allocation59 + $0x90] sm:$0xff]
    %v4852 = vld [vmem:[#allocation59 + $0x98] sm:$0xff]
    %v4853 = vld [vmem:[#allocation59 + $0xa0] sm:$0xff]
    %v4854 = vld [vmem:[#allocation59 + $0xa8] sm:$0xff]
    %v4855 = vld [vmem:[#allocation59 + $0xb0] sm:$0xff]
    %v4856 = vld [vmem:[#allocation59 + $0xb8] sm:$0xff]
    %v4857 = vld [vmem:[#allocation59 + $0xc0] sm:$0xff]
    %v4858 = vld [vmem:[#allocation59 + $0xc8] sm:$0xff]
    %v4859 = vld [vmem:[#allocation59 + $0xd0] sm:$0xff]
    %v4860 = vld [vmem:[#allocation59 + $0xd8] sm:$0xff]
    %v4861 = vld [vmem:[#allocation59 + $0xe0] sm:$0xff]
    %v4862 = vld [vmem:[#allocation59 + $0xe8] sm:$0xff]
    %v4863 = vld [vmem:[#allocation59 + $0xf0] sm:$0xff]
    %v4864 = vld [vmem:[#allocation59 + $0xf8] sm:$0xff]
    %v4865 = vld [vmem:[#allocation59 + $0x100] sm:$0xff]
    %v4866 = vld [vmem:[#allocation59 + $0x108] sm:$0xff]
    %v4867 = vld [vmem:[#allocation59 + $0x110] sm:$0xff]
    %v4868 = vld [vmem:[#allocation59 + $0x118] sm:$0xff]
    %v4869 = vld [vmem:[#allocation59 + $0x120] sm:$0xff]
    %v4870 = vld [vmem:[#allocation59 + $0x128] sm:$0xff]
    %v4871 = vld [vmem:[#allocation59 + $0x130] sm:$0xff]
    %v4872 = vld [vmem:[#allocation59 + $0x138] sm:$0xff]
    %v4873 = vld [vmem:[#allocation59 + $0x140] sm:$0xff]
    %v4874 = vld [vmem:[#allocation59 + $0x148] sm:$0xff]
    %v4875 = vld [vmem:[#allocation59 + $0x150] sm:$0xff]
    %v4876 = vld [vmem:[#allocation59 + $0x158] sm:$0xff]
    %v4877 = vld [vmem:[#allocation59 + $0x160] sm:$0xff]
    %v4878 = vld [vmem:[#allocation59 + $0x168] sm:$0xff]
    %v4879 = vld [vmem:[#allocation59 + $0x170] sm:$0xff]
    %v4880 = vld [vmem:[#allocation59 + $0x178] sm:$0xff]
    %v4881 = vld [vmem:[#allocation59 + $0x180] sm:$0xff]
    %v4882 = vld [vmem:[#allocation59 + $0x188] sm:$0xff]
    %v4883 = vld [vmem:[#allocation59 + $0x190] sm:$0xff]
    %v4884 = vld [vmem:[#allocation59 + $0x198] sm:$0xff]
    %v4885 = vld [vmem:[#allocation59 + $0x1a0] sm:$0xff]
    %v4886 = vld [vmem:[#allocation59 + $0x1a8] sm:$0xff]
    %v4887 = vld [vmem:[#allocation59 + $0x1b0] sm:$0xff]
    %v4888 = vld [vmem:[#allocation59 + $0x1b8] sm:$0xff]
    %v4889 = vld [vmem:[#allocation59 + $0x1c0] sm:$0xff]
    %v4890 = vld [vmem:[#allocation59 + $0x1c8] sm:$0xff]
    %v4891 = vld [vmem:[#allocation59 + $0x1d0] sm:$0xff]
    %v4892 = vld [vmem:[#allocation59 + $0x1d8] sm:$0xff]
    %v4893 = vld [vmem:[#allocation59 + $0x1e0] sm:$0xff]
    %v4894 = vld [vmem:[#allocation59 + $0x1e8] sm:$0xff]
    %v4895 = vld [vmem:[#allocation59 + $0x1f0] sm:$0xff]
    %v4896 = vld [vmem:[#allocation59 + $0x1f8] sm:$0xff]
    %v4897 = vld [vmem:[#allocation61] sm:$0x3]
    %v4899 = vperm.slane %v4897, 0
    %v4900 = vperm.slane %v4897, 1
    %4903 = vmatpush.msra.mxu0 %v4863
    %4904 = vmatpush.msra.mxu0 %v4861
    %4905 = vmatpush.msra.mxu0 %v4859
    %4906 = vmatpush.msra.mxu0 %v4857
    %4907 = vmatpush.msra.mxu0 %v4855
    %4908 = vmatpush.msra.mxu0 %v4853
    %4909 = vmatpush.msra.mxu0 %v4851
    %4910 = vmatpush.msra.mxu0 %v4849
    %4911 = vmatpush.msra.mxu0 %v4847
    %4912 = vmatpush.msra.mxu0 %v4845
    %4913 = vmatpush.msra.mxu0 %v4843
    %4914 = vmatpush.msra.mxu0 %v4841
    %4915 = vmatpush.msra.mxu0 %v4839
    %4916 = vmatpush.msra.mxu0 %v4837
    %4917 = vmatpush.msra.mxu0 %v4835
    %4918 = vmatpush.msra.mxu0 %v4833
    %4919 = vmatmul.f32.gmra.mxu0 %v4811
    %v4920 = vpop.f32.mrf.mxu0
    %v4921 = vadd.f32 %v4899, %v4920
    %4922 = vdwg.mxu0
    %4923 = vmatpush.msra.mxu0 %v4895
    %4924 = vmatpush.msra.mxu0 %v4893
    %4925 = vmatpush.msra.mxu0 %v4891
    %4926 = vmatpush.msra.mxu0 %v4889
    %4927 = vmatpush.msra.mxu0 %v4887
    %4928 = vmatpush.msra.mxu0 %v4885
    %4929 = vmatpush.msra.mxu0 %v4883
    %4930 = vmatpush.msra.mxu0 %v4881
    %4931 = vmatpush.msra.mxu0 %v4879
    %4932 = vmatpush.msra.mxu0 %v4877
    %4933 = vmatpush.msra.mxu0 %v4875
    %4934 = vmatpush.msra.mxu0 %v4873
    %4935 = vmatpush.msra.mxu0 %v4871
    %4936 = vmatpush.msra.mxu0 %v4869
    %4937 = vmatpush.msra.mxu0 %v4867
    %4938 = vmatpush.msra.mxu0 %v4865
    %4939 = vmatmul.f32.gmra.mxu0 %v4831
    %v4940 = vpop.f32.mrf.mxu0
    %v4941 = vadd.f32 %v4921, %v4940
    %4942 = vdwg.mxu0
    %4943 = vmatpush.msra.mxu0 %v4864
    %4944 = vmatpush.msra.mxu0 %v4862
    %4945 = vmatpush.msra.mxu0 %v4860
    %4946 = vmatpush.msra.mxu0 %v4858
    %4947 = vmatpush.msra.mxu0 %v4856
    %4948 = vmatpush.msra.mxu0 %v4854
    %4949 = vmatpush.msra.mxu0 %v4852
    %4950 = vmatpush.msra.mxu0 %v4850
    %4951 = vmatpush.msra.mxu0 %v4848
    %4952 = vmatpush.msra.mxu0 %v4846
    %4953 = vmatpush.msra.mxu0 %v4844
    %4954 = vmatpush.msra.mxu0 %v4842
    %4955 = vmatpush.msra.mxu0 %v4840
    %4956 = vmatpush.msra.mxu0 %v4838
    %4957 = vmatpush.msra.mxu0 %v4836
    %4958 = vmatpush.msra.mxu0 %v4834
    %4959 = vmatmul.f32.gmra.mxu0 %v4811
    %v4960 = vpop.f32.mrf.mxu0
    %v4961 = vadd.f32 %v4900, %v4960
    %4962 = vdwg.mxu0
    %4963 = vmatpush.msra.mxu0 %v4896
    %4964 = vmatpush.msra.mxu0 %v4894
    %4965 = vmatpush.msra.mxu0 %v4892
    %4966 = vmatpush.msra.mxu0 %v4890
    %4967 = vmatpush.msra.mxu0 %v4888
    %4968 = vmatpush.msra.mxu0 %v4886
    %4969 = vmatpush.msra.mxu0 %v4884
    %4970 = vmatpush.msra.mxu0 %v4882
    %4971 = vmatpush.msra.mxu0 %v4880
    %4972 = vmatpush.msra.mxu0 %v4878
    %4973 = vmatpush.msra.mxu0 %v4876
    %4974 = vmatpush.msra.mxu0 %v4874
    %4975 = vmatpush.msra.mxu0 %v4872
    %4976 = vmatpush.msra.mxu0 %v4870
    %4977 = vmatpush.msra.mxu0 %v4868
    %4978 = vmatpush.msra.mxu0 %v4866
    %4979 = vmatmul.f32.gmra.mxu0 %v4831
    %v4980 = vpop.f32.mrf.mxu0
    %v4981 = vadd.f32 %v4961, %v4980
    %4982 = vdwg.mxu0
    %v4985 = vrot.slane %v4981, 6
    %v4986 = vsel %vm1955, %v4941, %v4985
    %4988 = vst [vmem:[#allocation62] sm:$0xf] %v4986
    // Predicated region
    $region374: #{resnet_forward.1} parent=1 // pred_check
      _
    $region375: #{resnet_forward.1} parent=1 // pred_check_branch
      %4990 = sbr.rel (0) target = $region377
    $region376: #{resnet_forward.1} parent=1 // pred_region
      %4992 = vsyncadd [#allocation4], 0
      %s4994 = sshll.u32 [#allocation62], 4
      %s4995 = int_to_ptr.vmem [resolvable:$true] %s4994
      %s4996 = sshll.u32 %s109, 4
      %s4997 = int_to_ptr.hbm [resolvable:$true] %s4996
      %4999 = dma.vmem_to_hbm [thread:$0]  %s4995, 64, %s4997, [#allocation4]
    $region377: #{resnet_forward.1} parent=1 // pred_fallthru
      _
    // Predicated region
    $region378: #{resnet_forward.1} parent=1 // pred_check
      _
    $region379: #{resnet_forward.1} parent=1 // pred_check_branch
      %5001 = sbr.rel (0) target = $region381
    $region380: #{resnet_forward.1} parent=1 // pred_region
      %5003 = dma.done [#allocation4], 64
    $region381: #{resnet_forward.1} parent=1 // pred_fallthru
      _
    %5004 = vsyncpa [#allocation3], 1
    %5005 = vsyncpa [#allocation6], 1
    %5006 = vsyncpa [#allocation9], 1
    %5007 = vsyncpa [#allocation12], 1
    %5008 = vsyncpa [#allocation15], 1
    %5009 = vsyncpa [#allocation18], 1
    %5010 = vsyncpa [#allocation21], 1
    %5011 = vsyncpa [#allocation24], 1
    %5012 = vsyncpa [#allocation27], 1
    %5013 = vsyncpa [#allocation30], 1
    %5014 = vsyncpa [#allocation33], 1
    %5015 = vsyncpa [#allocation36], 1
    %5016 = vsyncpa [#allocation39], 1
    %5017 = vsyncpa [#allocation42], 1
    %5018 = vsyncpa [#allocation45], 1
    %5019 = vsyncpa [#allocation48], 1
    %5020 = vsyncpa [#allocation51], 1
    %5021 = vsyncpa [#allocation54], 1
    %5022 = vsyncpa [#allocation57], 1
    %5023 = vsyncpa [#allocation60], 1
    %5024 = vsyncpa [#allocation4], 1

</llo_original>
